<compile_context>
chip_gen: v7x
topology: tpu7x:2x2x1
jax: 0.10.0
libtpu: 0.0.40
codegen_flags: <defaults>
</compile_context>

<pallas_src>
import jax
import jax.numpy as jnp
from jax.experimental import pallas as pl
from jax.experimental.pallas import tpu as pltpu

# ----------------------- model config (small, consistent with module) --------
NUM_IN = 16        # num_input_tokens
NUM_OUT = 12       # num_output_tokens
E = 16             # embedding_size
HE = 32            # encoder_size (per direction)
HD = 32            # decoder_size
PROJ = HD          # att_proj_size = decoder_size
PAD = 0
VPAD = 128         # lane-dense padded vocab for the output projection

VMEM_SPEC = pl.BlockSpec(memory_space=pltpu.MemorySpace.VMEM)


def _lstm_cell(gates, c, H):
    """LSTM cell with slice-AFTER-transcendental (full-vreg sigmoid/tanh)."""
    sg = jax.nn.sigmoid(gates)          # full (B, 4H) vreg
    tg = jnp.tanh(gates)                # full (B, 4H) vreg
    i = sg[:, 0 * H:1 * H]
    f = sg[:, 1 * H:2 * H]
    o = sg[:, 3 * H:4 * H]
    g = tg[:, 2 * H:3 * H]
    c_new = f * c + i * g
    return o * jnp.tanh(c_new), c_new


# ----------------------------- fully fused kernel -----------------------------
def _seq2seq_kernel(
        x_ref, ge_ref,
        e0wx_ref, e0whf_ref, e0whb_ref, e0b_ref,
        e1wxf_ref, e1wxb_ref, e1whf_ref, e1whb_ref, e1b_ref,
        awh_ref, awef_ref, aweb_ref, ab_ref, av_ref,
        d0wwf_ref, d0wwb_ref, d0we_ref, d0wh_ref, d0b_ref,
        d1wx_ref, d1wh_ref, d1b_ref,
        wo_ref, bo_ref,
        out_ref,
        xw_ref, h0f_ref, h0b_ref, h1f_ref, h1b_ref, dh_ref):
    """x_ref:  (S, B, E)   input embeddings (time-major)
       ge_ref: (T, B, E)   gold output embeddings (teacher forcing)
       out_ref:(T, B, VPAD) lane-dense logits (padded vocab)
       scratch: xw (S,B,8HE), enc hidden slabs (S,B,HE) x4, dec hidden (T,B,HD)
    """
    S, B, Ein = x_ref.shape
    T = ge_ref.shape[0]
    H = e0whf_ref.shape[0]          # encoder hidden size (per direction)
    D = d0wh_ref.shape[0]           # decoder hidden size
    f32 = jnp.float32

    # ---------------- encoder: 2-layer bidirectional LSTM ---------------------
    def run_bidir_layer(whf_ref, whb_ref, hf_ref, hb_ref):
        whf = whf_ref[...]
        whb = whb_ref[...]

        def step(t, carry):
            hf, cf, hb, cb = carry
            tb = S - 1 - t
            xw_f = xw_ref[t]                     # (B, 8H): fwd gates | bwd gates
            xw_b = xw_ref[tb]
            gf = xw_f[:, :4 * H] + jnp.dot(hf, whf, preferred_element_type=f32)
            gb = xw_b[:, 4 * H:] + jnp.dot(hb, whb, preferred_element_type=f32)
            nhf, ncf = _lstm_cell(gf, cf, H)
            nhb, ncb = _lstm_cell(gb, cb, H)
            hf_ref[t] = nhf
            hb_ref[tb] = nhb
            return nhf, ncf, nhb, ncb

        z = jnp.zeros((B, H), f32)
        jax.lax.fori_loop(0, S, step, (z, z, z, z))

    # layer 0: one big input projection for both directions, bias folded in
    xw_ref[...] = (
        jnp.dot(x_ref[...].reshape(S * B, Ein), e0wx_ref[...],
                preferred_element_type=f32)
        + e0b_ref[...]).reshape(S, B, 8 * H)
    run_bidir_layer(e0whf_ref, e0whb_ref, h0f_ref, h0b_ref)

    # layer 1: input = cat([h0_fwd, h0_bwd]) realised as split-weight matmuls
    xw_ref[...] = (
        jnp.dot(h0f_ref[...].reshape(S * B, H), e1wxf_ref[...],
                preferred_element_type=f32)
        + jnp.dot(h0b_ref[...].reshape(S * B, H), e1wxb_ref[...],
                  preferred_element_type=f32)
        + e1b_ref[...]).reshape(S, B, 8 * H)
    run_bidir_layer(e1whf_ref, e1whb_ref, h1f_ref, h1b_ref)

    # encoder output stays time-major as two halves (no concat, no transpose).
    h1f = h1f_ref[...]                  # (S, B, H) forward
    h1b = h1b_ref[...]                  # (S, B, H) backward

    # ---------------- attention loop-invariants (computed ONCE) ---------------
    P = awh_ref.shape[1]
    eproj = (
        jnp.dot(h1f.reshape(S * B, H), awef_ref[...], preferred_element_type=f32)
        + jnp.dot(h1b.reshape(S * B, H), aweb_ref[...], preferred_element_type=f32)
        + ab_ref[...]).reshape(S, B, P)                 # conv(k=1) bias folded in
    awh = awh_ref[...]
    avb = jnp.broadcast_to(av_ref[...].reshape(1, 1, P), (S, B, P))  # hoisted bcast

    # ---------------- decoder loop-invariants ----------------------------------
    d0wwf = d0wwf_ref[...]; d0wwb = d0wwb_ref[...]
    d0we = d0we_ref[...];   d0wh = d0wh_ref[...]
    b0 = jnp.broadcast_to(d0b_ref[...], (B, 4 * D))
    d1wx = d1wx_ref[...];   d1wh = d1wh_ref[...]
    b1 = jnp.broadcast_to(d1b_ref[...], (B, 4 * D))

    # ---- warm-up: decoder on zero input / zero state  ->  gates == bias ------
    z = jnp.zeros((B, D), f32)
    h0, c0 = _lstm_cell(b0, z, D)
    g1 = jnp.dot(h0, d1wx, preferred_element_type=f32) + b1
    h1, c1 = _lstm_cell(g1, z, D)
    last_emb0 = jnp.zeros((B, ge_ref.shape[2]), f32)

    def dstep(t, carry):
        h0, c0, h1, c1, last_emb = carry
        # --- attention: query = decoder_hidden[-1][-1] (last-layer CELL state)
        hproj = jnp.dot(c1, awh, preferred_element_type=f32)            # (B, P)
        energy = jnp.tanh(hproj[None, :, :] + eproj)                    # (S, B, P)
        # TODO(synk): attention dropout (p=0.1) omitted -- eval-mode semantics.
        scores = jnp.sum(energy * avb, axis=-1, keepdims=True)          # (S, B, 1)
        m = jnp.max(scores, axis=0, keepdims=True)
        ex = jnp.exp(scores - m)
        attn = ex / jnp.sum(ex, axis=0, keepdims=True)                  # softmax over S
        wf = jnp.sum(attn * h1f, axis=0)                                # (B, H)
        wb = jnp.sum(attn * h1b, axis=0)                                # (B, H)
        # --- decoder LSTM layer 0: input = cat([weighted, last_emb]) as splits
        g0 = (jnp.dot(wf, d0wwf, preferred_element_type=f32)
              + jnp.dot(wb, d0wwb, preferred_element_type=f32)
              + jnp.dot(last_emb, d0we, preferred_element_type=f32)
              + jnp.dot(h0, d0wh, preferred_element_type=f32) + b0)
        nh0, nc0 = _lstm_cell(g0, c0, D)
        # TODO(synk): inter-layer dropout (0.33) omitted -- eval-mode semantics.
        g1 = (jnp.dot(nh0, d1wx, preferred_element_type=f32)
              + jnp.dot(h1, d1wh, preferred_element_type=f32) + b1)
        nh1, nc1 = _lstm_cell(g1, c1, D)
        dh_ref[t] = nh1                        # output projection hoisted out
        return nh0, nc0, nh1, nc1, ge_ref[t]   # teacher forcing

    jax.lax.fori_loop(0, T, dstep, (h0, c0, h1, c1, last_emb0))

    # ---- hoisted output projection: one (T*B, D) @ (D, VPAD) matmul ----------
    V = wo_ref.shape[1]
    out_ref[...] = (
        jnp.dot(dh_ref[...].reshape(T * B, D), wo_ref[...],
                preferred_element_type=f32)
        + bo_ref[...]).reshape(T, B, V)


# ------------------------------- forward (wrapper glue) ----------------------
def seq2seq_forward(params, x_tokens, gs_tokens):
    B, S = x_tokens.shape
    T = gs_tokens.shape[1]
    Bp = max(8, ((B + 7) // 8) * 8)        # pad batch to f32 sublane multiple

    # Embedding gathers stay in XLA (tiny); padding rows compute garbage that is
    # sliced away (all per-row math is independent).
    x_emb = jnp.take(params['in_emb'], x_tokens, axis=0)      # (B, S, E)
    g_emb = jnp.take(params['out_emb'], gs_tokens, axis=0)    # (B, T, E)
    x_emb = jnp.pad(x_emb, ((0, Bp - B), (0, 0), (0, 0)))
    g_emb = jnp.pad(g_emb, ((0, Bp - B), (0, 0), (0, 0)))
    x_tm = jnp.transpose(x_emb, (1, 0, 2))                    # (S, Bp, E)
    g_tm = jnp.transpose(g_emb, (1, 0, 2))                    # (T, Bp, E)

    logits = pl.pallas_call(
        _seq2seq_kernel,
        out_shape=jax.ShapeDtypeStruct((T, Bp, VPAD), jnp.float32),
        in_specs=[VMEM_SPEC] * 26,
        out_specs=VMEM_SPEC,
        scratch_shapes=[
            pltpu.VMEM((S, Bp, 8 * HE), jnp.float32),   # xw: input proj, both dirs
            pltpu.VMEM((S, Bp, HE), jnp.float32),       # enc layer-0 fwd h
            pltpu.VMEM((S, Bp, HE), jnp.float32),       # enc layer-0 bwd h
            pltpu.VMEM((S, Bp, HE), jnp.float32),       # enc layer-1 fwd h
            pltpu.VMEM((S, Bp, HE), jnp.float32),       # enc layer-1 bwd h
            pltpu.VMEM((T, Bp, HD), jnp.float32),       # dec last-layer h slab
        ],
    )(x_tm, g_tm,
      params['e0_wx'], params['e0_whf'], params['e0_whb'], params['e0_b'],
      params['e1_wxf'], params['e1_wxb'], params['e1_whf'], params['e1_whb'],
      params['e1_b'],
      params['att_wh'], params['att_wef'], params['att_web'], params['att_b'],
      params['att_v'],
      params['d0_wwf'], params['d0_wwb'], params['d0_we'], params['d0_wh'],
      params['d0_b'],
      params['d1_wx'], params['d1_wh'], params['d1_b'],
      params['out_w'], params['out_b'])

    return jnp.transpose(logits, (1, 0, 2))[:B, :, :NUM_OUT]   # (B, T, NUM_OUT)


# ------------------------------- parameter init -------------------------------
def init_params(key):
    def nrm(k, shape, scale=0.1):
        return jax.random.normal(k, shape, jnp.float32) * scale

    keys = iter(jax.random.split(key, 64))
    p = {}

    p['in_emb'] = nrm(next(keys), (NUM_IN, E), 0.5).at[PAD].set(0.0)
    p['out_emb'] = nrm(next(keys), (NUM_OUT, E), 0.5).at[PAD].set(0.0)

    # Encoder layer 0 (input E).  PyTorch i,f,g,o gate column order; biases are
    # pre-summed b_ih + b_hh; fwd | bwd weights stacked along the gate axis.
    p['e0_wx'] = jnp.concatenate(
        [nrm(next(keys), (E, 4 * HE)), nrm(next(keys), (E, 4 * HE))], axis=1)
    p['e0_whf'] = nrm(next(keys), (HE, 4 * HE))
    p['e0_whb'] = nrm(next(keys), (HE, 4 * HE))
    p['e0_b'] = jnp.concatenate(
        [nrm(next(keys), (1, 4 * HE)), nrm(next(keys), (1, 4 * HE))], axis=1)

    # Encoder layer 1 (input 2*HE = cat([fwd, bwd])): rows split over halves.
    e1_wx = jnp.concatenate(
        [nrm(next(keys), (2 * HE, 4 * HE)), nrm(next(keys), (2 * HE, 4 * HE))],
        axis=1)
    p['e1_wxf'] = e1_wx[:HE]
    p['e1_wxb'] = e1_wx[HE:]
    p['e1_whf'] = nrm(next(keys), (HE, 4 * HE))
    p['e1_whb'] = nrm(next(keys), (HE, 4 * HE))
    p['e1_b'] = jnp.concatenate(
        [nrm(next(keys), (1, 4 * HE)), nrm(next(keys), (1, 4 * HE))], axis=1)

    # Attention Conv1d(k=1) weight: in channels = [hidden(HD) | enc_fwd | enc_bwd]
    att_w = nrm(next(keys), (HD + 2 * HE, PROJ))
    p['att_wh'] = att_w[:HD]
    p['att_wef'] = att_w[HD:HD + HE]
    p['att_web'] = att_w[HD + HE:]
    p['att_b'] = nrm(next(keys), (1, PROJ))
    p['att_v'] = jax.random.uniform(next(keys), (1, PROJ), jnp.float32)

    # Decoder layer 0: input weight split over [w_fwd(HE) | w_bwd(HE) | emb(E)].
    d0_wih = nrm(next(keys), (2 * HE + E, 4 * HD))
    p['d0_wwf'] = d0_wih[:HE]
    p['d0_wwb'] = d0_wih[HE:2 * HE]
    p['d0_we'] = d0_wih[2 * HE:]
    p['d0_wh'] = nrm(next(keys), (HD, 4 * HD))
    p['d0_b'] = nrm(next(keys), (1, 4 * HD))
    # Decoder layer 1.
    p['d1_wx'] = nrm(next(keys), (HD, 4 * HD))
    p['d1_wh'] = nrm(next(keys), (HD, 4 * HD))
    p['d1_b'] = nrm(next(keys), (1, 4 * HD))

    # Output projection, zero-padded to lane-dense VPAD (sliced back in wrapper).
    p['out_w'] = jnp.pad(nrm(next(keys), (HD, NUM_OUT)),
                         ((0, 0), (0, VPAD - NUM_OUT)))
    p['out_b'] = jnp.pad(nrm(next(keys), (1, NUM_OUT)),
                         ((0, 0), (0, VPAD - NUM_OUT)))
    return p, next(keys)


# ------------------------------------ main ------------------------------------
if __name__ == "__main__":
    key = jax.random.PRNGKey(0)
    params, key = init_params(key)
    kx, kg = jax.random.split(key)

    B, S, T = 2, 8, 5
    x_tokens = jax.random.randint(kx, (B, S), 0, NUM_IN, dtype=jnp.int32)
    gs_tokens = jax.random.randint(kg, (B, T), 0, NUM_OUT, dtype=jnp.int32)

    out = jax.jit(seq2seq_forward)(params, x_tokens, gs_tokens)
    out = jax.block_until_ready(out)
    assert out.shape == (B, T, NUM_OUT), out.shape
    assert bool(jnp.all(jnp.isfinite(out)))
    print("KERNEL_OK")
</pallas_src>

<mosaic_0001>
module attributes {stable_mosaic.version = 11 : i64} {
  func.func @_seq2seq_kernel(%arg0: memref<8x8x16xf32, #tpu.memory_space<vmem>>, %arg1: memref<5x8x16xf32, #tpu.memory_space<vmem>>, %arg2: memref<16x256xf32, #tpu.memory_space<vmem>>, %arg3: memref<32x128xf32, #tpu.memory_space<vmem>>, %arg4: memref<32x128xf32, #tpu.memory_space<vmem>>, %arg5: memref<1x256xf32, #tpu.memory_space<vmem>>, %arg6: memref<32x256xf32, #tpu.memory_space<vmem>>, %arg7: memref<32x256xf32, #tpu.memory_space<vmem>>, %arg8: memref<32x128xf32, #tpu.memory_space<vmem>>, %arg9: memref<32x128xf32, #tpu.memory_space<vmem>>, %arg10: memref<1x256xf32, #tpu.memory_space<vmem>>, %arg11: memref<32x32xf32, #tpu.memory_space<vmem>>, %arg12: memref<32x32xf32, #tpu.memory_space<vmem>>, %arg13: memref<32x32xf32, #tpu.memory_space<vmem>>, %arg14: memref<1x32xf32, #tpu.memory_space<vmem>>, %arg15: memref<1x32xf32, #tpu.memory_space<vmem>>, %arg16: memref<32x128xf32, #tpu.memory_space<vmem>>, %arg17: memref<32x128xf32, #tpu.memory_space<vmem>>, %arg18: memref<16x128xf32, #tpu.memory_space<vmem>>, %arg19: memref<32x128xf32, #tpu.memory_space<vmem>>, %arg20: memref<1x128xf32, #tpu.memory_space<vmem>>, %arg21: memref<32x128xf32, #tpu.memory_space<vmem>>, %arg22: memref<32x128xf32, #tpu.memory_space<vmem>>, %arg23: memref<1x128xf32, #tpu.memory_space<vmem>>, %arg24: memref<32x128xf32, #tpu.memory_space<vmem>>, %arg25: memref<1x128xf32, #tpu.memory_space<vmem>>, %arg26: memref<5x8x128xf32, #tpu.memory_space<vmem>>, %arg27: memref<8x8x256xf32, #tpu.memory_space<vmem>>, %arg28: memref<8x8x32xf32, #tpu.memory_space<vmem>>, %arg29: memref<8x8x32xf32, #tpu.memory_space<vmem>>, %arg30: memref<8x8x32xf32, #tpu.memory_space<vmem>>, %arg31: memref<8x8x32xf32, #tpu.memory_space<vmem>>, %arg32: memref<5x8x32xf32, #tpu.memory_space<vmem>>) attributes {dimension_semantics = [], scalar_prefetch = 0 : i64, scratch_operands = 6 : i64, tpu.core_type = #tpu.core_type<tc>} {
    %c0 = arith.constant 0 : index
    %c0_0 = arith.constant 0 : index
    %c0_1 = arith.constant 0 : index
    %0 = vector.load %arg0[%c0, %c0_0, %c0_1] : memref<8x8x16xf32, #tpu.memory_space<vmem>>, vector<8x8x16xf32>
    %1 = vector.shape_cast %0 : vector<8x8x16xf32> to vector<64x16xf32>
    %c0_2 = arith.constant 0 : index
    %c0_3 = arith.constant 0 : index
    %2 = vector.load %arg2[%c0_2, %c0_3] : memref<16x256xf32, #tpu.memory_space<vmem>>, vector<16x256xf32>
    %cst = arith.constant dense<0.000000e+00> : vector<64x256xf32>
    %3 = tpu.matmul %1, %2, %cst {dimension_numbers = #tpu.dot_dimension_numbers<[1], [0], [0], [1], [0, 0, 1, 1], [], []>} : vector<64x16xf32>, vector<16x256xf32>, vector<64x256xf32> -> vector<64x256xf32>
    %c0_4 = arith.constant 0 : index
    %c0_5 = arith.constant 0 : index
    %4 = vector.load %arg5[%c0_4, %c0_5] : memref<1x256xf32, #tpu.memory_space<vmem>>, vector<1x256xf32>
    %5 = vector.broadcast %4 : vector<1x256xf32> to vector<64x256xf32>
    %6 = arith.addf %3, %5 : vector<64x256xf32>
    %7 = vector.shape_cast %6 : vector<64x256xf32> to vector<8x8x256xf32>
    %c0_6 = arith.constant 0 : index
    %c0_7 = arith.constant 0 : index
    %c0_8 = arith.constant 0 : index
    %8 = vector.load %arg27[%c0_6, %c0_7, %c0_8] : memref<8x8x256xf32, #tpu.memory_space<vmem>>, vector<8x8x256xf32>
    tpu.vector_store %arg27[%c0_6, %c0_7, %c0_8], %7 {strides = array<i32>} : memref<8x8x256xf32, #tpu.memory_space<vmem>>, vector<8x8x256xf32>,
    %c0_9 = arith.constant 0 : index
    %c0_10 = arith.constant 0 : index
    %9 = vector.load %arg3[%c0_9, %c0_10] : memref<32x128xf32, #tpu.memory_space<vmem>>, vector<32x128xf32>
    %c0_11 = arith.constant 0 : index
    %c0_12 = arith.constant 0 : index
    %10 = vector.load %arg4[%c0_11, %c0_12] : memref<32x128xf32, #tpu.memory_space<vmem>>, vector<32x128xf32>
    %cst_13 = arith.constant 0.000000e+00 : f32
    %11 = vector.broadcast %cst_13 : f32 to vector<8x32xf32>
    %c0_i32 = arith.constant 0 : i32
    %c8_i32 = arith.constant 8 : i32
    %12 = arith.addi %c0_i32, %c8_i32 : i32
    %c1_i32 = arith.constant 1 : i32
    %13:4 = scf.for %arg33 = %c0_i32 to %12 step %c1_i32 iter_args(%arg34 = %11, %arg35 = %11, %arg36 = %11, %arg37 = %11) -> (vector<8x32xf32>, vector<8x32xf32>, vector<8x32xf32>, vector<8x32xf32>)  : i32 {
      %c7_i32 = arith.constant 7 : i32
      %108 = arith.subi %c7_i32, %arg33 : i32
      %109 = arith.index_cast %arg33 : i32 to index
      %c0_94 = arith.constant 0 : index
      %c0_95 = arith.constant 0 : index
      %110 = vector.load %arg27[%109, %c0_94, %c0_95] : memref<8x8x256xf32, #tpu.memory_space<vmem>>, vector<1x8x256xf32>
      %111 = vector.shape_cast %110 : vector<1x8x256xf32> to vector<8x256xf32>
      %112 = arith.index_cast %108 : i32 to index
      %c0_96 = arith.constant 0 : index
      %c0_97 = arith.constant 0 : index
      %113 = vector.load %arg27[%112, %c0_96, %c0_97] : memref<8x8x256xf32, #tpu.memory_space<vmem>>, vector<1x8x256xf32>
      %114 = vector.shape_cast %113 : vector<1x8x256xf32> to vector<8x256xf32>
      %115 = vector.extract_strided_slice %111 {offsets = [0, 0], sizes = [8, 128], strides = [1, 1]} : vector<8x256xf32> to vector<8x128xf32>
      %cst_98 = arith.constant dense<0.000000e+00> : vector<8x128xf32>
      %116 = tpu.matmul %arg34, %9, %cst_98 {dimension_numbers = #tpu.dot_dimension_numbers<[1], [0], [0], [1], [0, 0, 1, 1], [], []>} : vector<8x32xf32>, vector<32x128xf32>, vector<8x128xf32> -> vector<8x128xf32>
      %117 = arith.addf %115, %116 : vector<8x128xf32>
      %118 = vector.extract_strided_slice %114 {offsets = [0, 128], sizes = [8, 128], strides = [1, 1]} : vector<8x256xf32> to vector<8x128xf32>
      %cst_99 = arith.constant dense<0.000000e+00> : vector<8x128xf32>
      %119 = tpu.matmul %arg36, %10, %cst_99 {dimension_numbers = #tpu.dot_dimension_numbers<[1], [0], [0], [1], [0, 0, 1, 1], [], []>} : vector<8x32xf32>, vector<32x128xf32>, vector<8x128xf32> -> vector<8x128xf32>
      %120 = arith.addf %118, %119 : vector<8x128xf32>
      %121 = arith.negf %117 : vector<8x128xf32>
      %122 = math.exp %121 : vector<8x128xf32>
      %cst_100 = arith.constant 1.000000e+00 : f32
      %123 = vector.broadcast %cst_100 : f32 to vector<8x128xf32>
      %124 = arith.addf %123, %122 : vector<8x128xf32>
      %125 = arith.divf %123, %124 : vector<8x128xf32>
      %126 = math.tanh %117 : vector<8x128xf32>
      %127 = vector.extract_strided_slice %125 {offsets = [0, 0], sizes = [8, 32], strides = [1, 1]} : vector<8x128xf32> to vector<8x32xf32>
      %128 = vector.extract_strided_slice %125 {offsets = [0, 32], sizes = [8, 32], strides = [1, 1]} : vector<8x128xf32> to vector<8x32xf32>
      %129 = vector.extract_strided_slice %125 {offsets = [0, 96], sizes = [8, 32], strides = [1, 1]} : vector<8x128xf32> to vector<8x32xf32>
      %130 = vector.extract_strided_slice %126 {offsets = [0, 64], sizes = [8, 32], strides = [1, 1]} : vector<8x128xf32> to vector<8x32xf32>
      %131 = arith.mulf %128, %arg35 : vector<8x32xf32>
      %132 = arith.mulf %127, %130 : vector<8x32xf32>
      %133 = arith.addf %131, %132 : vector<8x32xf32>
      %134 = math.tanh %133 : vector<8x32xf32>
      %135 = arith.mulf %129, %134 : vector<8x32xf32>
      %136 = arith.negf %120 : vector<8x128xf32>
      %137 = math.exp %136 : vector<8x128xf32>
      %cst_101 = arith.constant 1.000000e+00 : f32
      %138 = vector.broadcast %cst_101 : f32 to vector<8x128xf32>
      %139 = arith.addf %138, %137 : vector<8x128xf32>
      %140 = arith.divf %138, %139 : vector<8x128xf32>
      %141 = math.tanh %120 : vector<8x128xf32>
      %142 = vector.extract_strided_slice %140 {offsets = [0, 0], sizes = [8, 32], strides = [1, 1]} : vector<8x128xf32> to vector<8x32xf32>
      %143 = vector.extract_strided_slice %140 {offsets = [0, 32], sizes = [8, 32], strides = [1, 1]} : vector<8x128xf32> to vector<8x32xf32>
      %144 = vector.extract_strided_slice %140 {offsets = [0, 96], sizes = [8, 32], strides = [1, 1]} : vector<8x128xf32> to vector<8x32xf32>
      %145 = vector.extract_strided_slice %141 {offsets = [0, 64], sizes = [8, 32], strides = [1, 1]} : vector<8x128xf32> to vector<8x32xf32>
      %146 = arith.mulf %143, %arg37 : vector<8x32xf32>
      %147 = arith.mulf %142, %145 : vector<8x32xf32>
      %148 = arith.addf %146, %147 : vector<8x32xf32>
      %149 = math.tanh %148 : vector<8x32xf32>
      %150 = arith.mulf %144, %149 : vector<8x32xf32>
      %151 = arith.index_cast %arg33 : i32 to index
      %c0_102 = arith.constant 0 : index
      %c0_103 = arith.constant 0 : index
      %152 = vector.load %arg28[%151, %c0_102, %c0_103] : memref<8x8x32xf32, #tpu.memory_space<vmem>>, vector<1x8x32xf32>
      %153 = vector.shape_cast %152 : vector<1x8x32xf32> to vector<8x32xf32>
      %154 = vector.shape_cast %135 : vector<8x32xf32> to vector<1x8x32xf32>
      tpu.vector_store %arg28[%151, %c0_102, %c0_103], %154 {strides = array<i32>} : memref<8x8x32xf32, #tpu.memory_space<vmem>>, vector<1x8x32xf32>,
      %155 = arith.index_cast %108 : i32 to index
      %c0_104 = arith.constant 0 : index
      %c0_105 = arith.constant 0 : index
      %156 = vector.load %arg29[%155, %c0_104, %c0_105] : memref<8x8x32xf32, #tpu.memory_space<vmem>>, vector<1x8x32xf32>
      %157 = vector.shape_cast %156 : vector<1x8x32xf32> to vector<8x32xf32>
      %158 = vector.shape_cast %150 : vector<8x32xf32> to vector<1x8x32xf32>
      tpu.vector_store %arg29[%155, %c0_104, %c0_105], %158 {strides = array<i32>} : memref<8x8x32xf32, #tpu.memory_space<vmem>>, vector<1x8x32xf32>,
      scf.yield %135, %133, %150, %148 : vector<8x32xf32>, vector<8x32xf32>, vector<8x32xf32>, vector<8x32xf32>
    }
    %c8_i32_14 = arith.constant 8 : i32
    %c0_15 = arith.constant 0 : index
    %c0_16 = arith.constant 0 : index
    %c0_17 = arith.constant 0 : index
    %14 = vector.load %arg28[%c0_15, %c0_16, %c0_17] : memref<8x8x32xf32, #tpu.memory_space<vmem>>, vector<8x8x32xf32>
    %15 = vector.shape_cast %14 : vector<8x8x32xf32> to vector<64x32xf32>
    %c0_18 = arith.constant 0 : index
    %c0_19 = arith.constant 0 : index
    %16 = vector.load %arg6[%c0_18, %c0_19] : memref<32x256xf32, #tpu.memory_space<vmem>>, vector<32x256xf32>
    %cst_20 = arith.constant dense<0.000000e+00> : vector<64x256xf32>
    %17 = tpu.matmul %15, %16, %cst_20 {dimension_numbers = #tpu.dot_dimension_numbers<[1], [0], [0], [1], [0, 0, 1, 1], [], []>} : vector<64x32xf32>, vector<32x256xf32>, vector<64x256xf32> -> vector<64x256xf32>
    %c0_21 = arith.constant 0 : index
    %c0_22 = arith.constant 0 : index
    %c0_23 = arith.constant 0 : index
    %18 = vector.load %arg29[%c0_21, %c0_22, %c0_23] : memref<8x8x32xf32, #tpu.memory_space<vmem>>, vector<8x8x32xf32>
    %19 = vector.shape_cast %18 : vector<8x8x32xf32> to vector<64x32xf32>
    %c0_24 = arith.constant 0 : index
    %c0_25 = arith.constant 0 : index
    %20 = vector.load %arg7[%c0_24, %c0_25] : memref<32x256xf32, #tpu.memory_space<vmem>>, vector<32x256xf32>
    %cst_26 = arith.constant dense<0.000000e+00> : vector<64x256xf32>
    %21 = tpu.matmul %19, %20, %cst_26 {dimension_numbers = #tpu.dot_dimension_numbers<[1], [0], [0], [1], [0, 0, 1, 1], [], []>} : vector<64x32xf32>, vector<32x256xf32>, vector<64x256xf32> -> vector<64x256xf32>
    %22 = arith.addf %17, %21 : vector<64x256xf32>
    %c0_27 = arith.constant 0 : index
    %c0_28 = arith.constant 0 : index
    %23 = vector.load %arg10[%c0_27, %c0_28] : memref<1x256xf32, #tpu.memory_space<vmem>>, vector<1x256xf32>
    %24 = vector.broadcast %23 : vector<1x256xf32> to vector<64x256xf32>
    %25 = arith.addf %22, %24 : vector<64x256xf32>
    %26 = vector.shape_cast %25 : vector<64x256xf32> to vector<8x8x256xf32>
    %c0_29 = arith.constant 0 : index
    %c0_30 = arith.constant 0 : index
    %c0_31 = arith.constant 0 : index
    %27 = vector.load %arg27[%c0_29, %c0_30, %c0_31] : memref<8x8x256xf32, #tpu.memory_space<vmem>>, vector<8x8x256xf32>
    tpu.vector_store %arg27[%c0_29, %c0_30, %c0_31], %26 {strides = array<i32>} : memref<8x8x256xf32, #tpu.memory_space<vmem>>, vector<8x8x256xf32>,
    %c0_32 = arith.constant 0 : index
    %c0_33 = arith.constant 0 : index
    %28 = vector.load %arg8[%c0_32, %c0_33] : memref<32x128xf32, #tpu.memory_space<vmem>>, vector<32x128xf32>
    %c0_34 = arith.constant 0 : index
    %c0_35 = arith.constant 0 : index
    %29 = vector.load %arg9[%c0_34, %c0_35] : memref<32x128xf32, #tpu.memory_space<vmem>>, vector<32x128xf32>
    %cst_36 = arith.constant 0.000000e+00 : f32
    %30 = vector.broadcast %cst_36 : f32 to vector<8x32xf32>
    %c0_i32_37 = arith.constant 0 : i32
    %c8_i32_38 = arith.constant 8 : i32
    %31 = arith.addi %c0_i32_37, %c8_i32_38 : i32
    %c1_i32_39 = arith.constant 1 : i32
    %32:4 = scf.for %arg33 = %c0_i32_37 to %31 step %c1_i32_39 iter_args(%arg34 = %30, %arg35 = %30, %arg36 = %30, %arg37 = %30) -> (vector<8x32xf32>, vector<8x32xf32>, vector<8x32xf32>, vector<8x32xf32>)  : i32 {
      %c7_i32 = arith.constant 7 : i32
      %108 = arith.subi %c7_i32, %arg33 : i32
      %109 = arith.index_cast %arg33 : i32 to index
      %c0_94 = arith.constant 0 : index
      %c0_95 = arith.constant 0 : index
      %110 = vector.load %arg27[%109, %c0_94, %c0_95] : memref<8x8x256xf32, #tpu.memory_space<vmem>>, vector<1x8x256xf32>
      %111 = vector.shape_cast %110 : vector<1x8x256xf32> to vector<8x256xf32>
      %112 = arith.index_cast %108 : i32 to index
      %c0_96 = arith.constant 0 : index
      %c0_97 = arith.constant 0 : index
      %113 = vector.load %arg27[%112, %c0_96, %c0_97] : memref<8x8x256xf32, #tpu.memory_space<vmem>>, vector<1x8x256xf32>
      %114 = vector.shape_cast %113 : vector<1x8x256xf32> to vector<8x256xf32>
      %115 = vector.extract_strided_slice %111 {offsets = [0, 0], sizes = [8, 128], strides = [1, 1]} : vector<8x256xf32> to vector<8x128xf32>
      %cst_98 = arith.constant dense<0.000000e+00> : vector<8x128xf32>
      %116 = tpu.matmul %arg34, %28, %cst_98 {dimension_numbers = #tpu.dot_dimension_numbers<[1], [0], [0], [1], [0, 0, 1, 1], [], []>} : vector<8x32xf32>, vector<32x128xf32>, vector<8x128xf32> -> vector<8x128xf32>
      %117 = arith.addf %115, %116 : vector<8x128xf32>
      %118 = vector.extract_strided_slice %114 {offsets = [0, 128], sizes = [8, 128], strides = [1, 1]} : vector<8x256xf32> to vector<8x128xf32>
      %cst_99 = arith.constant dense<0.000000e+00> : vector<8x128xf32>
      %119 = tpu.matmul %arg36, %29, %cst_99 {dimension_numbers = #tpu.dot_dimension_numbers<[1], [0], [0], [1], [0, 0, 1, 1], [], []>} : vector<8x32xf32>, vector<32x128xf32>, vector<8x128xf32> -> vector<8x128xf32>
      %120 = arith.addf %118, %119 : vector<8x128xf32>
      %121 = arith.negf %117 : vector<8x128xf32>
      %122 = math.exp %121 : vector<8x128xf32>
      %cst_100 = arith.constant 1.000000e+00 : f32
      %123 = vector.broadcast %cst_100 : f32 to vector<8x128xf32>
      %124 = arith.addf %123, %122 : vector<8x128xf32>
      %125 = arith.divf %123, %124 : vector<8x128xf32>
      %126 = math.tanh %117 : vector<8x128xf32>
      %127 = vector.extract_strided_slice %125 {offsets = [0, 0], sizes = [8, 32], strides = [1, 1]} : vector<8x128xf32> to vector<8x32xf32>
      %128 = vector.extract_strided_slice %125 {offsets = [0, 32], sizes = [8, 32], strides = [1, 1]} : vector<8x128xf32> to vector<8x32xf32>
      %129 = vector.extract_strided_slice %125 {offsets = [0, 96], sizes = [8, 32], strides = [1, 1]} : vector<8x128xf32> to vector<8x32xf32>
      %130 = vector.extract_strided_slice %126 {offsets = [0, 64], sizes = [8, 32], strides = [1, 1]} : vector<8x128xf32> to vector<8x32xf32>
      %131 = arith.mulf %128, %arg35 : vector<8x32xf32>
      %132 = arith.mulf %127, %130 : vector<8x32xf32>
      %133 = arith.addf %131, %132 : vector<8x32xf32>
      %134 = math.tanh %133 : vector<8x32xf32>
      %135 = arith.mulf %129, %134 : vector<8x32xf32>
      %136 = arith.negf %120 : vector<8x128xf32>
      %137 = math.exp %136 : vector<8x128xf32>
      %cst_101 = arith.constant 1.000000e+00 : f32
      %138 = vector.broadcast %cst_101 : f32 to vector<8x128xf32>
      %139 = arith.addf %138, %137 : vector<8x128xf32>
      %140 = arith.divf %138, %139 : vector<8x128xf32>
      %141 = math.tanh %120 : vector<8x128xf32>
      %142 = vector.extract_strided_slice %140 {offsets = [0, 0], sizes = [8, 32], strides = [1, 1]} : vector<8x128xf32> to vector<8x32xf32>
      %143 = vector.extract_strided_slice %140 {offsets = [0, 32], sizes = [8, 32], strides = [1, 1]} : vector<8x128xf32> to vector<8x32xf32>
      %144 = vector.extract_strided_slice %140 {offsets = [0, 96], sizes = [8, 32], strides = [1, 1]} : vector<8x128xf32> to vector<8x32xf32>
      %145 = vector.extract_strided_slice %141 {offsets = [0, 64], sizes = [8, 32], strides = [1, 1]} : vector<8x128xf32> to vector<8x32xf32>
      %146 = arith.mulf %143, %arg37 : vector<8x32xf32>
      %147 = arith.mulf %142, %145 : vector<8x32xf32>
      %148 = arith.addf %146, %147 : vector<8x32xf32>
      %149 = math.tanh %148 : vector<8x32xf32>
      %150 = arith.mulf %144, %149 : vector<8x32xf32>
      %151 = arith.index_cast %arg33 : i32 to index
      %c0_102 = arith.constant 0 : index
      %c0_103 = arith.constant 0 : index
      %152 = vector.load %arg30[%151, %c0_102, %c0_103] : memref<8x8x32xf32, #tpu.memory_space<vmem>>, vector<1x8x32xf32>
      %153 = vector.shape_cast %152 : vector<1x8x32xf32> to vector<8x32xf32>
      %154 = vector.shape_cast %135 : vector<8x32xf32> to vector<1x8x32xf32>
      tpu.vector_store %arg30[%151, %c0_102, %c0_103], %154 {strides = array<i32>} : memref<8x8x32xf32, #tpu.memory_space<vmem>>, vector<1x8x32xf32>,
      %155 = arith.index_cast %108 : i32 to index
      %c0_104 = arith.constant 0 : index
      %c0_105 = arith.constant 0 : index
      %156 = vector.load %arg31[%155, %c0_104, %c0_105] : memref<8x8x32xf32, #tpu.memory_space<vmem>>, vector<1x8x32xf32>
      %157 = vector.shape_cast %156 : vector<1x8x32xf32> to vector<8x32xf32>
      %158 = vector.shape_cast %150 : vector<8x32xf32> to vector<1x8x32xf32>
      tpu.vector_store %arg31[%155, %c0_104, %c0_105], %158 {strides = array<i32>} : memref<8x8x32xf32, #tpu.memory_space<vmem>>, vector<1x8x32xf32>,
      scf.yield %135, %133, %150, %148 : vector<8x32xf32>, vector<8x32xf32>, vector<8x32xf32>, vector<8x32xf32>
    }
    %c8_i32_40 = arith.constant 8 : i32
    %c0_41 = arith.constant 0 : index
    %c0_42 = arith.constant 0 : index
    %c0_43 = arith.constant 0 : index
    %33 = vector.load %arg30[%c0_41, %c0_42, %c0_43] : memref<8x8x32xf32, #tpu.memory_space<vmem>>, vector<8x8x32xf32>
    %c0_44 = arith.constant 0 : index
    %c0_45 = arith.constant 0 : index
    %c0_46 = arith.constant 0 : index
    %34 = vector.load %arg31[%c0_44, %c0_45, %c0_46] : memref<8x8x32xf32, #tpu.memory_space<vmem>>, vector<8x8x32xf32>
    %35 = vector.shape_cast %33 : vector<8x8x32xf32> to vector<64x32xf32>
    %c0_47 = arith.constant 0 : index
    %c0_48 = arith.constant 0 : index
    %36 = vector.load %arg12[%c0_47, %c0_48] : memref<32x32xf32, #tpu.memory_space<vmem>>, vector<32x32xf32>
    %cst_49 = arith.constant dense<0.000000e+00> : vector<64x32xf32>
    %37 = tpu.matmul %35, %36, %cst_49 {dimension_numbers = #tpu.dot_dimension_numbers<[1], [0], [0], [1], [0, 0, 1, 1], [], []>} : vector<64x32xf32>, vector<32x32xf32>, vector<64x32xf32> -> vector<64x32xf32>
    %38 = vector.shape_cast %34 : vector<8x8x32xf32> to vector<64x32xf32>
    %c0_50 = arith.constant 0 : index
    %c0_51 = arith.constant 0 : index
    %39 = vector.load %arg13[%c0_50, %c0_51] : memref<32x32xf32, #tpu.memory_space<vmem>>, vector<32x32xf32>
    %cst_52 = arith.constant dense<0.000000e+00> : vector<64x32xf32>
    %40 = tpu.matmul %38, %39, %cst_52 {dimension_numbers = #tpu.dot_dimension_numbers<[1], [0], [0], [1], [0, 0, 1, 1], [], []>} : vector<64x32xf32>, vector<32x32xf32>, vector<64x32xf32> -> vector<64x32xf32>
    %41 = arith.addf %37, %40 : vector<64x32xf32>
    %c0_53 = arith.constant 0 : index
    %c0_54 = arith.constant 0 : index
    %42 = vector.load %arg14[%c0_53, %c0_54] : memref<1x32xf32, #tpu.memory_space<vmem>>, vector<1x32xf32>
    %43 = vector.broadcast %42 : vector<1x32xf32> to vector<64x32xf32>
    %44 = arith.addf %41, %43 : vector<64x32xf32>
    %45 = vector.shape_cast %44 : vector<64x32xf32> to vector<8x8x32xf32>
    %c0_55 = arith.constant 0 : index
    %c0_56 = arith.constant 0 : index
    %46 = vector.load %arg11[%c0_55, %c0_56] : memref<32x32xf32, #tpu.memory_space<vmem>>, vector<32x32xf32>
    %c0_57 = arith.constant 0 : index
    %c0_58 = arith.constant 0 : index
    %47 = vector.load %arg15[%c0_57, %c0_58] : memref<1x32xf32, #tpu.memory_space<vmem>>, vector<1x32xf32>
    %48 = vector.shape_cast %47 : vector<1x32xf32> to vector<1x1x32xf32>
    %49 = vector.shape_cast %48 : vector<1x1x32xf32> to vector<1x1x32xf32>
    %50 = vector.broadcast %49 : vector<1x1x32xf32> to vector<8x8x32xf32>
    %c0_59 = arith.constant 0 : index
    %c0_60 = arith.constant 0 : index
    %51 = vector.load %arg16[%c0_59, %c0_60] : memref<32x128xf32, #tpu.memory_space<vmem>>, vector<32x128xf32>
    %c0_61 = arith.constant 0 : index
    %c0_62 = arith.constant 0 : index
    %52 = vector.load %arg17[%c0_61, %c0_62] : memref<32x128xf32, #tpu.memory_space<vmem>>, vector<32x128xf32>
    %c0_63 = arith.constant 0 : index
    %c0_64 = arith.constant 0 : index
    %53 = vector.load %arg18[%c0_63, %c0_64] : memref<16x128xf32, #tpu.memory_space<vmem>>, vector<16x128xf32>
    %c0_65 = arith.constant 0 : index
    %c0_66 = arith.constant 0 : index
    %54 = vector.load %arg19[%c0_65, %c0_66] : memref<32x128xf32, #tpu.memory_space<vmem>>, vector<32x128xf32>
    %c0_67 = arith.constant 0 : index
    %c0_68 = arith.constant 0 : index
    %55 = vector.load %arg20[%c0_67, %c0_68] : memref<1x128xf32, #tpu.memory_space<vmem>>, vector<1x128xf32>
    %56 = vector.shape_cast %55 : vector<1x128xf32> to vector<1x128xf32>
    %57 = vector.broadcast %56 : vector<1x128xf32> to vector<8x128xf32>
    %c0_69 = arith.constant 0 : index
    %c0_70 = arith.constant 0 : index
    %58 = vector.load %arg21[%c0_69, %c0_70] : memref<32x128xf32, #tpu.memory_space<vmem>>, vector<32x128xf32>
    %c0_71 = arith.constant 0 : index
    %c0_72 = arith.constant 0 : index
    %59 = vector.load %arg22[%c0_71, %c0_72] : memref<32x128xf32, #tpu.memory_space<vmem>>, vector<32x128xf32>
    %c0_73 = arith.constant 0 : index
    %c0_74 = arith.constant 0 : index
    %60 = vector.load %arg23[%c0_73, %c0_74] : memref<1x128xf32, #tpu.memory_space<vmem>>, vector<1x128xf32>
    %61 = vector.shape_cast %60 : vector<1x128xf32> to vector<1x128xf32>
    %62 = vector.broadcast %61 : vector<1x128xf32> to vector<8x128xf32>
    %cst_75 = arith.constant 0.000000e+00 : f32
    %63 = vector.broadcast %cst_75 : f32 to vector<8x32xf32>
    %64 = arith.negf %57 : vector<8x128xf32>
    %65 = math.exp %64 : vector<8x128xf32>
    %cst_76 = arith.constant 1.000000e+00 : f32
    %66 = vector.broadcast %cst_76 : f32 to vector<8x128xf32>
    %67 = arith.addf %66, %65 : vector<8x128xf32>
    %68 = arith.divf %66, %67 : vector<8x128xf32>
    %69 = math.tanh %57 : vector<8x128xf32>
    %70 = vector.extract_strided_slice %68 {offsets = [0, 0], sizes = [8, 32], strides = [1, 1]} : vector<8x128xf32> to vector<8x32xf32>
    %71 = vector.extract_strided_slice %68 {offsets = [0, 32], sizes = [8, 32], strides = [1, 1]} : vector<8x128xf32> to vector<8x32xf32>
    %72 = vector.extract_strided_slice %68 {offsets = [0, 96], sizes = [8, 32], strides = [1, 1]} : vector<8x128xf32> to vector<8x32xf32>
    %73 = vector.extract_strided_slice %69 {offsets = [0, 64], sizes = [8, 32], strides = [1, 1]} : vector<8x128xf32> to vector<8x32xf32>
    %74 = arith.mulf %71, %63 : vector<8x32xf32>
    %75 = arith.mulf %70, %73 : vector<8x32xf32>
    %76 = arith.addf %74, %75 : vector<8x32xf32>
    %77 = math.tanh %76 : vector<8x32xf32>
    %78 = arith.mulf %72, %77 : vector<8x32xf32>
    %cst_77 = arith.constant dense<0.000000e+00> : vector<8x128xf32>
    %79 = tpu.matmul %78, %58, %cst_77 {dimension_numbers = #tpu.dot_dimension_numbers<[1], [0], [0], [1], [0, 0, 1, 1], [], []>} : vector<8x32xf32>, vector<32x128xf32>, vector<8x128xf32> -> vector<8x128xf32>
    %80 = arith.addf %79, %62 : vector<8x128xf32>
    %81 = arith.negf %80 : vector<8x128xf32>
    %82 = math.exp %81 : vector<8x128xf32>
    %cst_78 = arith.constant 1.000000e+00 : f32
    %83 = vector.broadcast %cst_78 : f32 to vector<8x128xf32>
    %84 = arith.addf %83, %82 : vector<8x128xf32>
    %85 = arith.divf %83, %84 : vector<8x128xf32>
    %86 = math.tanh %80 : vector<8x128xf32>
    %87 = vector.extract_strided_slice %85 {offsets = [0, 0], sizes = [8, 32], strides = [1, 1]} : vector<8x128xf32> to vector<8x32xf32>
    %88 = vector.extract_strided_slice %85 {offsets = [0, 32], sizes = [8, 32], strides = [1, 1]} : vector<8x128xf32> to vector<8x32xf32>
    %89 = vector.extract_strided_slice %85 {offsets = [0, 96], sizes = [8, 32], strides = [1, 1]} : vector<8x128xf32> to vector<8x32xf32>
    %90 = vector.extract_strided_slice %86 {offsets = [0, 64], sizes = [8, 32], strides = [1, 1]} : vector<8x128xf32> to vector<8x32xf32>
    %91 = arith.mulf %88, %63 : vector<8x32xf32>
    %92 = arith.mulf %87, %90 : vector<8x32xf32>
    %93 = arith.addf %91, %92 : vector<8x32xf32>
    %94 = math.tanh %93 : vector<8x32xf32>
    %95 = arith.mulf %89, %94 : vector<8x32xf32>
    %cst_79 = arith.constant 0.000000e+00 : f32
    %96 = vector.broadcast %cst_79 : f32 to vector<8x16xf32>
    %c0_i32_80 = arith.constant 0 : i32
    %c5_i32 = arith.constant 5 : i32
    %97 = arith.addi %c0_i32_80, %c5_i32 : i32
    %c1_i32_81 = arith.constant 1 : i32
    %98:5 = scf.for %arg33 = %c0_i32_80 to %97 step %c1_i32_81 iter_args(%arg34 = %78, %arg35 = %76, %arg36 = %95, %arg37 = %93, %arg38 = %96) -> (vector<8x32xf32>, vector<8x32xf32>, vector<8x32xf32>, vector<8x32xf32>, vector<8x16xf32>)  : i32 {
      %cst_94 = arith.constant dense<0.000000e+00> : vector<8x32xf32>
      %108 = tpu.matmul %arg37, %46, %cst_94 {dimension_numbers = #tpu.dot_dimension_numbers<[1], [0], [0], [1], [0, 0, 1, 1], [], []>} : vector<8x32xf32>, vector<32x32xf32>, vector<8x32xf32> -> vector<8x32xf32>
      %109 = vector.shape_cast %108 : vector<8x32xf32> to vector<1x8x32xf32>
      %110 = vector.broadcast %109 : vector<1x8x32xf32> to vector<8x8x32xf32>
      %111 = arith.addf %110, %45 : vector<8x8x32xf32>
      %112 = math.tanh %111 : vector<8x8x32xf32>
      %113 = arith.mulf %112, %50 : vector<8x8x32xf32>
      %cst_95 = arith.constant dense<0.000000e+00> : vector<8x8xf32>
      %114 = vector.multi_reduction <add>, %113, %cst_95 [2] : vector<8x8x32xf32> to vector<8x8xf32>
      %115 = vector.shape_cast %114 : vector<8x8xf32> to vector<8x8x1xf32>
      %cst_96 = arith.constant dense<0xFF800000> : vector<8x1xf32>
      %116 = vector.multi_reduction <maximumf>, %115, %cst_96 [0] : vector<8x8x1xf32> to vector<8x1xf32>
      %117 = vector.shape_cast %116 : vector<8x1xf32> to vector<1x8x1xf32>
      %118 = vector.broadcast %117 : vector<1x8x1xf32> to vector<8x8x1xf32>
      %119 = arith.subf %115, %118 : vector<8x8x1xf32>
      %120 = math.exp %119 : vector<8x8x1xf32>
      %cst_97 = arith.constant dense<0.000000e+00> : vector<8x1xf32>
      %121 = vector.multi_reduction <add>, %120, %cst_97 [0] : vector<8x8x1xf32> to vector<8x1xf32>
      %122 = vector.shape_cast %121 : vector<8x1xf32> to vector<1x8x1xf32>
      %123 = vector.broadcast %122 : vector<1x8x1xf32> to vector<8x8x1xf32>
      %124 = arith.divf %120, %123 : vector<8x8x1xf32>
      %125 = vector.broadcast %124 : vector<8x8x1xf32> to vector<8x8x32xf32>
      %126 = arith.mulf %125, %33 : vector<8x8x32xf32>
      %cst_98 = arith.constant dense<0.000000e+00> : vector<8x32xf32>
      %127 = vector.multi_reduction <add>, %126, %cst_98 [0] : vector<8x8x32xf32> to vector<8x32xf32>
      %128 = vector.broadcast %124 : vector<8x8x1xf32> to vector<8x8x32xf32>
      %129 = arith.mulf %128, %34 : vector<8x8x32xf32>
      %cst_99 = arith.constant dense<0.000000e+00> : vector<8x32xf32>
      %130 = vector.multi_reduction <add>, %129, %cst_99 [0] : vector<8x8x32xf32> to vector<8x32xf32>
      %cst_100 = arith.constant dense<0.000000e+00> : vector<8x128xf32>
      %131 = tpu.matmul %127, %51, %cst_100 {dimension_numbers = #tpu.dot_dimension_numbers<[1], [0], [0], [1], [0, 0, 1, 1], [], []>} : vector<8x32xf32>, vector<32x128xf32>, vector<8x128xf32> -> vector<8x128xf32>
      %cst_101 = arith.constant dense<0.000000e+00> : vector<8x128xf32>
      %132 = tpu.matmul %130, %52, %cst_101 {dimension_numbers = #tpu.dot_dimension_numbers<[1], [0], [0], [1], [0, 0, 1, 1], [], []>} : vector<8x32xf32>, vector<32x128xf32>, vector<8x128xf32> -> vector<8x128xf32>
      %133 = arith.addf %131, %132 : vector<8x128xf32>
      %cst_102 = arith.constant dense<0.000000e+00> : vector<8x128xf32>
      %134 = tpu.matmul %arg38, %53, %cst_102 {dimension_numbers = #tpu.dot_dimension_numbers<[1], [0], [0], [1], [0, 0, 1, 1], [], []>} : vector<8x16xf32>, vector<16x128xf32>, vector<8x128xf32> -> vector<8x128xf32>
      %135 = arith.addf %133, %134 : vector<8x128xf32>
      %cst_103 = arith.constant dense<0.000000e+00> : vector<8x128xf32>
      %136 = tpu.matmul %arg34, %54, %cst_103 {dimension_numbers = #tpu.dot_dimension_numbers<[1], [0], [0], [1], [0, 0, 1, 1], [], []>} : vector<8x32xf32>, vector<32x128xf32>, vector<8x128xf32> -> vector<8x128xf32>
      %137 = arith.addf %135, %136 : vector<8x128xf32>
      %138 = arith.addf %137, %57 : vector<8x128xf32>
      %139 = arith.negf %138 : vector<8x128xf32>
      %140 = math.exp %139 : vector<8x128xf32>
      %cst_104 = arith.constant 1.000000e+00 : f32
      %141 = vector.broadcast %cst_104 : f32 to vector<8x128xf32>
      %142 = arith.addf %141, %140 : vector<8x128xf32>
      %143 = arith.divf %141, %142 : vector<8x128xf32>
      %144 = math.tanh %138 : vector<8x128xf32>
      %145 = vector.extract_strided_slice %143 {offsets = [0, 0], sizes = [8, 32], strides = [1, 1]} : vector<8x128xf32> to vector<8x32xf32>
      %146 = vector.extract_strided_slice %143 {offsets = [0, 32], sizes = [8, 32], strides = [1, 1]} : vector<8x128xf32> to vector<8x32xf32>
      %147 = vector.extract_strided_slice %143 {offsets = [0, 96], sizes = [8, 32], strides = [1, 1]} : vector<8x128xf32> to vector<8x32xf32>
      %148 = vector.extract_strided_slice %144 {offsets = [0, 64], sizes = [8, 32], strides = [1, 1]} : vector<8x128xf32> to vector<8x32xf32>
      %149 = arith.mulf %146, %arg35 : vector<8x32xf32>
      %150 = arith.mulf %145, %148 : vector<8x32xf32>
      %151 = arith.addf %149, %150 : vector<8x32xf32>
      %152 = math.tanh %151 : vector<8x32xf32>
      %153 = arith.mulf %147, %152 : vector<8x32xf32>
      %cst_105 = arith.constant dense<0.000000e+00> : vector<8x128xf32>
      %154 = tpu.matmul %153, %58, %cst_105 {dimension_numbers = #tpu.dot_dimension_numbers<[1], [0], [0], [1], [0, 0, 1, 1], [], []>} : vector<8x32xf32>, vector<32x128xf32>, vector<8x128xf32> -> vector<8x128xf32>
      %cst_106 = arith.constant dense<0.000000e+00> : vector<8x128xf32>
      %155 = tpu.matmul %arg36, %59, %cst_106 {dimension_numbers = #tpu.dot_dimension_numbers<[1], [0], [0], [1], [0, 0, 1, 1], [], []>} : vector<8x32xf32>, vector<32x128xf32>, vector<8x128xf32> -> vector<8x128xf32>
      %156 = arith.addf %154, %155 : vector<8x128xf32>
      %157 = arith.addf %156, %62 : vector<8x128xf32>
      %158 = arith.negf %157 : vector<8x128xf32>
      %159 = math.exp %158 : vector<8x128xf32>
      %cst_107 = arith.constant 1.000000e+00 : f32
      %160 = vector.broadcast %cst_107 : f32 to vector<8x128xf32>
      %161 = arith.addf %160, %159 : vector<8x128xf32>
      %162 = arith.divf %160, %161 : vector<8x128xf32>
      %163 = math.tanh %157 : vector<8x128xf32>
      %164 = vector.extract_strided_slice %162 {offsets = [0, 0], sizes = [8, 32], strides = [1, 1]} : vector<8x128xf32> to vector<8x32xf32>
      %165 = vector.extract_strided_slice %162 {offsets = [0, 32], sizes = [8, 32], strides = [1, 1]} : vector<8x128xf32> to vector<8x32xf32>
      %166 = vector.extract_strided_slice %162 {offsets = [0, 96], sizes = [8, 32], strides = [1, 1]} : vector<8x128xf32> to vector<8x32xf32>
      %167 = vector.extract_strided_slice %163 {offsets = [0, 64], sizes = [8, 32], strides = [1, 1]} : vector<8x128xf32> to vector<8x32xf32>
      %168 = arith.mulf %165, %arg37 : vector<8x32xf32>
      %169 = arith.mulf %164, %167 : vector<8x32xf32>
      %170 = arith.addf %168, %169 : vector<8x32xf32>
      %171 = math.tanh %170 : vector<8x32xf32>
      %172 = arith.mulf %166, %171 : vector<8x32xf32>
      %173 = arith.index_cast %arg33 : i32 to index
      %c0_108 = arith.constant 0 : index
      %c0_109 = arith.constant 0 : index
      %174 = vector.load %arg32[%173, %c0_108, %c0_109] : memref<5x8x32xf32, #tpu.memory_space<vmem>>, vector<1x8x32xf32>
      %175 = vector.shape_cast %174 : vector<1x8x32xf32> to vector<8x32xf32>
      %176 = vector.shape_cast %172 : vector<8x32xf32> to vector<1x8x32xf32>
      tpu.vector_store %arg32[%173, %c0_108, %c0_109], %176 {strides = array<i32>} : memref<5x8x32xf32, #tpu.memory_space<vmem>>, vector<1x8x32xf32>,
      %177 = arith.index_cast %arg33 : i32 to index
      %c0_110 = arith.constant 0 : index
      %c0_111 = arith.constant 0 : index
      %178 = vector.load %arg1[%177, %c0_110, %c0_111] : memref<5x8x16xf32, #tpu.memory_space<vmem>>, vector<1x8x16xf32>
      %179 = vector.shape_cast %178 : vector<1x8x16xf32> to vector<8x16xf32>
      scf.yield %153, %151, %172, %170, %179 : vector<8x32xf32>, vector<8x32xf32>, vector<8x32xf32>, vector<8x32xf32>, vector<8x16xf32>
    }
    %c5_i32_82 = arith.constant 5 : i32
    %c0_83 = arith.constant 0 : index
    %c0_84 = arith.constant 0 : index
    %c0_85 = arith.constant 0 : index
    %99 = vector.load %arg32[%c0_83, %c0_84, %c0_85] : memref<5x8x32xf32, #tpu.memory_space<vmem>>, vector<5x8x32xf32>
    %100 = vector.shape_cast %99 : vector<5x8x32xf32> to vector<40x32xf32>
    %c0_86 = arith.constant 0 : index
    %c0_87 = arith.constant 0 : index
    %101 = vector.load %arg24[%c0_86, %c0_87] : memref<32x128xf32, #tpu.memory_space<vmem>>, vector<32x128xf32>
    %cst_88 = arith.constant dense<0.000000e+00> : vector<40x128xf32>
    %102 = tpu.matmul %100, %101, %cst_88 {dimension_numbers = #tpu.dot_dimension_numbers<[1], [0], [0], [1], [0, 0, 1, 1], [], []>} : vector<40x32xf32>, vector<32x128xf32>, vector<40x128xf32> -> vector<40x128xf32>
    %c0_89 = arith.constant 0 : index
    %c0_90 = arith.constant 0 : index
    %103 = vector.load %arg25[%c0_89, %c0_90] : memref<1x128xf32, #tpu.memory_space<vmem>>, vector<1x128xf32>
    %104 = vector.broadcast %103 : vector<1x128xf32> to vector<40x128xf32>
    %105 = arith.addf %102, %104 : vector<40x128xf32>
    %106 = vector.shape_cast %105 : vector<40x128xf32> to vector<5x8x128xf32>
    %c0_91 = arith.constant 0 : index
    %c0_92 = arith.constant 0 : index
    %c0_93 = arith.constant 0 : index
    %107 = vector.load %arg26[%c0_91, %c0_92, %c0_93] : memref<5x8x128xf32, #tpu.memory_space<vmem>>, vector<5x8x128xf32>
    tpu.vector_store %arg26[%c0_91, %c0_92, %c0_93], %106 {strides = array<i32>} : memref<5x8x128xf32, #tpu.memory_space<vmem>>, vector<5x8x128xf32>,
    return
  }
}

</mosaic_0001>

<llo_original>
// kernel: seq2seq_forward.1
$region0: #{seq2seq_forward.1}
  #allocation0 [shape = 'u32[]', space=smem, size = 0x4, offset = 0x4, fixed_abs, tag = 'smem constant byte address 0x4 - core index']
  #allocation1 [shape = 'u32[144,128]{1,0:T(1,128)}', space=vmem, size = 0x12000, scoped, tag = 'internal scratch']
  #allocation2 [shape = 'f32[8,8,256]{2,1,0:T(8,128)}', space=vmem, size = 0x10000, scoped, tag = 'scratch operand']
  #allocation3 [shape = 'f32[8,8,32]{2,1,0:T(8,128)}', space=vmem, size = 0x8000, scoped, tag = 'scratch operand']
  #allocation4 [shape = 'f32[8,8,32]{2,1,0:T(8,128)}', space=vmem, size = 0x8000, scoped, tag = 'scratch operand']
  #allocation5 [shape = 'f32[8,8,32]{2,1,0:T(8,128)}', space=vmem, size = 0x8000, scoped, tag = 'scratch operand']
  #allocation6 [shape = 'f32[8,8,32]{2,1,0:T(8,128)}', space=vmem, size = 0x8000, scoped, tag = 'scratch operand']
  #allocation7 [shape = 'f32[5,8,32]{2,1,0:T(8,128)}', space=vmem, size = 0x5000, scoped, tag = 'scratch operand']
  %s0 = inlined_call_operand.vmem [shape: f32[8,8,16], index: 0, kind: input, shape index: {}]
  %s1 = inlined_call_operand.vmem [shape: f32[5,8,16], index: 1, kind: input, shape index: {}]
  %s2 = inlined_call_operand.vmem [shape: f32[16,256], index: 2, kind: input, shape index: {}]
  %s3 = inlined_call_operand.vmem [shape: f32[32,128], index: 3, kind: input, shape index: {}]
  %s4 = inlined_call_operand.vmem [shape: f32[32,128], index: 4, kind: input, shape index: {}]
  %s5 = inlined_call_operand.vmem [shape: f32[1,256], index: 5, kind: input, shape index: {}]
  %s6 = inlined_call_operand.vmem [shape: f32[32,256], index: 6, kind: input, shape index: {}]
  %s7 = inlined_call_operand.vmem [shape: f32[32,256], index: 7, kind: input, shape index: {}]
  %s8 = inlined_call_operand.vmem [shape: f32[32,128], index: 8, kind: input, shape index: {}]
  %s9 = inlined_call_operand.vmem [shape: f32[32,128], index: 9, kind: input, shape index: {}]
  %s10 = inlined_call_operand.vmem [shape: f32[1,256], index: 10, kind: input, shape index: {}]
  %s11 = inlined_call_operand.vmem [shape: f32[32,32], index: 11, kind: input, shape index: {}]
  %s12 = inlined_call_operand.vmem [shape: f32[32,32], index: 12, kind: input, shape index: {}]
  %s13 = inlined_call_operand.vmem [shape: f32[32,32], index: 13, kind: input, shape index: {}]
  %s14 = inlined_call_operand.hbm [shape: f32[1,32], index: 14, kind: input, shape index: {}]
  %s15 = inlined_call_operand.hbm [shape: f32[1,32], index: 15, kind: input, shape index: {}]
  %s16 = inlined_call_operand.vmem [shape: f32[32,128], index: 16, kind: input, shape index: {}]
  %s17 = inlined_call_operand.vmem [shape: f32[32,128], index: 17, kind: input, shape index: {}]
  %s18 = inlined_call_operand.hbm [shape: f32[16,128], index: 18, kind: input, shape index: {}]
  %s19 = inlined_call_operand.vmem [shape: f32[32,128], index: 19, kind: input, shape index: {}]
  %s20 = inlined_call_operand.hbm [shape: f32[1,128], index: 20, kind: input, shape index: {}]
  %s21 = inlined_call_operand.vmem [shape: f32[32,128], index: 21, kind: input, shape index: {}]
  %s22 = inlined_call_operand.vmem [shape: f32[32,128], index: 22, kind: input, shape index: {}]
  %s23 = inlined_call_operand.vmem [shape: f32[1,128], index: 23, kind: input, shape index: {}]
  %s24 = inlined_call_operand.vmem [shape: f32[32,128], index: 24, kind: input, shape index: {}]
  %s25 = inlined_call_operand.vmem [shape: f32[1,128], index: 25, kind: input, shape index: {}]
  %s26 = inlined_call_operand.vmem [shape: f32[5,8,128], index: 26, kind: output, shape index: {}]
  %s27 = sld [smem:[#allocation0]]
  $region151: #{seq2seq_forward.1} parent=0
    _
  %s29 = ssub.s32 1, %s27
  %s30 = scalar_select 0, %s29, %s27
  $region1: #{seq2seq_forward.1} parent=0
    #allocation8 [shape = 'u8[512]{0}', space=vmem, size = 0x400, scoped, tag = 'input window, operand 14, single buffered']
    #allocation9 [shape = 's32[1]{0}', space=sflag, size = 0x4, scoped, tag = 'scoped memory for seq2seq_forward.1']
    #allocation10 [shape = 'u8[512]{0}', space=vmem, size = 0x400, scoped, tag = 'input window, operand 15, single buffered']
    #allocation11 [shape = 's32[1]{0}', space=sflag, size = 0x4, scoped, tag = 'scoped memory for seq2seq_forward.1']
    #allocation12 [shape = 'u8[8192]{0}', space=vmem, size = 0x2000, scoped, tag = 'input window, operand 18, single buffered']
    #allocation13 [shape = 'u8[512]{0}', space=vmem, size = 0x400, scoped, tag = 'input window, operand 20, single buffered']
    #allocation14 [shape = 's32[1]{0}', space=sflag, size = 0x4, scoped, tag = 'scoped memory for seq2seq_forward.1']
    %31 = vsyncpa [#allocation9], 0
    %32 = vsyncpa [#allocation11], 0
    %33 = vsyncpa [#allocation14], 0
    // Predicated region
    $region2: #{seq2seq_forward.1} parent=1 // pred_check
      _
    $region3: #{seq2seq_forward.1} parent=1 // pred_check_branch
      %35 = sbr.rel (0) target = $region5
    $region4: #{seq2seq_forward.1} parent=1 // pred_region
      _
    $region5: #{seq2seq_forward.1} parent=1 // pred_fallthru
      _
    // Predicated region
    $region6: #{seq2seq_forward.1} parent=1 // pred_check
      _
    $region7: #{seq2seq_forward.1} parent=1 // pred_check_branch
      %37 = sbr.rel (0) target = $region9
    $region8: #{seq2seq_forward.1} parent=1 // pred_region
      _
    $region9: #{seq2seq_forward.1} parent=1 // pred_fallthru
      _
    // Predicated region
    $region10: #{seq2seq_forward.1} parent=1 // pred_check
      _
    $region11: #{seq2seq_forward.1} parent=1 // pred_check_branch
      %39 = sbr.rel (0) target = $region13
    $region12: #{seq2seq_forward.1} parent=1 // pred_region
      _
    $region13: #{seq2seq_forward.1} parent=1 // pred_fallthru
      _
    // Predicated region
    $region14: #{seq2seq_forward.1} parent=1 // pred_check
      _
    $region15: #{seq2seq_forward.1} parent=1 // pred_check_branch
      %41 = sbr.rel (0) target = $region17
    $region16: #{seq2seq_forward.1} parent=1 // pred_region
      _
    $region17: #{seq2seq_forward.1} parent=1 // pred_fallthru
      _
    // Predicated region
    $region18: #{seq2seq_forward.1} parent=1 // pred_check
      _
    $region19: #{seq2seq_forward.1} parent=1 // pred_check_branch
      %43 = sbr.rel (0) target = $region21
    $region20: #{seq2seq_forward.1} parent=1 // pred_region
      _
    $region21: #{seq2seq_forward.1} parent=1 // pred_fallthru
      _
    // Predicated region
    $region22: #{seq2seq_forward.1} parent=1 // pred_check
      _
    $region23: #{seq2seq_forward.1} parent=1 // pred_check_branch
      %45 = sbr.rel (0) target = $region25
    $region24: #{seq2seq_forward.1} parent=1 // pred_region
      _
    $region25: #{seq2seq_forward.1} parent=1 // pred_fallthru
      _
    // Predicated region
    $region26: #{seq2seq_forward.1} parent=1 // pred_check
      _
    $region27: #{seq2seq_forward.1} parent=1 // pred_check_branch
      %47 = sbr.rel (0) target = $region29
    $region28: #{seq2seq_forward.1} parent=1 // pred_region
      _
    $region29: #{seq2seq_forward.1} parent=1 // pred_fallthru
      _
    // Predicated region
    $region30: #{seq2seq_forward.1} parent=1 // pred_check
      _
    $region31: #{seq2seq_forward.1} parent=1 // pred_check_branch
      %49 = sbr.rel (0) target = $region33
    $region32: #{seq2seq_forward.1} parent=1 // pred_region
      _
    $region33: #{seq2seq_forward.1} parent=1 // pred_fallthru
      _
    // Predicated region
    $region34: #{seq2seq_forward.1} parent=1 // pred_check
      _
    $region35: #{seq2seq_forward.1} parent=1 // pred_check_branch
      %51 = sbr.rel (0) target = $region37
    $region36: #{seq2seq_forward.1} parent=1 // pred_region
      _
    $region37: #{seq2seq_forward.1} parent=1 // pred_fallthru
      _
    // Predicated region
    $region38: #{seq2seq_forward.1} parent=1 // pred_check
      _
    $region39: #{seq2seq_forward.1} parent=1 // pred_check_branch
      %53 = sbr.rel (0) target = $region41
    $region40: #{seq2seq_forward.1} parent=1 // pred_region
      _
    $region41: #{seq2seq_forward.1} parent=1 // pred_fallthru
      _
    // Predicated region
    $region42: #{seq2seq_forward.1} parent=1 // pred_check
      _
    $region43: #{seq2seq_forward.1} parent=1 // pred_check_branch
      %55 = sbr.rel (0) target = $region45
    $region44: #{seq2seq_forward.1} parent=1 // pred_region
      _
    $region45: #{seq2seq_forward.1} parent=1 // pred_fallthru
      _
    // Predicated region
    $region46: #{seq2seq_forward.1} parent=1 // pred_check
      _
    $region47: #{seq2seq_forward.1} parent=1 // pred_check_branch
      %57 = sbr.rel (0) target = $region49
    $region48: #{seq2seq_forward.1} parent=1 // pred_region
      _
    $region49: #{seq2seq_forward.1} parent=1 // pred_fallthru
      _
    // Predicated region
    $region50: #{seq2seq_forward.1} parent=1 // pred_check
      _
    $region51: #{seq2seq_forward.1} parent=1 // pred_check_branch
      %59 = sbr.rel (0) target = $region53
    $region52: #{seq2seq_forward.1} parent=1 // pred_region
      _
    $region53: #{seq2seq_forward.1} parent=1 // pred_fallthru
      _
    // Predicated region
    $region54: #{seq2seq_forward.1} parent=1 // pred_check
      _
    $region55: #{seq2seq_forward.1} parent=1 // pred_check_branch
      %61 = sbr.rel (0) target = $region57
    $region56: #{seq2seq_forward.1} parent=1 // pred_region
      _
    $region57: #{seq2seq_forward.1} parent=1 // pred_fallthru
      _
    // Predicated region
    $region58: #{seq2seq_forward.1} parent=1 // pred_check
      _
    $region59: #{seq2seq_forward.1} parent=1 // pred_check_branch
      %63 = sbr.rel (0) target = $region61
    $region60: #{seq2seq_forward.1} parent=1 // pred_region
      %s65 = ssub.s32 16, 16
      %66 = vsyncadd [#allocation9], %s65
      %s68 = sshll.u32 [#allocation8], 4
      %s69 = int_to_ptr.vmem [resolvable:$true] %s68
      %71 = dma.hbm_to_vmem [thread:$0]  %s14, 16, %s69, [#allocation9]
    $region61: #{seq2seq_forward.1} parent=1 // pred_fallthru
      _
    // Predicated region
    $region62: #{seq2seq_forward.1} parent=1 // pred_check
      _
    $region63: #{seq2seq_forward.1} parent=1 // pred_check_branch
      %73 = sbr.rel (0) target = $region65
    $region64: #{seq2seq_forward.1} parent=1 // pred_region
      %s75 = ssub.s32 16, 16
      %76 = vsyncadd [#allocation11], %s75
      %s78 = sshll.u32 [#allocation10], 4
      %s79 = int_to_ptr.vmem [resolvable:$true] %s78
      %81 = dma.hbm_to_vmem [thread:$0]  %s15, 16, %s79, [#allocation11]
    $region65: #{seq2seq_forward.1} parent=1 // pred_fallthru
      _
    // Predicated region
    $region66: #{seq2seq_forward.1} parent=1 // pred_check
      _
    $region67: #{seq2seq_forward.1} parent=1 // pred_check_branch
      %83 = sbr.rel (0) target = $region69
    $region68: #{seq2seq_forward.1} parent=1 // pred_region
      _
    $region69: #{seq2seq_forward.1} parent=1 // pred_fallthru
      _
    // Predicated region
    $region70: #{seq2seq_forward.1} parent=1 // pred_check
      _
    $region71: #{seq2seq_forward.1} parent=1 // pred_check_branch
      %85 = sbr.rel (0) target = $region73
    $region72: #{seq2seq_forward.1} parent=1 // pred_region
      _
    $region73: #{seq2seq_forward.1} parent=1 // pred_fallthru
      _
    // Predicated region
    $region74: #{seq2seq_forward.1} parent=1 // pred_check
      _
    $region75: #{seq2seq_forward.1} parent=1 // pred_check_branch
      %87 = sbr.rel (0) target = $region77
    $region76: #{seq2seq_forward.1} parent=1 // pred_region
      %s89 = ssub.s32 256, 256
      %90 = vsyncadd [#allocation11], %s89
      %s91 = sshll.u32 [#allocation12], 4
      %s92 = int_to_ptr.vmem [resolvable:$true] %s91
      %97 = dma.hbm_to_vmem [thread:$0]  %s18, 256, %s92, [#allocation11], 128, 128, 8
    $region77: #{seq2seq_forward.1} parent=1 // pred_fallthru
      _
    // Predicated region
    $region78: #{seq2seq_forward.1} parent=1 // pred_check
      _
    $region79: #{seq2seq_forward.1} parent=1 // pred_check_branch
      %99 = sbr.rel (0) target = $region81
    $region80: #{seq2seq_forward.1} parent=1 // pred_region
      _
    $region81: #{seq2seq_forward.1} parent=1 // pred_fallthru
      _
    // Predicated region
    $region82: #{seq2seq_forward.1} parent=1 // pred_check
      _
    $region83: #{seq2seq_forward.1} parent=1 // pred_check_branch
      %101 = sbr.rel (0) target = $region85
    $region84: #{seq2seq_forward.1} parent=1 // pred_region
      %s103 = ssub.s32 16, 16
      %104 = vsyncadd [#allocation14], %s103
      %s106 = sshll.u32 [#allocation13], 4
      %s107 = int_to_ptr.vmem [resolvable:$true] %s106
      %109 = dma.hbm_to_vmem [thread:$0]  %s20, 16, %s107, [#allocation14]
    $region85: #{seq2seq_forward.1} parent=1 // pred_fallthru
      _
    // Predicated region
    $region86: #{seq2seq_forward.1} parent=1 // pred_check
      _
    $region87: #{seq2seq_forward.1} parent=1 // pred_check_branch
      %111 = sbr.rel (0) target = $region89
    $region88: #{seq2seq_forward.1} parent=1 // pred_region
      _
    $region89: #{seq2seq_forward.1} parent=1 // pred_fallthru
      _
    // Predicated region
    $region90: #{seq2seq_forward.1} parent=1 // pred_check
      _
    $region91: #{seq2seq_forward.1} parent=1 // pred_check_branch
      %113 = sbr.rel (0) target = $region93
    $region92: #{seq2seq_forward.1} parent=1 // pred_region
      _
    $region93: #{seq2seq_forward.1} parent=1 // pred_fallthru
      _
    // Predicated region
    $region94: #{seq2seq_forward.1} parent=1 // pred_check
      _
    $region95: #{seq2seq_forward.1} parent=1 // pred_check_branch
      %115 = sbr.rel (0) target = $region97
    $region96: #{seq2seq_forward.1} parent=1 // pred_region
      _
    $region97: #{seq2seq_forward.1} parent=1 // pred_fallthru
      _
    // Predicated region
    $region98: #{seq2seq_forward.1} parent=1 // pred_check
      _
    $region99: #{seq2seq_forward.1} parent=1 // pred_check_branch
      %117 = sbr.rel (0) target = $region101
    $region100: #{seq2seq_forward.1} parent=1 // pred_region
      _
    $region101: #{seq2seq_forward.1} parent=1 // pred_fallthru
      _
    // Predicated region
    $region102: #{seq2seq_forward.1} parent=1 // pred_check
      _
    $region103: #{seq2seq_forward.1} parent=1 // pred_check_branch
      %119 = sbr.rel (0) target = $region105
    $region104: #{seq2seq_forward.1} parent=1 // pred_region
      _
    $region105: #{seq2seq_forward.1} parent=1 // pred_fallthru
      _
    // Predicated region
    $region106: #{seq2seq_forward.1} parent=1 // pred_check
      _
    $region107: #{seq2seq_forward.1} parent=1 // pred_check_branch
      %121 = sbr.rel (0) target = $region109
    $region108: #{seq2seq_forward.1} parent=1 // pred_region
      %122 = dma.done [#allocation9], 16
    $region109: #{seq2seq_forward.1} parent=1 // pred_fallthru
      _
    // Predicated region
    $region110: #{seq2seq_forward.1} parent=1 // pred_check
      _
    $region111: #{seq2seq_forward.1} parent=1 // pred_check_branch
      %124 = sbr.rel (0) target = $region113
    $region112: #{seq2seq_forward.1} parent=1 // pred_region
      %125 = dma.done [#allocation11], 16
    $region113: #{seq2seq_forward.1} parent=1 // pred_fallthru
      _
    // Predicated region
    $region114: #{seq2seq_forward.1} parent=1 // pred_check
      _
    $region115: #{seq2seq_forward.1} parent=1 // pred_check_branch
      %127 = sbr.rel (0) target = $region117
    $region116: #{seq2seq_forward.1} parent=1 // pred_region
      %128 = dma.done [#allocation11], 256
    $region117: #{seq2seq_forward.1} parent=1 // pred_fallthru
      _
    // Predicated region
    $region118: #{seq2seq_forward.1} parent=1 // pred_check
      _
    $region119: #{seq2seq_forward.1} parent=1 // pred_check_branch
      %130 = sbr.rel (0) target = $region121
    $region120: #{seq2seq_forward.1} parent=1 // pred_region
      %131 = dma.done [#allocation14], 16
    $region121: #{seq2seq_forward.1} parent=1 // pred_fallthru
      _
    %v132 = vld [vmem:[%s0] sm:$0xff]
    %v133 = vld [vmem:[%s0 + $0x8] sm:$0xff]
    %v134 = vld [vmem:[%s0 + $0x10] sm:$0xff]
    %v135 = vld [vmem:[%s0 + $0x18] sm:$0xff]
    %v136 = vld [vmem:[%s0 + $0x20] sm:$0xff]
    %v137 = vld [vmem:[%s0 + $0x28] sm:$0xff]
    %v138 = vld [vmem:[%s0 + $0x30] sm:$0xff]
    %v139 = vld [vmem:[%s0 + $0x38] sm:$0xff]
    %v140 = vld [vmem:[%s2] sm:$0xff]
    %v141 = vld [vmem:[%s2 + $0x8] sm:$0xff]
    %v142 = vld [vmem:[%s2 + $0x10] sm:$0xff]
    %v143 = vld [vmem:[%s2 + $0x18] sm:$0xff]
    %v144 = vld [vmem:[%s5] sm:$0x3]
    %v146 = vlaneseq
    %v147 = vshrl.u32 %v146, 7
    %v148 = vsub.s32 0, %v147
    %v149 = vrot.slane %v144, %v148
    %v150 = vlaneseq
    %v151 = vshrl.u32 %v150, 7
    %v152 = vsub.s32 1, %v151
    %v153 = vrot.slane %v144, %v152
    %vm156 = vcmask 130048
    %v158 = vsel %vm156, %v132, 0
    %v161 = vsel %vm156, %v133, 0
    %v164 = vsel %vm156, %v134, 0
    %v167 = vsel %vm156, %v135, 0
    %v170 = vsel %vm156, %v136, 0
    %v173 = vsel %vm156, %v137, 0
    %v176 = vsel %vm156, %v138, 0
    %v179 = vsel %vm156, %v139, 0
    %181 = vmatprep.subr.mxu0 %v141
    %182 = vmatpush1.msra.mxu0 %v140
    %183 = vmatprep.subr.mxu0 %v143
    %184 = vmatpush1.msra.mxu0 %v142
    %185 = vmatprep.subr.mxu0 0.0
    %186 = vmatpush1.msra.mxu0 0.0
    %187 = vmatprep.subr.mxu0 0.0
    %188 = vmatpush1.msra.mxu0 0.0
    %189 = vmatprep.subr.mxu0 0.0
    %190 = vmatpush1.msra.mxu0 0.0
    %191 = vmatprep.subr.mxu0 0.0
    %192 = vmatpush1.msra.mxu0 0.0
    %193 = vmatprep.subr.mxu0 0.0
    %194 = vmatpush1.msra.mxu0 0.0
    %195 = vmatprep.subr.mxu0 0.0
    %196 = vmatpush1.msra.mxu0 0.0
    %197 = vmatprep.subr.mxu0 0.0
    %198 = vmatpush1.msra.mxu0 0.0
    %199 = vmatprep.subr.mxu0 0.0
    %200 = vmatpush1.msra.mxu0 0.0
    %201 = vmatprep.subr.mxu0 0.0
    %202 = vmatpush1.msra.mxu0 0.0
    %203 = vmatprep.subr.mxu0 0.0
    %204 = vmatpush1.msra.mxu0 0.0
    %205 = vmatprep.subr.mxu0 0.0
    %206 = vmatpush1.msra.mxu0 0.0
    %207 = vmatprep.subr.mxu0 0.0
    %208 = vmatpush1.msra.mxu0 0.0
    %209 = vmatprep.subr.mxu0 0.0
    %210 = vmatpush1.msra.mxu0 0.0
    %211 = vmatprep.subr.mxu0 0.0
    %212 = vmatpush1.msra.mxu0 0.0
    %213 = vmatprep.subr.mxu0 0.0
    %214 = vmatpush1.msra.mxu0 0.0
    %215 = vmatprep.subr.mxu0 0.0
    %216 = vmatpush1.msra.mxu0 0.0
    %217 = vmatprep.subr.mxu0 0.0
    %218 = vmatpush1.msra.mxu0 0.0
    %219 = vmatprep.subr.mxu0 0.0
    %220 = vmatpush1.msra.mxu0 0.0
    %221 = vmatprep.subr.mxu0 0.0
    %222 = vmatpush1.msra.mxu0 0.0
    %223 = vmatprep.subr.mxu0 0.0
    %224 = vmatpush1.msra.mxu0 0.0
    %225 = vmatprep.subr.mxu0 0.0
    %226 = vmatpush1.msra.mxu0 0.0
    %227 = vmatprep.subr.mxu0 0.0
    %228 = vmatpush1.msra.mxu0 0.0
    %229 = vmatprep.subr.mxu0 0.0
    %230 = vmatpush1.msra.mxu0 0.0
    %231 = vmatprep.subr.mxu0 0.0
    %232 = vmatpush1.msra.mxu0 0.0
    %233 = vmatprep.subr.mxu0 0.0
    %234 = vmatpush1.msra.mxu0 0.0
    %235 = vmatprep.subr.mxu0 0.0
    %236 = vmatpush1.msra.mxu0 0.0
    %237 = vmatprep.subr.mxu0 0.0
    %238 = vmatpush1.msra.mxu0 0.0
    %239 = vmatprep.subr.mxu0 0.0
    %240 = vmatpush1.msra.mxu0 0.0
    %241 = vmatprep.subr.mxu0 0.0
    %242 = vmatpush1.msra.mxu0 0.0
    %243 = vmatprep.subr.mxu0 0.0
    %244 = vmatpush1.msra.mxu0 0.0
    %245 = vmatprep.mubr.f32.mxu0 0.0
    %246 = vmatmul.mubr.f32.gmra.mrb[0].mxu0 %v158
    %v247 = vpop.f32.mrb[0].mxu0
    %v248 = vadd.f32 %v149, %v247
    %v249 = vpop.f32.mrb[0].mxu0
    %v250 = vadd.f32 %v153, %v249
    %251 = vmatprep.mubr.f32.mxu0 0.0
    %252 = vmatmul.mubr.f32.gmra.mrb[0].mxu0 %v161
    %v253 = vpop.f32.mrb[0].mxu0
    %v254 = vadd.f32 %v149, %v253
    %v255 = vpop.f32.mrb[0].mxu0
    %v256 = vadd.f32 %v153, %v255
    %257 = vmatprep.mubr.f32.mxu0 0.0
    %258 = vmatmul.mubr.f32.gmra.mrb[0].mxu0 %v164
    %v259 = vpop.f32.mrb[0].mxu0
    %v260 = vadd.f32 %v149, %v259
    %v261 = vpop.f32.mrb[0].mxu0
    %v262 = vadd.f32 %v153, %v261
    %263 = vmatprep.mubr.f32.mxu0 0.0
    %264 = vmatmul.mubr.f32.gmra.mrb[0].mxu0 %v167
    %v265 = vpop.f32.mrb[0].mxu0
    %v266 = vadd.f32 %v149, %v265
    %v267 = vpop.f32.mrb[0].mxu0
    %v268 = vadd.f32 %v153, %v267
    %269 = vmatprep.mubr.f32.mxu0 0.0
    %270 = vmatmul.mubr.f32.gmra.mrb[0].mxu0 %v170
    %v271 = vpop.f32.mrb[0].mxu0
    %v272 = vadd.f32 %v149, %v271
    %v273 = vpop.f32.mrb[0].mxu0
    %v274 = vadd.f32 %v153, %v273
    %275 = vmatprep.mubr.f32.mxu0 0.0
    %276 = vmatmul.mubr.f32.gmra.mrb[0].mxu0 %v173
    %v277 = vpop.f32.mrb[0].mxu0
    %v278 = vadd.f32 %v149, %v277
    %v279 = vpop.f32.mrb[0].mxu0
    %v280 = vadd.f32 %v153, %v279
    %281 = vmatprep.mubr.f32.mxu0 0.0
    %282 = vmatmul.mubr.f32.gmra.mrb[0].mxu0 %v176
    %v283 = vpop.f32.mrb[0].mxu0
    %v284 = vadd.f32 %v149, %v283
    %v285 = vpop.f32.mrb[0].mxu0
    %v286 = vadd.f32 %v153, %v285
    %287 = vmatprep.mubr.f32.mxu0 0.0
    %288 = vmatmul.mubr.f32.gmra.mrb[0].mxu0 %v179
    %v289 = vpop.f32.mrb[0].mxu0
    %v290 = vadd.f32 %v149, %v289
    %v291 = vpop.f32.mrb[0].mxu0
    %v292 = vadd.f32 %v153, %v291
    %293 = vdwg.mxu0
    %294 = vst [vmem:[#allocation2] sm:$0xff] %v248
    %295 = vst [vmem:[#allocation2 + $0x8] sm:$0xff] %v250
    %296 = vst [vmem:[#allocation2 + $0x10] sm:$0xff] %v254
    %297 = vst [vmem:[#allocation2 + $0x18] sm:$0xff] %v256
    %298 = vst [vmem:[#allocation2 + $0x20] sm:$0xff] %v260
    %299 = vst [vmem:[#allocation2 + $0x28] sm:$0xff] %v262
    %300 = vst [vmem:[#allocation2 + $0x30] sm:$0xff] %v266
    %301 = vst [vmem:[#allocation2 + $0x38] sm:$0xff] %v268
    %302 = vst [vmem:[#allocation2 + $0x40] sm:$0xff] %v272
    %303 = vst [vmem:[#allocation2 + $0x48] sm:$0xff] %v274
    %304 = vst [vmem:[#allocation2 + $0x50] sm:$0xff] %v278
    %305 = vst [vmem:[#allocation2 + $0x58] sm:$0xff] %v280
    %306 = vst [vmem:[#allocation2 + $0x60] sm:$0xff] %v284
    %307 = vst [vmem:[#allocation2 + $0x68] sm:$0xff] %v286
    %308 = vst [vmem:[#allocation2 + $0x70] sm:$0xff] %v290
    %309 = vst [vmem:[#allocation2 + $0x78] sm:$0xff] %v292
    %v310 = vld [vmem:[%s3] sm:$0xff]
    %v311 = vld [vmem:[%s3 + $0x8] sm:$0xff]
    %v312 = vld [vmem:[%s3 + $0x10] sm:$0xff]
    %v313 = vld [vmem:[%s3 + $0x18] sm:$0xff]
    %v314 = vld [vmem:[%s4] sm:$0xff]
    %v315 = vld [vmem:[%s4 + $0x8] sm:$0xff]
    %v316 = vld [vmem:[%s4 + $0x10] sm:$0xff]
    %v317 = vld [vmem:[%s4 + $0x18] sm:$0xff]
    loop: start=0, step=1, limit=8
    $region122: #{seq2seq_forward.1} parent=1 // loop_pre_header
      _
    $region123: #{seq2seq_forward.1} parent=1 // loop_header
      %s319 = sphi 0, %s323
      %p320 = scmp.ge.s32.totalorder %s319, 8
      %v324 = vphi 0.0, %v513
      %v325 = vphi 0.0, %v507
      %v326 = vphi 0.0, %v537
      %v327 = vphi 0.0, %v531
    $region124: #{seq2seq_forward.1} parent=1 // loop_header_branch
      %322 = sbr.rel (%p320) target = $region128
    $region125: #{seq2seq_forward.1} parent=1 // loop_body
      %s328 = ssub.s32 7, %s319
      %s329 = smul.u32 %s319, 2
      %s330 = smul.addr %s329, 8
      %s331 = scalar_lea.vmem [#allocation2], %s330
      %v332 = vld [vmem:[%s331] sm:$0xff]
      %s333 = smul.u32 %s328, 2
      %s334 = smul.addr %s333, 8
      %s335 = scalar_lea.vmem [#allocation2], %s334
      %v336 = vld [vmem:[%s335 + $0x8] sm:$0xff]
      %338 = vrot.lane.b32.xlu0 %v324, 32
      %v339 = vpop.permute.xlu0 %338
      %vm340 = vcmask 261120
      %v341 = vsel %vm340, %v339, 0
      %343 = vmatprep.subr.mxu0 0.0
      %344 = vmatpush1.msra.mxu0 %v310
      %345 = vmatprep.subr.mxu0 0.0
      %346 = vmatpush1.msra.mxu0 %v311
      %347 = vmatprep.subr.mxu0 0.0
      %348 = vmatpush1.msra.mxu0 %v312
      %349 = vmatprep.subr.mxu0 0.0
      %350 = vmatpush1.msra.mxu0 %v313
      %351 = vmatprep.subr.mxu0 0.0
      %352 = vmatpush1.msra.mxu0 0.0
      %353 = vmatprep.subr.mxu0 0.0
      %354 = vmatpush1.msra.mxu0 0.0
      %355 = vmatprep.subr.mxu0 0.0
      %356 = vmatpush1.msra.mxu0 0.0
      %357 = vmatprep.subr.mxu0 0.0
      %358 = vmatpush1.msra.mxu0 0.0
      %359 = vmatprep.subr.mxu0 0.0
      %360 = vmatpush1.msra.mxu0 0.0
      %361 = vmatprep.subr.mxu0 0.0
      %362 = vmatpush1.msra.mxu0 0.0
      %363 = vmatprep.subr.mxu0 0.0
      %364 = vmatpush1.msra.mxu0 0.0
      %365 = vmatprep.subr.mxu0 0.0
      %366 = vmatpush1.msra.mxu0 0.0
      %367 = vmatprep.subr.mxu0 0.0
      %368 = vmatpush1.msra.mxu0 0.0
      %369 = vmatprep.subr.mxu0 0.0
      %370 = vmatpush1.msra.mxu0 0.0
      %371 = vmatprep.subr.mxu0 0.0
      %372 = vmatpush1.msra.mxu0 0.0
      %373 = vmatprep.subr.mxu0 0.0
      %374 = vmatpush1.msra.mxu0 0.0
      %375 = vmatprep.subr.mxu0 0.0
      %376 = vmatpush1.msra.mxu0 0.0
      %377 = vmatprep.subr.mxu0 0.0
      %378 = vmatpush1.msra.mxu0 0.0
      %379 = vmatprep.subr.mxu0 0.0
      %380 = vmatpush1.msra.mxu0 0.0
      %381 = vmatprep.subr.mxu0 0.0
      %382 = vmatpush1.msra.mxu0 0.0
      %383 = vmatprep.subr.mxu0 0.0
      %384 = vmatpush1.msra.mxu0 0.0
      %385 = vmatprep.subr.mxu0 0.0
      %386 = vmatpush1.msra.mxu0 0.0
      %387 = vmatprep.subr.mxu0 0.0
      %388 = vmatpush1.msra.mxu0 0.0
      %389 = vmatprep.subr.mxu0 0.0
      %390 = vmatpush1.msra.mxu0 0.0
      %391 = vmatprep.subr.mxu0 0.0
      %392 = vmatpush1.msra.mxu0 0.0
      %393 = vmatprep.subr.mxu0 0.0
      %394 = vmatpush1.msra.mxu0 0.0
      %395 = vmatprep.subr.mxu0 0.0
      %396 = vmatpush1.msra.mxu0 0.0
      %397 = vmatprep.subr.mxu0 0.0
      %398 = vmatpush1.msra.mxu0 0.0
      %399 = vmatprep.subr.mxu0 0.0
      %400 = vmatpush1.msra.mxu0 0.0
      %401 = vmatprep.subr.mxu0 0.0
      %402 = vmatpush1.msra.mxu0 0.0
      %403 = vmatprep.subr.mxu0 0.0
      %404 = vmatpush1.msra.mxu0 0.0
      %405 = vmatprep.subr.mxu0 0.0
      %406 = vmatpush1.msra.mxu0 0.0
      %407 = vmatprep.mubr.f32.mxu0 0.0
      %408 = vmatmul.mubr.f32.gmra.mrb[0].mxu0 %v341
      %v409 = vpop.f32.mrb[0].mxu0
      %v410 = vadd.f32 0.0, %v409
      %v411 = vpop.f32.mrb[0].mxu0
      %412 = vdwg.mxu0
      %v413 = vadd.f32 %v332, %v410
      %415 = vrot.lane.b32.xlu0 %v326, 32
      %v416 = vpop.permute.xlu0 %415
      %v417 = vsel %vm340, %v416, 0
      %419 = vmatprep.subr.mxu0 0.0
      %420 = vmatpush1.msra.mxu0 %v314
      %421 = vmatprep.subr.mxu0 0.0
      %422 = vmatpush1.msra.mxu0 %v315
      %423 = vmatprep.subr.mxu0 0.0
      %424 = vmatpush1.msra.mxu0 %v316
      %425 = vmatprep.subr.mxu0 0.0
      %426 = vmatpush1.msra.mxu0 %v317
      %427 = vmatprep.subr.mxu0 0.0
      %428 = vmatpush1.msra.mxu0 0.0
      %429 = vmatprep.subr.mxu0 0.0
      %430 = vmatpush1.msra.mxu0 0.0
      %431 = vmatprep.subr.mxu0 0.0
      %432 = vmatpush1.msra.mxu0 0.0
      %433 = vmatprep.subr.mxu0 0.0
      %434 = vmatpush1.msra.mxu0 0.0
      %435 = vmatprep.subr.mxu0 0.0
      %436 = vmatpush1.msra.mxu0 0.0
      %437 = vmatprep.subr.mxu0 0.0
      %438 = vmatpush1.msra.mxu0 0.0
      %439 = vmatprep.subr.mxu0 0.0
      %440 = vmatpush1.msra.mxu0 0.0
      %441 = vmatprep.subr.mxu0 0.0
      %442 = vmatpush1.msra.mxu0 0.0
      %443 = vmatprep.subr.mxu0 0.0
      %444 = vmatpush1.msra.mxu0 0.0
      %445 = vmatprep.subr.mxu0 0.0
      %446 = vmatpush1.msra.mxu0 0.0
      %447 = vmatprep.subr.mxu0 0.0
      %448 = vmatpush1.msra.mxu0 0.0
      %449 = vmatprep.subr.mxu0 0.0
      %450 = vmatpush1.msra.mxu0 0.0
      %451 = vmatprep.subr.mxu0 0.0
      %452 = vmatpush1.msra.mxu0 0.0
      %453 = vmatprep.subr.mxu0 0.0
      %454 = vmatpush1.msra.mxu0 0.0
      %455 = vmatprep.subr.mxu0 0.0
      %456 = vmatpush1.msra.mxu0 0.0
      %457 = vmatprep.subr.mxu0 0.0
      %458 = vmatpush1.msra.mxu0 0.0
      %459 = vmatprep.subr.mxu0 0.0
      %460 = vmatpush1.msra.mxu0 0.0
      %461 = vmatprep.subr.mxu0 0.0
      %462 = vmatpush1.msra.mxu0 0.0
      %463 = vmatprep.subr.mxu0 0.0
      %464 = vmatpush1.msra.mxu0 0.0
      %465 = vmatprep.subr.mxu0 0.0
      %466 = vmatpush1.msra.mxu0 0.0
      %467 = vmatprep.subr.mxu0 0.0
      %468 = vmatpush1.msra.mxu0 0.0
      %469 = vmatprep.subr.mxu0 0.0
      %470 = vmatpush1.msra.mxu0 0.0
      %471 = vmatprep.subr.mxu0 0.0
      %472 = vmatpush1.msra.mxu0 0.0
      %473 = vmatprep.subr.mxu0 0.0
      %474 = vmatpush1.msra.mxu0 0.0
      %475 = vmatprep.subr.mxu0 0.0
      %476 = vmatpush1.msra.mxu0 0.0
      %477 = vmatprep.subr.mxu0 0.0
      %478 = vmatpush1.msra.mxu0 0.0
      %479 = vmatprep.subr.mxu0 0.0
      %480 = vmatpush1.msra.mxu0 0.0
      %481 = vmatprep.subr.mxu0 0.0
      %482 = vmatpush1.msra.mxu0 0.0
      %483 = vmatprep.mubr.f32.mxu0 0.0
      %484 = vmatmul.mubr.f32.gmra.mrb[0].mxu0 %v417
      %v485 = vpop.f32.mrb[0].mxu0
      %v486 = vadd.f32 0.0, %v485
      %v487 = vpop.f32.mrb[0].mxu0
      %488 = vdwg.mxu0
      %v489 = vadd.f32 %v336, %v486
      %v490 = vxor.u32 %v413, 2147483648
      %v491 = vmul.f32 %v490, 1.442695
      %v492 = vpow.pop %v491
      %v493 = vadd.f32 %v492, 1.0
      %v494 = vrcp.pop %v493
      %v495 = vmul.f32 1.0, %v494
      %v496 = vtanh.pop %v413
      %v497 = vmul.f32 %v495, %v325
      %499 = vrot.lane.b32.xlu0 %v496, 64
      %v500 = vpop.permute.xlu0 %499
      %v502 = vmul.f32 %v495, %v500
      %504 = vrot.lane.b32.xlu0 %v502, 32
      %v505 = vpop.permute.xlu0 %504
      %v507 = vadd.f32 %v497, %v505
      %v508 = vtanh.pop %v507
      %510 = vrot.lane.b32.xlu0 %v508, 64
      %v511 = vpop.permute.xlu0 %510
      %v513 = vmul.f32 %v495, %v511
      %v514 = vxor.u32 %v489, 2147483648
      %v515 = vmul.f32 %v514, 1.442695
      %v516 = vpow.pop %v515
      %v517 = vadd.f32 %v516, 1.0
      %v518 = vrcp.pop %v517
      %v519 = vmul.f32 1.0, %v518
      %v520 = vtanh.pop %v489
      %v521 = vmul.f32 %v519, %v327
      %523 = vrot.lane.b32.xlu0 %v520, 64
      %v524 = vpop.permute.xlu0 %523
      %v526 = vmul.f32 %v519, %v524
      %528 = vrot.lane.b32.xlu0 %v526, 32
      %v529 = vpop.permute.xlu0 %528
      %v531 = vadd.f32 %v521, %v529
      %v532 = vtanh.pop %v531
      %534 = vrot.lane.b32.xlu0 %v532, 64
      %v535 = vpop.permute.xlu0 %534
      %v537 = vmul.f32 %v519, %v535
      %539 = vrot.lane.b32.xlu0 %v513, 32
      %v540 = vpop.permute.xlu0 %539
      %s542 = smul.u32 %s319, 8
      %s543 = scalar_lea.vmem [#allocation3], %s542
      %544 = vst.msk [vmem:[%s543] sm:$0xff] %vm340, %v540
      %546 = vrot.lane.b32.xlu0 %v537, 32
      %v547 = vpop.permute.xlu0 %546
      %s549 = smul.u32 %s328, 8
      %s550 = scalar_lea.vmem [#allocation4], %s549
      %551 = vst.msk [vmem:[%s550] sm:$0xff] %vm340, %v547
    $region126: #{seq2seq_forward.1} parent=1 // loop_footer
      %s323 = sadd.s32 1, %s319
    $region127: #{seq2seq_forward.1} parent=1 // loop_footer_branch
      %318 = sbr.rel target = $region123
    $region128: #{seq2seq_forward.1} parent=1 // loop_exit
      _
    %v552 = vld [vmem:[#allocation3] sm:$0xff]
    %v553 = vld [vmem:[#allocation3 + $0x8] sm:$0xff]
    %v554 = vld [vmem:[#allocation3 + $0x10] sm:$0xff]
    %v555 = vld [vmem:[#allocation3 + $0x18] sm:$0xff]
    %v556 = vld [vmem:[#allocation3 + $0x20] sm:$0xff]
    %v557 = vld [vmem:[#allocation3 + $0x28] sm:$0xff]
    %v558 = vld [vmem:[#allocation3 + $0x30] sm:$0xff]
    %v559 = vld [vmem:[#allocation3 + $0x38] sm:$0xff]
    %v560 = vld [vmem:[%s6] sm:$0xff]
    %v561 = vld [vmem:[%s6 + $0x8] sm:$0xff]
    %v562 = vld [vmem:[%s6 + $0x10] sm:$0xff]
    %v563 = vld [vmem:[%s6 + $0x18] sm:$0xff]
    %v564 = vld [vmem:[%s6 + $0x20] sm:$0xff]
    %v565 = vld [vmem:[%s6 + $0x28] sm:$0xff]
    %v566 = vld [vmem:[%s6 + $0x30] sm:$0xff]
    %v567 = vld [vmem:[%s6 + $0x38] sm:$0xff]
    %v568 = vld [vmem:[#allocation4] sm:$0xff]
    %v569 = vld [vmem:[#allocation4 + $0x8] sm:$0xff]
    %v570 = vld [vmem:[#allocation4 + $0x10] sm:$0xff]
    %v571 = vld [vmem:[#allocation4 + $0x18] sm:$0xff]
    %v572 = vld [vmem:[#allocation4 + $0x20] sm:$0xff]
    %v573 = vld [vmem:[#allocation4 + $0x28] sm:$0xff]
    %v574 = vld [vmem:[#allocation4 + $0x30] sm:$0xff]
    %v575 = vld [vmem:[#allocation4 + $0x38] sm:$0xff]
    %v576 = vld [vmem:[%s7] sm:$0xff]
    %v577 = vld [vmem:[%s7 + $0x8] sm:$0xff]
    %v578 = vld [vmem:[%s7 + $0x10] sm:$0xff]
    %v579 = vld [vmem:[%s7 + $0x18] sm:$0xff]
    %v580 = vld [vmem:[%s7 + $0x20] sm:$0xff]
    %v581 = vld [vmem:[%s7 + $0x28] sm:$0xff]
    %v582 = vld [vmem:[%s7 + $0x30] sm:$0xff]
    %v583 = vld [vmem:[%s7 + $0x38] sm:$0xff]
    %vm584 = vcmask 261120
    %v586 = vsel %vm584, %v568, 0
    %v589 = vsel %vm584, %v569, 0
    %v592 = vsel %vm584, %v570, 0
    %v595 = vsel %vm584, %v571, 0
    %v598 = vsel %vm584, %v572, 0
    %v601 = vsel %vm584, %v573, 0
    %v604 = vsel %vm584, %v574, 0
    %v607 = vsel %vm584, %v575, 0
    %609 = vmatprep.subr.mxu0 %v577
    %610 = vmatpush1.msra.mxu0 %v576
    %611 = vmatprep.subr.mxu0 %v579
    %612 = vmatpush1.msra.mxu0 %v578
    %613 = vmatprep.subr.mxu0 %v581
    %614 = vmatpush1.msra.mxu0 %v580
    %615 = vmatprep.subr.mxu0 %v583
    %616 = vmatpush1.msra.mxu0 %v582
    %617 = vmatprep.subr.mxu0 0.0
    %618 = vmatpush1.msra.mxu0 0.0
    %619 = vmatprep.subr.mxu0 0.0
    %620 = vmatpush1.msra.mxu0 0.0
    %621 = vmatprep.subr.mxu0 0.0
    %622 = vmatpush1.msra.mxu0 0.0
    %623 = vmatprep.subr.mxu0 0.0
    %624 = vmatpush1.msra.mxu0 0.0
    %625 = vmatprep.subr.mxu0 0.0
    %626 = vmatpush1.msra.mxu0 0.0
    %627 = vmatprep.subr.mxu0 0.0
    %628 = vmatpush1.msra.mxu0 0.0
    %629 = vmatprep.subr.mxu0 0.0
    %630 = vmatpush1.msra.mxu0 0.0
    %631 = vmatprep.subr.mxu0 0.0
    %632 = vmatpush1.msra.mxu0 0.0
    %633 = vmatprep.subr.mxu0 0.0
    %634 = vmatpush1.msra.mxu0 0.0
    %635 = vmatprep.subr.mxu0 0.0
    %636 = vmatpush1.msra.mxu0 0.0
    %637 = vmatprep.subr.mxu0 0.0
    %638 = vmatpush1.msra.mxu0 0.0
    %639 = vmatprep.subr.mxu0 0.0
    %640 = vmatpush1.msra.mxu0 0.0
    %641 = vmatprep.subr.mxu0 0.0
    %642 = vmatpush1.msra.mxu0 0.0
    %643 = vmatprep.subr.mxu0 0.0
    %644 = vmatpush1.msra.mxu0 0.0
    %645 = vmatprep.subr.mxu0 0.0
    %646 = vmatpush1.msra.mxu0 0.0
    %647 = vmatprep.subr.mxu0 0.0
    %648 = vmatpush1.msra.mxu0 0.0
    %649 = vmatprep.subr.mxu0 0.0
    %650 = vmatpush1.msra.mxu0 0.0
    %651 = vmatprep.subr.mxu0 0.0
    %652 = vmatpush1.msra.mxu0 0.0
    %653 = vmatprep.subr.mxu0 0.0
    %654 = vmatpush1.msra.mxu0 0.0
    %655 = vmatprep.subr.mxu0 0.0
    %656 = vmatpush1.msra.mxu0 0.0
    %657 = vmatprep.subr.mxu0 0.0
    %658 = vmatpush1.msra.mxu0 0.0
    %659 = vmatprep.subr.mxu0 0.0
    %660 = vmatpush1.msra.mxu0 0.0
    %661 = vmatprep.subr.mxu0 0.0
    %662 = vmatpush1.msra.mxu0 0.0
    %663 = vmatprep.subr.mxu0 0.0
    %664 = vmatpush1.msra.mxu0 0.0
    %665 = vmatprep.subr.mxu0 0.0
    %666 = vmatpush1.msra.mxu0 0.0
    %667 = vmatprep.subr.mxu0 0.0
    %668 = vmatpush1.msra.mxu0 0.0
    %669 = vmatprep.subr.mxu0 0.0
    %670 = vmatpush1.msra.mxu0 0.0
    %671 = vmatprep.subr.mxu0 0.0
    %672 = vmatpush1.msra.mxu0 0.0
    %673 = vmatprep.mubr.f32.mxu0 0.0
    %674 = vmatmul.mubr.f32.gmra.mrb[0].mxu0 %v586
    %v675 = vpop.f32.mrb[0].mxu0
    %v676 = vadd.f32 0.0, %v675
    %v677 = vpop.f32.mrb[0].mxu0
    %v678 = vadd.f32 0.0, %v677
    %679 = vmatprep.mubr.f32.mxu0 0.0
    %680 = vmatmul.mubr.f32.gmra.mrb[0].mxu0 %v589
    %v681 = vpop.f32.mrb[0].mxu0
    %v682 = vadd.f32 0.0, %v681
    %v683 = vpop.f32.mrb[0].mxu0
    %v684 = vadd.f32 0.0, %v683
    %685 = vmatprep.mubr.f32.mxu0 0.0
    %686 = vmatmul.mubr.f32.gmra.mrb[0].mxu0 %v592
    %v687 = vpop.f32.mrb[0].mxu0
    %v688 = vadd.f32 0.0, %v687
    %v689 = vpop.f32.mrb[0].mxu0
    %v690 = vadd.f32 0.0, %v689
    %691 = vmatprep.mubr.f32.mxu0 0.0
    %692 = vmatmul.mubr.f32.gmra.mrb[0].mxu0 %v595
    %v693 = vpop.f32.mrb[0].mxu0
    %v694 = vadd.f32 0.0, %v693
    %v695 = vpop.f32.mrb[0].mxu0
    %v696 = vadd.f32 0.0, %v695
    %697 = vmatprep.mubr.f32.mxu0 0.0
    %698 = vmatmul.mubr.f32.gmra.mrb[0].mxu0 %v598
    %v699 = vpop.f32.mrb[0].mxu0
    %v700 = vadd.f32 0.0, %v699
    %v701 = vpop.f32.mrb[0].mxu0
    %v702 = vadd.f32 0.0, %v701
    %703 = vmatprep.mubr.f32.mxu0 0.0
    %704 = vmatmul.mubr.f32.gmra.mrb[0].mxu0 %v601
    %v705 = vpop.f32.mrb[0].mxu0
    %v706 = vadd.f32 0.0, %v705
    %v707 = vpop.f32.mrb[0].mxu0
    %v708 = vadd.f32 0.0, %v707
    %709 = vmatprep.mubr.f32.mxu0 0.0
    %710 = vmatmul.mubr.f32.gmra.mrb[0].mxu0 %v604
    %v711 = vpop.f32.mrb[0].mxu0
    %v712 = vadd.f32 0.0, %v711
    %v713 = vpop.f32.mrb[0].mxu0
    %v714 = vadd.f32 0.0, %v713
    %715 = vmatprep.mubr.f32.mxu0 0.0
    %716 = vmatmul.mubr.f32.gmra.mrb[0].mxu0 %v607
    %v717 = vpop.f32.mrb[0].mxu0
    %v718 = vadd.f32 0.0, %v717
    %v719 = vpop.f32.mrb[0].mxu0
    %v720 = vadd.f32 0.0, %v719
    %721 = vdwg.mxu0
    %v723 = vsel %vm584, %v552, 0
    %v726 = vsel %vm584, %v553, 0
    %v729 = vsel %vm584, %v554, 0
    %v732 = vsel %vm584, %v555, 0
    %v735 = vsel %vm584, %v556, 0
    %v738 = vsel %vm584, %v557, 0
    %v741 = vsel %vm584, %v558, 0
    %v744 = vsel %vm584, %v559, 0
    %746 = vmatprep.subr.mxu0 %v561
    %747 = vmatpush1.msra.mxu0 %v560
    %748 = vmatprep.subr.mxu0 %v563
    %749 = vmatpush1.msra.mxu0 %v562
    %750 = vmatprep.subr.mxu0 %v565
    %751 = vmatpush1.msra.mxu0 %v564
    %752 = vmatprep.subr.mxu0 %v567
    %753 = vmatpush1.msra.mxu0 %v566
    %754 = vmatprep.subr.mxu0 0.0
    %755 = vmatpush1.msra.mxu0 0.0
    %756 = vmatprep.subr.mxu0 0.0
    %757 = vmatpush1.msra.mxu0 0.0
    %758 = vmatprep.subr.mxu0 0.0
    %759 = vmatpush1.msra.mxu0 0.0
    %760 = vmatprep.subr.mxu0 0.0
    %761 = vmatpush1.msra.mxu0 0.0
    %762 = vmatprep.subr.mxu0 0.0
    %763 = vmatpush1.msra.mxu0 0.0
    %764 = vmatprep.subr.mxu0 0.0
    %765 = vmatpush1.msra.mxu0 0.0
    %766 = vmatprep.subr.mxu0 0.0
    %767 = vmatpush1.msra.mxu0 0.0
    %768 = vmatprep.subr.mxu0 0.0
    %769 = vmatpush1.msra.mxu0 0.0
    %770 = vmatprep.subr.mxu0 0.0
    %771 = vmatpush1.msra.mxu0 0.0
    %772 = vmatprep.subr.mxu0 0.0
    %773 = vmatpush1.msra.mxu0 0.0
    %774 = vmatprep.subr.mxu0 0.0
    %775 = vmatpush1.msra.mxu0 0.0
    %776 = vmatprep.subr.mxu0 0.0
    %777 = vmatpush1.msra.mxu0 0.0
    %778 = vmatprep.subr.mxu0 0.0
    %779 = vmatpush1.msra.mxu0 0.0
    %780 = vmatprep.subr.mxu0 0.0
    %781 = vmatpush1.msra.mxu0 0.0
    %782 = vmatprep.subr.mxu0 0.0
    %783 = vmatpush1.msra.mxu0 0.0
    %784 = vmatprep.subr.mxu0 0.0
    %785 = vmatpush1.msra.mxu0 0.0
    %786 = vmatprep.subr.mxu0 0.0
    %787 = vmatpush1.msra.mxu0 0.0
    %788 = vmatprep.subr.mxu0 0.0
    %789 = vmatpush1.msra.mxu0 0.0
    %790 = vmatprep.subr.mxu0 0.0
    %791 = vmatpush1.msra.mxu0 0.0
    %792 = vmatprep.subr.mxu0 0.0
    %793 = vmatpush1.msra.mxu0 0.0
    %794 = vmatprep.subr.mxu0 0.0
    %795 = vmatpush1.msra.mxu0 0.0
    %796 = vmatprep.subr.mxu0 0.0
    %797 = vmatpush1.msra.mxu0 0.0
    %798 = vmatprep.subr.mxu0 0.0
    %799 = vmatpush1.msra.mxu0 0.0
    %800 = vmatprep.subr.mxu0 0.0
    %801 = vmatpush1.msra.mxu0 0.0
    %802 = vmatprep.subr.mxu0 0.0
    %803 = vmatpush1.msra.mxu0 0.0
    %804 = vmatprep.subr.mxu0 0.0
    %805 = vmatpush1.msra.mxu0 0.0
    %806 = vmatprep.subr.mxu0 0.0
    %807 = vmatpush1.msra.mxu0 0.0
    %808 = vmatprep.subr.mxu0 0.0
    %809 = vmatpush1.msra.mxu0 0.0
    %810 = vmatprep.mubr.f32.mxu0 0.0
    %811 = vmatmul.mubr.f32.gmra.mrb[0].mxu0 %v723
    %v812 = vpop.f32.mrb[0].mxu0
    %v813 = vadd.f32 %v676, %v812
    %v814 = vpop.f32.mrb[0].mxu0
    %v815 = vadd.f32 %v678, %v814
    %816 = vmatprep.mubr.f32.mxu0 0.0
    %817 = vmatmul.mubr.f32.gmra.mrb[0].mxu0 %v726
    %v818 = vpop.f32.mrb[0].mxu0
    %v819 = vadd.f32 %v682, %v818
    %v820 = vpop.f32.mrb[0].mxu0
    %v821 = vadd.f32 %v684, %v820
    %822 = vmatprep.mubr.f32.mxu0 0.0
    %823 = vmatmul.mubr.f32.gmra.mrb[0].mxu0 %v729
    %v824 = vpop.f32.mrb[0].mxu0
    %v825 = vadd.f32 %v688, %v824
    %v826 = vpop.f32.mrb[0].mxu0
    %v827 = vadd.f32 %v690, %v826
    %828 = vmatprep.mubr.f32.mxu0 0.0
    %829 = vmatmul.mubr.f32.gmra.mrb[0].mxu0 %v732
    %v830 = vpop.f32.mrb[0].mxu0
    %v831 = vadd.f32 %v694, %v830
    %v832 = vpop.f32.mrb[0].mxu0
    %v833 = vadd.f32 %v696, %v832
    %834 = vmatprep.mubr.f32.mxu0 0.0
    %835 = vmatmul.mubr.f32.gmra.mrb[0].mxu0 %v735
    %v836 = vpop.f32.mrb[0].mxu0
    %v837 = vadd.f32 %v700, %v836
    %v838 = vpop.f32.mrb[0].mxu0
    %v839 = vadd.f32 %v702, %v838
    %840 = vmatprep.mubr.f32.mxu0 0.0
    %841 = vmatmul.mubr.f32.gmra.mrb[0].mxu0 %v738
    %v842 = vpop.f32.mrb[0].mxu0
    %v843 = vadd.f32 %v706, %v842
    %v844 = vpop.f32.mrb[0].mxu0
    %v845 = vadd.f32 %v708, %v844
    %846 = vmatprep.mubr.f32.mxu0 0.0
    %847 = vmatmul.mubr.f32.gmra.mrb[0].mxu0 %v741
    %v848 = vpop.f32.mrb[0].mxu0
    %v849 = vadd.f32 %v712, %v848
    %v850 = vpop.f32.mrb[0].mxu0
    %v851 = vadd.f32 %v714, %v850
    %852 = vmatprep.mubr.f32.mxu0 0.0
    %853 = vmatmul.mubr.f32.gmra.mrb[0].mxu0 %v744
    %v854 = vpop.f32.mrb[0].mxu0
    %v855 = vadd.f32 %v718, %v854
    %v856 = vpop.f32.mrb[0].mxu0
    %v857 = vadd.f32 %v720, %v856
    %858 = vdwg.mxu0
    %v859 = vld [vmem:[%s10] sm:$0x3]
    %v861 = vlaneseq
    %v862 = vshrl.u32 %v861, 7
    %v863 = vsub.s32 0, %v862
    %v864 = vrot.slane %v859, %v863
    %v865 = vlaneseq
    %v866 = vshrl.u32 %v865, 7
    %v867 = vsub.s32 1, %v866
    %v868 = vrot.slane %v859, %v867
    %v871 = vadd.f32 %v813, %v864
    %v872 = vadd.f32 %v815, %v868
    %v873 = vadd.f32 %v819, %v864
    %v874 = vadd.f32 %v821, %v868
    %v875 = vadd.f32 %v825, %v864
    %v876 = vadd.f32 %v827, %v868
    %v877 = vadd.f32 %v831, %v864
    %v878 = vadd.f32 %v833, %v868
    %v879 = vadd.f32 %v837, %v864
    %v880 = vadd.f32 %v839, %v868
    %v881 = vadd.f32 %v843, %v864
    %v882 = vadd.f32 %v845, %v868
    %v883 = vadd.f32 %v849, %v864
    %v884 = vadd.f32 %v851, %v868
    %v885 = vadd.f32 %v855, %v864
    %v886 = vadd.f32 %v857, %v868
    %887 = vst [vmem:[#allocation2] sm:$0xff] %v871
    %888 = vst [vmem:[#allocation2 + $0x8] sm:$0xff] %v872
    %889 = vst [vmem:[#allocation2 + $0x10] sm:$0xff] %v873
    %890 = vst [vmem:[#allocation2 + $0x18] sm:$0xff] %v874
    %891 = vst [vmem:[#allocation2 + $0x20] sm:$0xff] %v875
    %892 = vst [vmem:[#allocation2 + $0x28] sm:$0xff] %v876
    %893 = vst [vmem:[#allocation2 + $0x30] sm:$0xff] %v877
    %894 = vst [vmem:[#allocation2 + $0x38] sm:$0xff] %v878
    %895 = vst [vmem:[#allocation2 + $0x40] sm:$0xff] %v879
    %896 = vst [vmem:[#allocation2 + $0x48] sm:$0xff] %v880
    %897 = vst [vmem:[#allocation2 + $0x50] sm:$0xff] %v881
    %898 = vst [vmem:[#allocation2 + $0x58] sm:$0xff] %v882
    %899 = vst [vmem:[#allocation2 + $0x60] sm:$0xff] %v883
    %900 = vst [vmem:[#allocation2 + $0x68] sm:$0xff] %v884
    %901 = vst [vmem:[#allocation2 + $0x70] sm:$0xff] %v885
    %902 = vst [vmem:[#allocation2 + $0x78] sm:$0xff] %v886
    %v903 = vld [vmem:[%s8] sm:$0xff]
    %v904 = vld [vmem:[%s8 + $0x8] sm:$0xff]
    %v905 = vld [vmem:[%s8 + $0x10] sm:$0xff]
    %v906 = vld [vmem:[%s8 + $0x18] sm:$0xff]
    %v907 = vld [vmem:[%s9] sm:$0xff]
    %v908 = vld [vmem:[%s9 + $0x8] sm:$0xff]
    %v909 = vld [vmem:[%s9 + $0x10] sm:$0xff]
    %v910 = vld [vmem:[%s9 + $0x18] sm:$0xff]
    loop: start=0, step=1, limit=8
    $region129: #{seq2seq_forward.1} parent=1 // loop_pre_header
      _
    $region130: #{seq2seq_forward.1} parent=1 // loop_header
      %s912 = sphi 0, %s916
      %p913 = scmp.ge.s32.totalorder %s912, 8
      %v917 = vphi 0.0, %v1105
      %v918 = vphi 0.0, %v1099
      %v919 = vphi 0.0, %v1129
      %v920 = vphi 0.0, %v1123
    $region131: #{seq2seq_forward.1} parent=1 // loop_header_branch
      %915 = sbr.rel (%p913) target = $region135
    $region132: #{seq2seq_forward.1} parent=1 // loop_body
      %s921 = ssub.s32 7, %s912
      %s922 = smul.u32 %s912, 2
      %s923 = smul.addr %s922, 8
      %s924 = scalar_lea.vmem [#allocation2], %s923
      %v925 = vld [vmem:[%s924] sm:$0xff]
      %s926 = smul.u32 %s921, 2
      %s927 = smul.addr %s926, 8
      %s928 = scalar_lea.vmem [#allocation2], %s927
      %v929 = vld [vmem:[%s928 + $0x8] sm:$0xff]
      %931 = vrot.lane.b32.xlu0 %v917, 32
      %v932 = vpop.permute.xlu0 %931
      %v933 = vsel %vm584, %v932, 0
      %935 = vmatprep.subr.mxu0 0.0
      %936 = vmatpush1.msra.mxu0 %v903
      %937 = vmatprep.subr.mxu0 0.0
      %938 = vmatpush1.msra.mxu0 %v904
      %939 = vmatprep.subr.mxu0 0.0
      %940 = vmatpush1.msra.mxu0 %v905
      %941 = vmatprep.subr.mxu0 0.0
      %942 = vmatpush1.msra.mxu0 %v906
      %943 = vmatprep.subr.mxu0 0.0
      %944 = vmatpush1.msra.mxu0 0.0
      %945 = vmatprep.subr.mxu0 0.0
      %946 = vmatpush1.msra.mxu0 0.0
      %947 = vmatprep.subr.mxu0 0.0
      %948 = vmatpush1.msra.mxu0 0.0
      %949 = vmatprep.subr.mxu0 0.0
      %950 = vmatpush1.msra.mxu0 0.0
      %951 = vmatprep.subr.mxu0 0.0
      %952 = vmatpush1.msra.mxu0 0.0
      %953 = vmatprep.subr.mxu0 0.0
      %954 = vmatpush1.msra.mxu0 0.0
      %955 = vmatprep.subr.mxu0 0.0
      %956 = vmatpush1.msra.mxu0 0.0
      %957 = vmatprep.subr.mxu0 0.0
      %958 = vmatpush1.msra.mxu0 0.0
      %959 = vmatprep.subr.mxu0 0.0
      %960 = vmatpush1.msra.mxu0 0.0
      %961 = vmatprep.subr.mxu0 0.0
      %962 = vmatpush1.msra.mxu0 0.0
      %963 = vmatprep.subr.mxu0 0.0
      %964 = vmatpush1.msra.mxu0 0.0
      %965 = vmatprep.subr.mxu0 0.0
      %966 = vmatpush1.msra.mxu0 0.0
      %967 = vmatprep.subr.mxu0 0.0
      %968 = vmatpush1.msra.mxu0 0.0
      %969 = vmatprep.subr.mxu0 0.0
      %970 = vmatpush1.msra.mxu0 0.0
      %971 = vmatprep.subr.mxu0 0.0
      %972 = vmatpush1.msra.mxu0 0.0
      %973 = vmatprep.subr.mxu0 0.0
      %974 = vmatpush1.msra.mxu0 0.0
      %975 = vmatprep.subr.mxu0 0.0
      %976 = vmatpush1.msra.mxu0 0.0
      %977 = vmatprep.subr.mxu0 0.0
      %978 = vmatpush1.msra.mxu0 0.0
      %979 = vmatprep.subr.mxu0 0.0
      %980 = vmatpush1.msra.mxu0 0.0
      %981 = vmatprep.subr.mxu0 0.0
      %982 = vmatpush1.msra.mxu0 0.0
      %983 = vmatprep.subr.mxu0 0.0
      %984 = vmatpush1.msra.mxu0 0.0
      %985 = vmatprep.subr.mxu0 0.0
      %986 = vmatpush1.msra.mxu0 0.0
      %987 = vmatprep.subr.mxu0 0.0
      %988 = vmatpush1.msra.mxu0 0.0
      %989 = vmatprep.subr.mxu0 0.0
      %990 = vmatpush1.msra.mxu0 0.0
      %991 = vmatprep.subr.mxu0 0.0
      %992 = vmatpush1.msra.mxu0 0.0
      %993 = vmatprep.subr.mxu0 0.0
      %994 = vmatpush1.msra.mxu0 0.0
      %995 = vmatprep.subr.mxu0 0.0
      %996 = vmatpush1.msra.mxu0 0.0
      %997 = vmatprep.subr.mxu0 0.0
      %998 = vmatpush1.msra.mxu0 0.0
      %999 = vmatprep.mubr.f32.mxu0 0.0
      %1000 = vmatmul.mubr.f32.gmra.mrb[0].mxu0 %v933
      %v1001 = vpop.f32.mrb[0].mxu0
      %v1002 = vadd.f32 0.0, %v1001
      %v1003 = vpop.f32.mrb[0].mxu0
      %1004 = vdwg.mxu0
      %v1005 = vadd.f32 %v925, %v1002
      %1007 = vrot.lane.b32.xlu0 %v919, 32
      %v1008 = vpop.permute.xlu0 %1007
      %v1009 = vsel %vm584, %v1008, 0
      %1011 = vmatprep.subr.mxu0 0.0
      %1012 = vmatpush1.msra.mxu0 %v907
      %1013 = vmatprep.subr.mxu0 0.0
      %1014 = vmatpush1.msra.mxu0 %v908
      %1015 = vmatprep.subr.mxu0 0.0
      %1016 = vmatpush1.msra.mxu0 %v909
      %1017 = vmatprep.subr.mxu0 0.0
      %1018 = vmatpush1.msra.mxu0 %v910
      %1019 = vmatprep.subr.mxu0 0.0
      %1020 = vmatpush1.msra.mxu0 0.0
      %1021 = vmatprep.subr.mxu0 0.0
      %1022 = vmatpush1.msra.mxu0 0.0
      %1023 = vmatprep.subr.mxu0 0.0
      %1024 = vmatpush1.msra.mxu0 0.0
      %1025 = vmatprep.subr.mxu0 0.0
      %1026 = vmatpush1.msra.mxu0 0.0
      %1027 = vmatprep.subr.mxu0 0.0
      %1028 = vmatpush1.msra.mxu0 0.0
      %1029 = vmatprep.subr.mxu0 0.0
      %1030 = vmatpush1.msra.mxu0 0.0
      %1031 = vmatprep.subr.mxu0 0.0
      %1032 = vmatpush1.msra.mxu0 0.0
      %1033 = vmatprep.subr.mxu0 0.0
      %1034 = vmatpush1.msra.mxu0 0.0
      %1035 = vmatprep.subr.mxu0 0.0
      %1036 = vmatpush1.msra.mxu0 0.0
      %1037 = vmatprep.subr.mxu0 0.0
      %1038 = vmatpush1.msra.mxu0 0.0
      %1039 = vmatprep.subr.mxu0 0.0
      %1040 = vmatpush1.msra.mxu0 0.0
      %1041 = vmatprep.subr.mxu0 0.0
      %1042 = vmatpush1.msra.mxu0 0.0
      %1043 = vmatprep.subr.mxu0 0.0
      %1044 = vmatpush1.msra.mxu0 0.0
      %1045 = vmatprep.subr.mxu0 0.0
      %1046 = vmatpush1.msra.mxu0 0.0
      %1047 = vmatprep.subr.mxu0 0.0
      %1048 = vmatpush1.msra.mxu0 0.0
      %1049 = vmatprep.subr.mxu0 0.0
      %1050 = vmatpush1.msra.mxu0 0.0
      %1051 = vmatprep.subr.mxu0 0.0
      %1052 = vmatpush1.msra.mxu0 0.0
      %1053 = vmatprep.subr.mxu0 0.0
      %1054 = vmatpush1.msra.mxu0 0.0
      %1055 = vmatprep.subr.mxu0 0.0
      %1056 = vmatpush1.msra.mxu0 0.0
      %1057 = vmatprep.subr.mxu0 0.0
      %1058 = vmatpush1.msra.mxu0 0.0
      %1059 = vmatprep.subr.mxu0 0.0
      %1060 = vmatpush1.msra.mxu0 0.0
      %1061 = vmatprep.subr.mxu0 0.0
      %1062 = vmatpush1.msra.mxu0 0.0
      %1063 = vmatprep.subr.mxu0 0.0
      %1064 = vmatpush1.msra.mxu0 0.0
      %1065 = vmatprep.subr.mxu0 0.0
      %1066 = vmatpush1.msra.mxu0 0.0
      %1067 = vmatprep.subr.mxu0 0.0
      %1068 = vmatpush1.msra.mxu0 0.0
      %1069 = vmatprep.subr.mxu0 0.0
      %1070 = vmatpush1.msra.mxu0 0.0
      %1071 = vmatprep.subr.mxu0 0.0
      %1072 = vmatpush1.msra.mxu0 0.0
      %1073 = vmatprep.subr.mxu0 0.0
      %1074 = vmatpush1.msra.mxu0 0.0
      %1075 = vmatprep.mubr.f32.mxu0 0.0
      %1076 = vmatmul.mubr.f32.gmra.mrb[0].mxu0 %v1009
      %v1077 = vpop.f32.mrb[0].mxu0
      %v1078 = vadd.f32 0.0, %v1077
      %v1079 = vpop.f32.mrb[0].mxu0
      %1080 = vdwg.mxu0
      %v1081 = vadd.f32 %v929, %v1078
      %v1082 = vxor.u32 %v1005, 2147483648
      %v1083 = vmul.f32 %v1082, 1.442695
      %v1084 = vpow.pop %v1083
      %v1085 = vadd.f32 %v1084, 1.0
      %v1086 = vrcp.pop %v1085
      %v1087 = vmul.f32 1.0, %v1086
      %v1088 = vtanh.pop %v1005
      %v1089 = vmul.f32 %v1087, %v918
      %1091 = vrot.lane.b32.xlu0 %v1088, 64
      %v1092 = vpop.permute.xlu0 %1091
      %v1094 = vmul.f32 %v1087, %v1092
      %1096 = vrot.lane.b32.xlu0 %v1094, 32
      %v1097 = vpop.permute.xlu0 %1096
      %v1099 = vadd.f32 %v1089, %v1097
      %v1100 = vtanh.pop %v1099
      %1102 = vrot.lane.b32.xlu0 %v1100, 64
      %v1103 = vpop.permute.xlu0 %1102
      %v1105 = vmul.f32 %v1087, %v1103
      %v1106 = vxor.u32 %v1081, 2147483648
      %v1107 = vmul.f32 %v1106, 1.442695
      %v1108 = vpow.pop %v1107
      %v1109 = vadd.f32 %v1108, 1.0
      %v1110 = vrcp.pop %v1109
      %v1111 = vmul.f32 1.0, %v1110
      %v1112 = vtanh.pop %v1081
      %v1113 = vmul.f32 %v1111, %v920
      %1115 = vrot.lane.b32.xlu0 %v1112, 64
      %v1116 = vpop.permute.xlu0 %1115
      %v1118 = vmul.f32 %v1111, %v1116
      %1120 = vrot.lane.b32.xlu0 %v1118, 32
      %v1121 = vpop.permute.xlu0 %1120
      %v1123 = vadd.f32 %v1113, %v1121
      %v1124 = vtanh.pop %v1123
      %1126 = vrot.lane.b32.xlu0 %v1124, 64
      %v1127 = vpop.permute.xlu0 %1126
      %v1129 = vmul.f32 %v1111, %v1127
      %1131 = vrot.lane.b32.xlu0 %v1105, 32
      %v1132 = vpop.permute.xlu0 %1131
      %s1134 = smul.u32 %s912, 8
      %s1135 = scalar_lea.vmem [#allocation5], %s1134
      %1136 = vst.msk [vmem:[%s1135] sm:$0xff] %vm584, %v1132
      %1138 = vrot.lane.b32.xlu0 %v1129, 32
      %v1139 = vpop.permute.xlu0 %1138
      %s1141 = smul.u32 %s921, 8
      %s1142 = scalar_lea.vmem [#allocation6], %s1141
      %1143 = vst.msk [vmem:[%s1142] sm:$0xff] %vm584, %v1139
    $region133: #{seq2seq_forward.1} parent=1 // loop_footer
      %s916 = sadd.s32 1, %s912
    $region134: #{seq2seq_forward.1} parent=1 // loop_footer_branch
      %911 = sbr.rel target = $region130
    $region135: #{seq2seq_forward.1} parent=1 // loop_exit
      _
    %v1144 = vld [vmem:[#allocation5] sm:$0xff]
    %v1145 = vld [vmem:[#allocation5 + $0x8] sm:$0xff]
    %v1146 = vld [vmem:[#allocation5 + $0x10] sm:$0xff]
    %v1147 = vld [vmem:[#allocation5 + $0x18] sm:$0xff]
    %v1148 = vld [vmem:[#allocation5 + $0x20] sm:$0xff]
    %v1149 = vld [vmem:[#allocation5 + $0x28] sm:$0xff]
    %v1150 = vld [vmem:[#allocation5 + $0x30] sm:$0xff]
    %v1151 = vld [vmem:[#allocation5 + $0x38] sm:$0xff]
    %v1152 = vld [vmem:[#allocation6] sm:$0xff]
    %v1153 = vld [vmem:[#allocation6 + $0x8] sm:$0xff]
    %v1154 = vld [vmem:[#allocation6 + $0x10] sm:$0xff]
    %v1155 = vld [vmem:[#allocation6 + $0x18] sm:$0xff]
    %v1156 = vld [vmem:[#allocation6 + $0x20] sm:$0xff]
    %v1157 = vld [vmem:[#allocation6 + $0x28] sm:$0xff]
    %v1158 = vld [vmem:[#allocation6 + $0x30] sm:$0xff]
    %v1159 = vld [vmem:[#allocation6 + $0x38] sm:$0xff]
    %v1160 = vld [vmem:[%s12] sm:$0xff]
    %v1161 = vld [vmem:[%s12 + $0x8] sm:$0xff]
    %v1162 = vld [vmem:[%s12 + $0x10] sm:$0xff]
    %v1163 = vld [vmem:[%s12 + $0x18] sm:$0xff]
    %v1164 = vld [vmem:[%s13] sm:$0xff]
    %v1165 = vld [vmem:[%s13 + $0x8] sm:$0xff]
    %v1166 = vld [vmem:[%s13 + $0x10] sm:$0xff]
    %v1167 = vld [vmem:[%s13 + $0x18] sm:$0xff]
    %v1169 = vsel %vm584, %v1152, 0
    %v1172 = vsel %vm584, %v1153, 0
    %v1175 = vsel %vm584, %v1154, 0
    %v1178 = vsel %vm584, %v1155, 0
    %v1181 = vsel %vm584, %v1156, 0
    %v1184 = vsel %vm584, %v1157, 0
    %v1187 = vsel %vm584, %v1158, 0
    %v1190 = vsel %vm584, %v1159, 0
    %1192 = vmatprep.subr.mxu0 0.0
    %1193 = vmatpush1.msra.mxu0 %v1164
    %1194 = vmatprep.subr.mxu0 0.0
    %1195 = vmatpush1.msra.mxu0 %v1165
    %1196 = vmatprep.subr.mxu0 0.0
    %1197 = vmatpush1.msra.mxu0 %v1166
    %1198 = vmatprep.subr.mxu0 0.0
    %1199 = vmatpush1.msra.mxu0 %v1167
    %1200 = vmatprep.subr.mxu0 0.0
    %1201 = vmatpush1.msra.mxu0 0.0
    %1202 = vmatprep.subr.mxu0 0.0
    %1203 = vmatpush1.msra.mxu0 0.0
    %1204 = vmatprep.subr.mxu0 0.0
    %1205 = vmatpush1.msra.mxu0 0.0
    %1206 = vmatprep.subr.mxu0 0.0
    %1207 = vmatpush1.msra.mxu0 0.0
    %1208 = vmatprep.subr.mxu0 0.0
    %1209 = vmatpush1.msra.mxu0 0.0
    %1210 = vmatprep.subr.mxu0 0.0
    %1211 = vmatpush1.msra.mxu0 0.0
    %1212 = vmatprep.subr.mxu0 0.0
    %1213 = vmatpush1.msra.mxu0 0.0
    %1214 = vmatprep.subr.mxu0 0.0
    %1215 = vmatpush1.msra.mxu0 0.0
    %1216 = vmatprep.subr.mxu0 0.0
    %1217 = vmatpush1.msra.mxu0 0.0
    %1218 = vmatprep.subr.mxu0 0.0
    %1219 = vmatpush1.msra.mxu0 0.0
    %1220 = vmatprep.subr.mxu0 0.0
    %1221 = vmatpush1.msra.mxu0 0.0
    %1222 = vmatprep.subr.mxu0 0.0
    %1223 = vmatpush1.msra.mxu0 0.0
    %1224 = vmatprep.subr.mxu0 0.0
    %1225 = vmatpush1.msra.mxu0 0.0
    %1226 = vmatprep.subr.mxu0 0.0
    %1227 = vmatpush1.msra.mxu0 0.0
    %1228 = vmatprep.subr.mxu0 0.0
    %1229 = vmatpush1.msra.mxu0 0.0
    %1230 = vmatprep.subr.mxu0 0.0
    %1231 = vmatpush1.msra.mxu0 0.0
    %1232 = vmatprep.subr.mxu0 0.0
    %1233 = vmatpush1.msra.mxu0 0.0
    %1234 = vmatprep.subr.mxu0 0.0
    %1235 = vmatpush1.msra.mxu0 0.0
    %1236 = vmatprep.subr.mxu0 0.0
    %1237 = vmatpush1.msra.mxu0 0.0
    %1238 = vmatprep.subr.mxu0 0.0
    %1239 = vmatpush1.msra.mxu0 0.0
    %1240 = vmatprep.subr.mxu0 0.0
    %1241 = vmatpush1.msra.mxu0 0.0
    %1242 = vmatprep.subr.mxu0 0.0
    %1243 = vmatpush1.msra.mxu0 0.0
    %1244 = vmatprep.subr.mxu0 0.0
    %1245 = vmatpush1.msra.mxu0 0.0
    %1246 = vmatprep.subr.mxu0 0.0
    %1247 = vmatpush1.msra.mxu0 0.0
    %1248 = vmatprep.subr.mxu0 0.0
    %1249 = vmatpush1.msra.mxu0 0.0
    %1250 = vmatprep.subr.mxu0 0.0
    %1251 = vmatpush1.msra.mxu0 0.0
    %1252 = vmatprep.subr.mxu0 0.0
    %1253 = vmatpush1.msra.mxu0 0.0
    %1254 = vmatprep.subr.mxu0 0.0
    %1255 = vmatpush1.msra.mxu0 0.0
    %1256 = vmatprep.mubr.f32.mxu0 0.0
    %1257 = vmatmul.mubr.f32.gmra.mrb[0].mxu0 %v1169
    %v1258 = vpop.f32.mrb[0].mxu0
    %v1259 = vadd.f32 0.0, %v1258
    %v1260 = vpop.f32.mrb[0].mxu0
    %1261 = vmatprep.mubr.f32.mxu0 0.0
    %1262 = vmatmul.mubr.f32.gmra.mrb[0].mxu0 %v1172
    %v1263 = vpop.f32.mrb[0].mxu0
    %v1264 = vadd.f32 0.0, %v1263
    %v1265 = vpop.f32.mrb[0].mxu0
    %1266 = vmatprep.mubr.f32.mxu0 0.0
    %1267 = vmatmul.mubr.f32.gmra.mrb[0].mxu0 %v1175
    %v1268 = vpop.f32.mrb[0].mxu0
    %v1269 = vadd.f32 0.0, %v1268
    %v1270 = vpop.f32.mrb[0].mxu0
    %1271 = vmatprep.mubr.f32.mxu0 0.0
    %1272 = vmatmul.mubr.f32.gmra.mrb[0].mxu0 %v1178
    %v1273 = vpop.f32.mrb[0].mxu0
    %v1274 = vadd.f32 0.0, %v1273
    %v1275 = vpop.f32.mrb[0].mxu0
    %1276 = vmatprep.mubr.f32.mxu0 0.0
    %1277 = vmatmul.mubr.f32.gmra.mrb[0].mxu0 %v1181
    %v1278 = vpop.f32.mrb[0].mxu0
    %v1279 = vadd.f32 0.0, %v1278
    %v1280 = vpop.f32.mrb[0].mxu0
    %1281 = vmatprep.mubr.f32.mxu0 0.0
    %1282 = vmatmul.mubr.f32.gmra.mrb[0].mxu0 %v1184
    %v1283 = vpop.f32.mrb[0].mxu0
    %v1284 = vadd.f32 0.0, %v1283
    %v1285 = vpop.f32.mrb[0].mxu0
    %1286 = vmatprep.mubr.f32.mxu0 0.0
    %1287 = vmatmul.mubr.f32.gmra.mrb[0].mxu0 %v1187
    %v1288 = vpop.f32.mrb[0].mxu0
    %v1289 = vadd.f32 0.0, %v1288
    %v1290 = vpop.f32.mrb[0].mxu0
    %1291 = vmatprep.mubr.f32.mxu0 0.0
    %1292 = vmatmul.mubr.f32.gmra.mrb[0].mxu0 %v1190
    %v1293 = vpop.f32.mrb[0].mxu0
    %v1294 = vadd.f32 0.0, %v1293
    %v1295 = vpop.f32.mrb[0].mxu0
    %1296 = vdwg.mxu0
    %v1298 = vsel %vm584, %v1144, 0
    %v1301 = vsel %vm584, %v1145, 0
    %v1304 = vsel %vm584, %v1146, 0
    %v1307 = vsel %vm584, %v1147, 0
    %v1310 = vsel %vm584, %v1148, 0
    %v1313 = vsel %vm584, %v1149, 0
    %v1316 = vsel %vm584, %v1150, 0
    %v1319 = vsel %vm584, %v1151, 0
    %1321 = vmatprep.subr.mxu0 0.0
    %1322 = vmatpush1.msra.mxu0 %v1160
    %1323 = vmatprep.subr.mxu0 0.0
    %1324 = vmatpush1.msra.mxu0 %v1161
    %1325 = vmatprep.subr.mxu0 0.0
    %1326 = vmatpush1.msra.mxu0 %v1162
    %1327 = vmatprep.subr.mxu0 0.0
    %1328 = vmatpush1.msra.mxu0 %v1163
    %1329 = vmatprep.subr.mxu0 0.0
    %1330 = vmatpush1.msra.mxu0 0.0
    %1331 = vmatprep.subr.mxu0 0.0
    %1332 = vmatpush1.msra.mxu0 0.0
    %1333 = vmatprep.subr.mxu0 0.0
    %1334 = vmatpush1.msra.mxu0 0.0
    %1335 = vmatprep.subr.mxu0 0.0
    %1336 = vmatpush1.msra.mxu0 0.0
    %1337 = vmatprep.subr.mxu0 0.0
    %1338 = vmatpush1.msra.mxu0 0.0
    %1339 = vmatprep.subr.mxu0 0.0
    %1340 = vmatpush1.msra.mxu0 0.0
    %1341 = vmatprep.subr.mxu0 0.0
    %1342 = vmatpush1.msra.mxu0 0.0
    %1343 = vmatprep.subr.mxu0 0.0
    %1344 = vmatpush1.msra.mxu0 0.0
    %1345 = vmatprep.subr.mxu0 0.0
    %1346 = vmatpush1.msra.mxu0 0.0
    %1347 = vmatprep.subr.mxu0 0.0
    %1348 = vmatpush1.msra.mxu0 0.0
    %1349 = vmatprep.subr.mxu0 0.0
    %1350 = vmatpush1.msra.mxu0 0.0
    %1351 = vmatprep.subr.mxu0 0.0
    %1352 = vmatpush1.msra.mxu0 0.0
    %1353 = vmatprep.subr.mxu0 0.0
    %1354 = vmatpush1.msra.mxu0 0.0
    %1355 = vmatprep.subr.mxu0 0.0
    %1356 = vmatpush1.msra.mxu0 0.0
    %1357 = vmatprep.subr.mxu0 0.0
    %1358 = vmatpush1.msra.mxu0 0.0
    %1359 = vmatprep.subr.mxu0 0.0
    %1360 = vmatpush1.msra.mxu0 0.0
    %1361 = vmatprep.subr.mxu0 0.0
    %1362 = vmatpush1.msra.mxu0 0.0
    %1363 = vmatprep.subr.mxu0 0.0
    %1364 = vmatpush1.msra.mxu0 0.0
    %1365 = vmatprep.subr.mxu0 0.0
    %1366 = vmatpush1.msra.mxu0 0.0
    %1367 = vmatprep.subr.mxu0 0.0
    %1368 = vmatpush1.msra.mxu0 0.0
    %1369 = vmatprep.subr.mxu0 0.0
    %1370 = vmatpush1.msra.mxu0 0.0
    %1371 = vmatprep.subr.mxu0 0.0
    %1372 = vmatpush1.msra.mxu0 0.0
    %1373 = vmatprep.subr.mxu0 0.0
    %1374 = vmatpush1.msra.mxu0 0.0
    %1375 = vmatprep.subr.mxu0 0.0
    %1376 = vmatpush1.msra.mxu0 0.0
    %1377 = vmatprep.subr.mxu0 0.0
    %1378 = vmatpush1.msra.mxu0 0.0
    %1379 = vmatprep.subr.mxu0 0.0
    %1380 = vmatpush1.msra.mxu0 0.0
    %1381 = vmatprep.subr.mxu0 0.0
    %1382 = vmatpush1.msra.mxu0 0.0
    %1383 = vmatprep.subr.mxu0 0.0
    %1384 = vmatpush1.msra.mxu0 0.0
    %1385 = vmatprep.mubr.f32.mxu0 0.0
    %1386 = vmatmul.mubr.f32.gmra.mrb[0].mxu0 %v1298
    %v1387 = vpop.f32.mrb[0].mxu0
    %v1388 = vadd.f32 %v1259, %v1387
    %v1389 = vpop.f32.mrb[0].mxu0
    %1390 = vmatprep.mubr.f32.mxu0 0.0
    %1391 = vmatmul.mubr.f32.gmra.mrb[0].mxu0 %v1301
    %v1392 = vpop.f32.mrb[0].mxu0
    %v1393 = vadd.f32 %v1264, %v1392
    %v1394 = vpop.f32.mrb[0].mxu0
    %1395 = vmatprep.mubr.f32.mxu0 0.0
    %1396 = vmatmul.mubr.f32.gmra.mrb[0].mxu0 %v1304
    %v1397 = vpop.f32.mrb[0].mxu0
    %v1398 = vadd.f32 %v1269, %v1397
    %v1399 = vpop.f32.mrb[0].mxu0
    %1400 = vmatprep.mubr.f32.mxu0 0.0
    %1401 = vmatmul.mubr.f32.gmra.mrb[0].mxu0 %v1307
    %v1402 = vpop.f32.mrb[0].mxu0
    %v1403 = vadd.f32 %v1274, %v1402
    %v1404 = vpop.f32.mrb[0].mxu0
    %1405 = vmatprep.mubr.f32.mxu0 0.0
    %1406 = vmatmul.mubr.f32.gmra.mrb[0].mxu0 %v1310
    %v1407 = vpop.f32.mrb[0].mxu0
    %v1408 = vadd.f32 %v1279, %v1407
    %v1409 = vpop.f32.mrb[0].mxu0
    %1410 = vmatprep.mubr.f32.mxu0 0.0
    %1411 = vmatmul.mubr.f32.gmra.mrb[0].mxu0 %v1313
    %v1412 = vpop.f32.mrb[0].mxu0
    %v1413 = vadd.f32 %v1284, %v1412
    %v1414 = vpop.f32.mrb[0].mxu0
    %1415 = vmatprep.mubr.f32.mxu0 0.0
    %1416 = vmatmul.mubr.f32.gmra.mrb[0].mxu0 %v1316
    %v1417 = vpop.f32.mrb[0].mxu0
    %v1418 = vadd.f32 %v1289, %v1417
    %v1419 = vpop.f32.mrb[0].mxu0
    %1420 = vmatprep.mubr.f32.mxu0 0.0
    %1421 = vmatmul.mubr.f32.gmra.mrb[0].mxu0 %v1319
    %v1422 = vpop.f32.mrb[0].mxu0
    %v1423 = vadd.f32 %v1294, %v1422
    %v1424 = vpop.f32.mrb[0].mxu0
    %1425 = vdwg.mxu0
    %v1426 = vld [vmem:[#allocation8] sm:$0x1]
    %v1428 = vlaneseq
    %v1429 = vshrl.u32 %v1428, 7
    %v1430 = vsub.s32 0, %v1429
    %v1431 = vrot.slane %v1426, %v1430
    %v1433 = vadd.f32 %v1388, %v1431
    %v1434 = vadd.f32 %v1393, %v1431
    %v1435 = vadd.f32 %v1398, %v1431
    %v1436 = vadd.f32 %v1403, %v1431
    %v1437 = vadd.f32 %v1408, %v1431
    %v1438 = vadd.f32 %v1413, %v1431
    %v1439 = vadd.f32 %v1418, %v1431
    %v1440 = vadd.f32 %v1423, %v1431
    %v1441 = vld [vmem:[%s11] sm:$0xff]
    %v1442 = vld [vmem:[%s11 + $0x8] sm:$0xff]
    %v1443 = vld [vmem:[%s11 + $0x10] sm:$0xff]
    %v1444 = vld [vmem:[%s11 + $0x18] sm:$0xff]
    %v1445 = vld [vmem:[#allocation10] sm:$0x1]
    %v1447 = vlaneseq
    %v1448 = vshrl.u32 %v1447, 7
    %v1449 = vsub.s32 0, %v1448
    %v1450 = vrot.slane %v1445, %v1449
    %v1452 = vld [vmem:[%s16] sm:$0xff]
    %v1453 = vld [vmem:[%s16 + $0x8] sm:$0xff]
    %v1454 = vld [vmem:[%s16 + $0x10] sm:$0xff]
    %v1455 = vld [vmem:[%s16 + $0x18] sm:$0xff]
    %v1456 = vld [vmem:[%s17] sm:$0xff]
    %v1457 = vld [vmem:[%s17 + $0x8] sm:$0xff]
    %v1458 = vld [vmem:[%s17 + $0x10] sm:$0xff]
    %v1459 = vld [vmem:[%s17 + $0x18] sm:$0xff]
    %v1460 = vld [vmem:[#allocation12] sm:$0xff]
    %v1461 = vld [vmem:[#allocation12 + $0x8] sm:$0xff]
    %v1462 = vld [vmem:[%s19] sm:$0xff]
    %v1463 = vld [vmem:[%s19 + $0x8] sm:$0xff]
    %v1464 = vld [vmem:[%s19 + $0x10] sm:$0xff]
    %v1465 = vld [vmem:[%s19 + $0x18] sm:$0xff]
    %v1466 = vld [vmem:[#allocation13] sm:$0x1]
    %v1468 = vlaneseq
    %v1469 = vshrl.u32 %v1468, 7
    %v1470 = vsub.s32 0, %v1469
    %v1471 = vrot.slane %v1466, %v1470
    %v1473 = vld [vmem:[%s21] sm:$0xff]
    %v1474 = vld [vmem:[%s21 + $0x8] sm:$0xff]
    %v1475 = vld [vmem:[%s21 + $0x10] sm:$0xff]
    %v1476 = vld [vmem:[%s21 + $0x18] sm:$0xff]
    %v1477 = vld [vmem:[%s22] sm:$0xff]
    %v1478 = vld [vmem:[%s22 + $0x8] sm:$0xff]
    %v1479 = vld [vmem:[%s22 + $0x10] sm:$0xff]
    %v1480 = vld [vmem:[%s22 + $0x18] sm:$0xff]
    %v1481 = vld [vmem:[%s23] sm:$0x1]
    %v1483 = vlaneseq
    %v1484 = vshrl.u32 %v1483, 7
    %v1485 = vsub.s32 0, %v1484
    %v1486 = vrot.slane %v1481, %v1485
    %v1488 = vxor.u32 %v1471, 2147483648
    %v1489 = vmul.f32 %v1488, 1.442695
    %v1490 = vpow.pop %v1489
    %v1491 = vadd.f32 %v1490, 1.0
    %v1492 = vrcp.pop %v1491
    %v1493 = vmul.f32 1.0, %v1492
    %v1494 = vtanh.pop %v1471
    %v1495 = vmul.f32 %v1493, 0.0
    %1497 = vrot.lane.b32.xlu0 %v1494, 64
    %v1498 = vpop.permute.xlu0 %1497
    %v1500 = vmul.f32 %v1493, %v1498
    %1502 = vrot.lane.b32.xlu0 %v1500, 32
    %v1503 = vpop.permute.xlu0 %1502
    %v1505 = vadd.f32 %v1495, %v1503
    %v1506 = vtanh.pop %v1505
    %1508 = vrot.lane.b32.xlu0 %v1506, 64
    %v1509 = vpop.permute.xlu0 %1508
    %v1511 = vmul.f32 %v1493, %v1509
    %1513 = vrot.lane.b32.xlu0 %v1511, 32
    %v1514 = vpop.permute.xlu0 %1513
    %v1515 = vsel %vm584, %v1514, 0
    %1517 = vmatprep.subr.mxu0 0.0
    %1518 = vmatpush1.msra.mxu0 %v1473
    %1519 = vmatprep.subr.mxu0 0.0
    %1520 = vmatpush1.msra.mxu0 %v1474
    %1521 = vmatprep.subr.mxu0 0.0
    %1522 = vmatpush1.msra.mxu0 %v1475
    %1523 = vmatprep.subr.mxu0 0.0
    %1524 = vmatpush1.msra.mxu0 %v1476
    %1525 = vmatprep.subr.mxu0 0.0
    %1526 = vmatpush1.msra.mxu0 0.0
    %1527 = vmatprep.subr.mxu0 0.0
    %1528 = vmatpush1.msra.mxu0 0.0
    %1529 = vmatprep.subr.mxu0 0.0
    %1530 = vmatpush1.msra.mxu0 0.0
    %1531 = vmatprep.subr.mxu0 0.0
    %1532 = vmatpush1.msra.mxu0 0.0
    %1533 = vmatprep.subr.mxu0 0.0
    %1534 = vmatpush1.msra.mxu0 0.0
    %1535 = vmatprep.subr.mxu0 0.0
    %1536 = vmatpush1.msra.mxu0 0.0
    %1537 = vmatprep.subr.mxu0 0.0
    %1538 = vmatpush1.msra.mxu0 0.0
    %1539 = vmatprep.subr.mxu0 0.0
    %1540 = vmatpush1.msra.mxu0 0.0
    %1541 = vmatprep.subr.mxu0 0.0
    %1542 = vmatpush1.msra.mxu0 0.0
    %1543 = vmatprep.subr.mxu0 0.0
    %1544 = vmatpush1.msra.mxu0 0.0
    %1545 = vmatprep.subr.mxu0 0.0
    %1546 = vmatpush1.msra.mxu0 0.0
    %1547 = vmatprep.subr.mxu0 0.0
    %1548 = vmatpush1.msra.mxu0 0.0
    %1549 = vmatprep.subr.mxu0 0.0
    %1550 = vmatpush1.msra.mxu0 0.0
    %1551 = vmatprep.subr.mxu0 0.0
    %1552 = vmatpush1.msra.mxu0 0.0
    %1553 = vmatprep.subr.mxu0 0.0
    %1554 = vmatpush1.msra.mxu0 0.0
    %1555 = vmatprep.subr.mxu0 0.0
    %1556 = vmatpush1.msra.mxu0 0.0
    %1557 = vmatprep.subr.mxu0 0.0
    %1558 = vmatpush1.msra.mxu0 0.0
    %1559 = vmatprep.subr.mxu0 0.0
    %1560 = vmatpush1.msra.mxu0 0.0
    %1561 = vmatprep.subr.mxu0 0.0
    %1562 = vmatpush1.msra.mxu0 0.0
    %1563 = vmatprep.subr.mxu0 0.0
    %1564 = vmatpush1.msra.mxu0 0.0
    %1565 = vmatprep.subr.mxu0 0.0
    %1566 = vmatpush1.msra.mxu0 0.0
    %1567 = vmatprep.subr.mxu0 0.0
    %1568 = vmatpush1.msra.mxu0 0.0
    %1569 = vmatprep.subr.mxu0 0.0
    %1570 = vmatpush1.msra.mxu0 0.0
    %1571 = vmatprep.subr.mxu0 0.0
    %1572 = vmatpush1.msra.mxu0 0.0
    %1573 = vmatprep.subr.mxu0 0.0
    %1574 = vmatpush1.msra.mxu0 0.0
    %1575 = vmatprep.subr.mxu0 0.0
    %1576 = vmatpush1.msra.mxu0 0.0
    %1577 = vmatprep.subr.mxu0 0.0
    %1578 = vmatpush1.msra.mxu0 0.0
    %1579 = vmatprep.subr.mxu0 0.0
    %1580 = vmatpush1.msra.mxu0 0.0
    %1581 = vmatprep.mubr.f32.mxu0 0.0
    %1582 = vmatmul.mubr.f32.gmra.mrb[0].mxu0 %v1515
    %v1583 = vpop.f32.mrb[0].mxu0
    %v1584 = vadd.f32 %v1486, %v1583
    %v1585 = vpop.f32.mrb[0].mxu0
    %1586 = vdwg.mxu0
    %v1587 = vxor.u32 %v1584, 2147483648
    %v1588 = vmul.f32 %v1587, 1.442695
    %v1589 = vpow.pop %v1588
    %v1590 = vadd.f32 %v1589, 1.0
    %v1591 = vrcp.pop %v1590
    %v1592 = vmul.f32 1.0, %v1591
    %v1593 = vtanh.pop %v1584
    %v1594 = vmul.f32 %v1592, 0.0
    %1596 = vrot.lane.b32.xlu0 %v1593, 64
    %v1597 = vpop.permute.xlu0 %1596
    %v1599 = vmul.f32 %v1592, %v1597
    %1601 = vrot.lane.b32.xlu0 %v1599, 32
    %v1602 = vpop.permute.xlu0 %1601
    %v1604 = vadd.f32 %v1594, %v1602
    %v1605 = vtanh.pop %v1604
    %1607 = vrot.lane.b32.xlu0 %v1605, 64
    %v1608 = vpop.permute.xlu0 %1607
    %v1610 = vmul.f32 %v1592, %v1608
    loop: start=0, step=1, limit=5
    $region136: #{seq2seq_forward.1} parent=1 // loop_pre_header
      _
    $region137: #{seq2seq_forward.1} parent=1 // loop_header
      %s1612 = sphi 0, %s1616
      %p1613 = scmp.ge.s32.totalorder %s1612, 5
      %v1617 = vphi %v1511, %v2158
      %v1618 = vphi %v1505, %v2152
      %v1619 = vphi %v1610, %v2333
      %v1620 = vphi %v1604, %v2327
      %v1621 = vphi 0.0, %v2342
    $region138: #{seq2seq_forward.1} parent=1 // loop_header_branch
      %1615 = sbr.rel (%p1613) target = $region142
    $region139: #{seq2seq_forward.1} parent=1 // loop_body
      %1623 = vrot.lane.b32.xlu0 %v1620, 96
      %v1624 = vpop.permute.xlu0 %1623
      %v1625 = vsel %vm584, %v1624, 0
      %1627 = vmatprep.subr.mxu0 0.0
      %1628 = vmatpush1.msra.mxu0 %v1441
      %1629 = vmatprep.subr.mxu0 0.0
      %1630 = vmatpush1.msra.mxu0 %v1442
      %1631 = vmatprep.subr.mxu0 0.0
      %1632 = vmatpush1.msra.mxu0 %v1443
      %1633 = vmatprep.subr.mxu0 0.0
      %1634 = vmatpush1.msra.mxu0 %v1444
      %1635 = vmatprep.subr.mxu0 0.0
      %1636 = vmatpush1.msra.mxu0 0.0
      %1637 = vmatprep.subr.mxu0 0.0
      %1638 = vmatpush1.msra.mxu0 0.0
      %1639 = vmatprep.subr.mxu0 0.0
      %1640 = vmatpush1.msra.mxu0 0.0
      %1641 = vmatprep.subr.mxu0 0.0
      %1642 = vmatpush1.msra.mxu0 0.0
      %1643 = vmatprep.subr.mxu0 0.0
      %1644 = vmatpush1.msra.mxu0 0.0
      %1645 = vmatprep.subr.mxu0 0.0
      %1646 = vmatpush1.msra.mxu0 0.0
      %1647 = vmatprep.subr.mxu0 0.0
      %1648 = vmatpush1.msra.mxu0 0.0
      %1649 = vmatprep.subr.mxu0 0.0
      %1650 = vmatpush1.msra.mxu0 0.0
      %1651 = vmatprep.subr.mxu0 0.0
      %1652 = vmatpush1.msra.mxu0 0.0
      %1653 = vmatprep.subr.mxu0 0.0
      %1654 = vmatpush1.msra.mxu0 0.0
      %1655 = vmatprep.subr.mxu0 0.0
      %1656 = vmatpush1.msra.mxu0 0.0
      %1657 = vmatprep.subr.mxu0 0.0
      %1658 = vmatpush1.msra.mxu0 0.0
      %1659 = vmatprep.subr.mxu0 0.0
      %1660 = vmatpush1.msra.mxu0 0.0
      %1661 = vmatprep.subr.mxu0 0.0
      %1662 = vmatpush1.msra.mxu0 0.0
      %1663 = vmatprep.subr.mxu0 0.0
      %1664 = vmatpush1.msra.mxu0 0.0
      %1665 = vmatprep.subr.mxu0 0.0
      %1666 = vmatpush1.msra.mxu0 0.0
      %1667 = vmatprep.subr.mxu0 0.0
      %1668 = vmatpush1.msra.mxu0 0.0
      %1669 = vmatprep.subr.mxu0 0.0
      %1670 = vmatpush1.msra.mxu0 0.0
      %1671 = vmatprep.subr.mxu0 0.0
      %1672 = vmatpush1.msra.mxu0 0.0
      %1673 = vmatprep.subr.mxu0 0.0
      %1674 = vmatpush1.msra.mxu0 0.0
      %1675 = vmatprep.subr.mxu0 0.0
      %1676 = vmatpush1.msra.mxu0 0.0
      %1677 = vmatprep.subr.mxu0 0.0
      %1678 = vmatpush1.msra.mxu0 0.0
      %1679 = vmatprep.subr.mxu0 0.0
      %1680 = vmatpush1.msra.mxu0 0.0
      %1681 = vmatprep.subr.mxu0 0.0
      %1682 = vmatpush1.msra.mxu0 0.0
      %1683 = vmatprep.subr.mxu0 0.0
      %1684 = vmatpush1.msra.mxu0 0.0
      %1685 = vmatprep.subr.mxu0 0.0
      %1686 = vmatpush1.msra.mxu0 0.0
      %1687 = vmatprep.subr.mxu0 0.0
      %1688 = vmatpush1.msra.mxu0 0.0
      %1689 = vmatprep.subr.mxu0 0.0
      %1690 = vmatpush1.msra.mxu0 0.0
      %1691 = vmatprep.mubr.f32.mxu0 0.0
      %1692 = vmatmul.mubr.f32.gmra.mrb[0].mxu0 %v1625
      %v1693 = vpop.f32.mrb[0].mxu0
      %v1694 = vadd.f32 0.0, %v1693
      %v1695 = vpop.f32.mrb[0].mxu0
      %1696 = vdwg.mxu0
      %v1697 = vadd.f32 %v1694, %v1433
      %v1698 = vadd.f32 %v1694, %v1434
      %v1699 = vadd.f32 %v1694, %v1435
      %v1700 = vadd.f32 %v1694, %v1436
      %v1701 = vadd.f32 %v1694, %v1437
      %v1702 = vadd.f32 %v1694, %v1438
      %v1703 = vadd.f32 %v1694, %v1439
      %v1704 = vadd.f32 %v1694, %v1440
      %v1705 = vtanh.pop %v1697
      %v1706 = vtanh.pop %v1698
      %v1707 = vtanh.pop %v1699
      %v1708 = vtanh.pop %v1700
      %v1709 = vtanh.pop %v1701
      %v1710 = vtanh.pop %v1702
      %v1711 = vtanh.pop %v1703
      %v1712 = vtanh.pop %v1704
      %v1713 = vmul.f32 %v1705, %v1450
      %v1714 = vmul.f32 %v1706, %v1450
      %v1715 = vmul.f32 %v1707, %v1450
      %v1716 = vmul.f32 %v1708, %v1450
      %v1717 = vmul.f32 %v1709, %v1450
      %v1718 = vmul.f32 %v1710, %v1450
      %v1719 = vmul.f32 %v1711, %v1450
      %v1720 = vmul.f32 %v1712, %v1450
      %v1721 = vsel %vm584, %v1713, 0.0
      %1722 = vadd.xlane.f32.xlu0 %v1721
      %v1723 = vpop.xlane.xlu0 %1722
      %v1724 = vsel %vm584, %v1714, 0.0
      %1725 = vadd.xlane.f32.xlu0 %v1724
      %v1726 = vpop.xlane.xlu0 %1725
      %v1727 = vsel %vm584, %v1715, 0.0
      %1728 = vadd.xlane.f32.xlu0 %v1727
      %v1729 = vpop.xlane.xlu0 %1728
      %v1730 = vsel %vm584, %v1716, 0.0
      %1731 = vadd.xlane.f32.xlu0 %v1730
      %v1732 = vpop.xlane.xlu0 %1731
      %v1733 = vsel %vm584, %v1717, 0.0
      %1734 = vadd.xlane.f32.xlu0 %v1733
      %v1735 = vpop.xlane.xlu0 %1734
      %v1736 = vsel %vm584, %v1718, 0.0
      %1737 = vadd.xlane.f32.xlu0 %v1736
      %v1738 = vpop.xlane.xlu0 %1737
      %v1739 = vsel %vm584, %v1719, 0.0
      %1740 = vadd.xlane.f32.xlu0 %v1739
      %v1741 = vpop.xlane.xlu0 %1740
      %v1742 = vsel %vm584, %v1720, 0.0
      %1743 = vadd.xlane.f32.xlu0 %v1742
      %v1744 = vpop.xlane.xlu0 %1743
      %v1745 = vmax.f32 %v1723, %v1735
      %v1746 = vmax.f32 %v1726, %v1738
      %v1747 = vmax.f32 %v1729, %v1741
      %v1748 = vmax.f32 %v1732, %v1744
      %v1749 = vmax.f32 %v1745, %v1746
      %v1750 = vmax.f32 %v1747, %v1748
      %v1751 = vmax.f32 %v1749, %v1750
      %v1752 = vsub.f32 %v1723, %v1751
      %v1753 = vsub.f32 %v1726, %v1751
      %v1754 = vsub.f32 %v1729, %v1751
      %v1755 = vsub.f32 %v1732, %v1751
      %v1756 = vsub.f32 %v1735, %v1751
      %v1757 = vsub.f32 %v1738, %v1751
      %v1758 = vsub.f32 %v1741, %v1751
      %v1759 = vsub.f32 %v1744, %v1751
      %v1760 = vmul.f32 %v1752, 1.442695
      %v1761 = vpow.pop %v1760
      %v1762 = vmul.f32 %v1753, 1.442695
      %v1763 = vpow.pop %v1762
      %v1764 = vmul.f32 %v1754, 1.442695
      %v1765 = vpow.pop %v1764
      %v1766 = vmul.f32 %v1755, 1.442695
      %v1767 = vpow.pop %v1766
      %v1768 = vmul.f32 %v1756, 1.442695
      %v1769 = vpow.pop %v1768
      %v1770 = vmul.f32 %v1757, 1.442695
      %v1771 = vpow.pop %v1770
      %v1772 = vmul.f32 %v1758, 1.442695
      %v1773 = vpow.pop %v1772
      %v1774 = vmul.f32 %v1759, 1.442695
      %v1775 = vpow.pop %v1774
      %v1776 = vadd.f32 %v1761, %v1763
      %v1777 = vadd.f32 %v1776, %v1765
      %v1778 = vadd.f32 %v1777, %v1767
      %v1779 = vadd.f32 %v1778, %v1769
      %v1780 = vadd.f32 %v1779, %v1771
      %v1781 = vadd.f32 %v1780, %v1773
      %v1782 = vadd.f32 %v1781, %v1775
      %v1783 = vrcp.pop %v1782
      %v1784 = vmul.f32 %v1761, %v1783
      %v1785 = vmul.f32 %v1763, %v1783
      %v1786 = vmul.f32 %v1765, %v1783
      %v1787 = vmul.f32 %v1767, %v1783
      %v1788 = vmul.f32 %v1769, %v1783
      %v1789 = vmul.f32 %v1771, %v1783
      %v1790 = vmul.f32 %v1773, %v1783
      %v1791 = vmul.f32 %v1775, %v1783
      %v1792 = vmul.f32 %v1784, %v1144
      %v1793 = vmul.f32 %v1785, %v1145
      %v1794 = vmul.f32 %v1786, %v1146
      %v1795 = vmul.f32 %v1787, %v1147
      %v1796 = vmul.f32 %v1788, %v1148
      %v1797 = vmul.f32 %v1789, %v1149
      %v1798 = vmul.f32 %v1790, %v1150
      %v1799 = vmul.f32 %v1791, %v1151
      %v1800 = vsel %vm584, %v1792, 0.0
      %v1801 = vsel %vm584, %v1793, 0.0
      %v1802 = vadd.f32 %v1800, %v1801
      %v1803 = vsel %vm584, %v1794, 0.0
      %v1804 = vadd.f32 %v1802, %v1803
      %v1805 = vsel %vm584, %v1795, 0.0
      %v1806 = vadd.f32 %v1804, %v1805
      %v1807 = vsel %vm584, %v1796, 0.0
      %v1808 = vadd.f32 %v1806, %v1807
      %v1809 = vsel %vm584, %v1797, 0.0
      %v1810 = vadd.f32 %v1808, %v1809
      %v1811 = vsel %vm584, %v1798, 0.0
      %v1812 = vadd.f32 %v1810, %v1811
      %v1813 = vsel %vm584, %v1799, 0.0
      %v1814 = vadd.f32 %v1812, %v1813
      %v1815 = vmul.f32 %v1784, %v1152
      %v1816 = vmul.f32 %v1785, %v1153
      %v1817 = vmul.f32 %v1786, %v1154
      %v1818 = vmul.f32 %v1787, %v1155
      %v1819 = vmul.f32 %v1788, %v1156
      %v1820 = vmul.f32 %v1789, %v1157
      %v1821 = vmul.f32 %v1790, %v1158
      %v1822 = vmul.f32 %v1791, %v1159
      %v1823 = vsel %vm584, %v1815, 0.0
      %v1824 = vsel %vm584, %v1816, 0.0
      %v1825 = vadd.f32 %v1823, %v1824
      %v1826 = vsel %vm584, %v1817, 0.0
      %v1827 = vadd.f32 %v1825, %v1826
      %v1828 = vsel %vm584, %v1818, 0.0
      %v1829 = vadd.f32 %v1827, %v1828
      %v1830 = vsel %vm584, %v1819, 0.0
      %v1831 = vadd.f32 %v1829, %v1830
      %v1832 = vsel %vm584, %v1820, 0.0
      %v1833 = vadd.f32 %v1831, %v1832
      %v1834 = vsel %vm584, %v1821, 0.0
      %v1835 = vadd.f32 %v1833, %v1834
      %v1836 = vsel %vm584, %v1822, 0.0
      %v1837 = vadd.f32 %v1835, %v1836
      %v1839 = vsel %vm584, %v1837, 0
      %1841 = vmatprep.subr.mxu0 0.0
      %1842 = vmatpush1.msra.mxu0 %v1456
      %1843 = vmatprep.subr.mxu0 0.0
      %1844 = vmatpush1.msra.mxu0 %v1457
      %1845 = vmatprep.subr.mxu0 0.0
      %1846 = vmatpush1.msra.mxu0 %v1458
      %1847 = vmatprep.subr.mxu0 0.0
      %1848 = vmatpush1.msra.mxu0 %v1459
      %1849 = vmatprep.subr.mxu0 0.0
      %1850 = vmatpush1.msra.mxu0 0.0
      %1851 = vmatprep.subr.mxu0 0.0
      %1852 = vmatpush1.msra.mxu0 0.0
      %1853 = vmatprep.subr.mxu0 0.0
      %1854 = vmatpush1.msra.mxu0 0.0
      %1855 = vmatprep.subr.mxu0 0.0
      %1856 = vmatpush1.msra.mxu0 0.0
      %1857 = vmatprep.subr.mxu0 0.0
      %1858 = vmatpush1.msra.mxu0 0.0
      %1859 = vmatprep.subr.mxu0 0.0
      %1860 = vmatpush1.msra.mxu0 0.0
      %1861 = vmatprep.subr.mxu0 0.0
      %1862 = vmatpush1.msra.mxu0 0.0
      %1863 = vmatprep.subr.mxu0 0.0
      %1864 = vmatpush1.msra.mxu0 0.0
      %1865 = vmatprep.subr.mxu0 0.0
      %1866 = vmatpush1.msra.mxu0 0.0
      %1867 = vmatprep.subr.mxu0 0.0
      %1868 = vmatpush1.msra.mxu0 0.0
      %1869 = vmatprep.subr.mxu0 0.0
      %1870 = vmatpush1.msra.mxu0 0.0
      %1871 = vmatprep.subr.mxu0 0.0
      %1872 = vmatpush1.msra.mxu0 0.0
      %1873 = vmatprep.subr.mxu0 0.0
      %1874 = vmatpush1.msra.mxu0 0.0
      %1875 = vmatprep.subr.mxu0 0.0
      %1876 = vmatpush1.msra.mxu0 0.0
      %1877 = vmatprep.subr.mxu0 0.0
      %1878 = vmatpush1.msra.mxu0 0.0
      %1879 = vmatprep.subr.mxu0 0.0
      %1880 = vmatpush1.msra.mxu0 0.0
      %1881 = vmatprep.subr.mxu0 0.0
      %1882 = vmatpush1.msra.mxu0 0.0
      %1883 = vmatprep.subr.mxu0 0.0
      %1884 = vmatpush1.msra.mxu0 0.0
      %1885 = vmatprep.subr.mxu0 0.0
      %1886 = vmatpush1.msra.mxu0 0.0
      %1887 = vmatprep.subr.mxu0 0.0
      %1888 = vmatpush1.msra.mxu0 0.0
      %1889 = vmatprep.subr.mxu0 0.0
      %1890 = vmatpush1.msra.mxu0 0.0
      %1891 = vmatprep.subr.mxu0 0.0
      %1892 = vmatpush1.msra.mxu0 0.0
      %1893 = vmatprep.subr.mxu0 0.0
      %1894 = vmatpush1.msra.mxu0 0.0
      %1895 = vmatprep.subr.mxu0 0.0
      %1896 = vmatpush1.msra.mxu0 0.0
      %1897 = vmatprep.subr.mxu0 0.0
      %1898 = vmatpush1.msra.mxu0 0.0
      %1899 = vmatprep.subr.mxu0 0.0
      %1900 = vmatpush1.msra.mxu0 0.0
      %1901 = vmatprep.subr.mxu0 0.0
      %1902 = vmatpush1.msra.mxu0 0.0
      %1903 = vmatprep.subr.mxu0 0.0
      %1904 = vmatpush1.msra.mxu0 0.0
      %1905 = vmatprep.mubr.f32.mxu0 0.0
      %1906 = vmatmul.mubr.f32.gmra.mrb[0].mxu0 %v1839
      %v1907 = vpop.f32.mrb[0].mxu0
      %v1908 = vadd.f32 0.0, %v1907
      %v1909 = vpop.f32.mrb[0].mxu0
      %1910 = vdwg.mxu0
      %v1912 = vsel %vm584, %v1814, 0
      %1914 = vmatprep.subr.mxu0 0.0
      %1915 = vmatpush1.msra.mxu0 %v1452
      %1916 = vmatprep.subr.mxu0 0.0
      %1917 = vmatpush1.msra.mxu0 %v1453
      %1918 = vmatprep.subr.mxu0 0.0
      %1919 = vmatpush1.msra.mxu0 %v1454
      %1920 = vmatprep.subr.mxu0 0.0
      %1921 = vmatpush1.msra.mxu0 %v1455
      %1922 = vmatprep.subr.mxu0 0.0
      %1923 = vmatpush1.msra.mxu0 0.0
      %1924 = vmatprep.subr.mxu0 0.0
      %1925 = vmatpush1.msra.mxu0 0.0
      %1926 = vmatprep.subr.mxu0 0.0
      %1927 = vmatpush1.msra.mxu0 0.0
      %1928 = vmatprep.subr.mxu0 0.0
      %1929 = vmatpush1.msra.mxu0 0.0
      %1930 = vmatprep.subr.mxu0 0.0
      %1931 = vmatpush1.msra.mxu0 0.0
      %1932 = vmatprep.subr.mxu0 0.0
      %1933 = vmatpush1.msra.mxu0 0.0
      %1934 = vmatprep.subr.mxu0 0.0
      %1935 = vmatpush1.msra.mxu0 0.0
      %1936 = vmatprep.subr.mxu0 0.0
      %1937 = vmatpush1.msra.mxu0 0.0
      %1938 = vmatprep.subr.mxu0 0.0
      %1939 = vmatpush1.msra.mxu0 0.0
      %1940 = vmatprep.subr.mxu0 0.0
      %1941 = vmatpush1.msra.mxu0 0.0
      %1942 = vmatprep.subr.mxu0 0.0
      %1943 = vmatpush1.msra.mxu0 0.0
      %1944 = vmatprep.subr.mxu0 0.0
      %1945 = vmatpush1.msra.mxu0 0.0
      %1946 = vmatprep.subr.mxu0 0.0
      %1947 = vmatpush1.msra.mxu0 0.0
      %1948 = vmatprep.subr.mxu0 0.0
      %1949 = vmatpush1.msra.mxu0 0.0
      %1950 = vmatprep.subr.mxu0 0.0
      %1951 = vmatpush1.msra.mxu0 0.0
      %1952 = vmatprep.subr.mxu0 0.0
      %1953 = vmatpush1.msra.mxu0 0.0
      %1954 = vmatprep.subr.mxu0 0.0
      %1955 = vmatpush1.msra.mxu0 0.0
      %1956 = vmatprep.subr.mxu0 0.0
      %1957 = vmatpush1.msra.mxu0 0.0
      %1958 = vmatprep.subr.mxu0 0.0
      %1959 = vmatpush1.msra.mxu0 0.0
      %1960 = vmatprep.subr.mxu0 0.0
      %1961 = vmatpush1.msra.mxu0 0.0
      %1962 = vmatprep.subr.mxu0 0.0
      %1963 = vmatpush1.msra.mxu0 0.0
      %1964 = vmatprep.subr.mxu0 0.0
      %1965 = vmatpush1.msra.mxu0 0.0
      %1966 = vmatprep.subr.mxu0 0.0
      %1967 = vmatpush1.msra.mxu0 0.0
      %1968 = vmatprep.subr.mxu0 0.0
      %1969 = vmatpush1.msra.mxu0 0.0
      %1970 = vmatprep.subr.mxu0 0.0
      %1971 = vmatpush1.msra.mxu0 0.0
      %1972 = vmatprep.subr.mxu0 0.0
      %1973 = vmatpush1.msra.mxu0 0.0
      %1974 = vmatprep.subr.mxu0 0.0
      %1975 = vmatpush1.msra.mxu0 0.0
      %1976 = vmatprep.subr.mxu0 0.0
      %1977 = vmatpush1.msra.mxu0 0.0
      %1978 = vmatprep.mubr.f32.mxu0 0.0
      %1979 = vmatmul.mubr.f32.gmra.mrb[0].mxu0 %v1912
      %v1980 = vpop.f32.mrb[0].mxu0
      %v1981 = vadd.f32 %v1908, %v1980
      %v1982 = vpop.f32.mrb[0].mxu0
      %1983 = vdwg.mxu0
      %v1985 = vsel %vm156, %v1621, 0
      %1987 = vmatprep.subr.mxu0 0.0
      %1988 = vmatpush1.msra.mxu0 %v1460
      %1989 = vmatprep.subr.mxu0 0.0
      %1990 = vmatpush1.msra.mxu0 %v1461
      %1991 = vmatprep.subr.mxu0 0.0
      %1992 = vmatpush1.msra.mxu0 0.0
      %1993 = vmatprep.subr.mxu0 0.0
      %1994 = vmatpush1.msra.mxu0 0.0
      %1995 = vmatprep.subr.mxu0 0.0
      %1996 = vmatpush1.msra.mxu0 0.0
      %1997 = vmatprep.subr.mxu0 0.0
      %1998 = vmatpush1.msra.mxu0 0.0
      %1999 = vmatprep.subr.mxu0 0.0
      %2000 = vmatpush1.msra.mxu0 0.0
      %2001 = vmatprep.subr.mxu0 0.0
      %2002 = vmatpush1.msra.mxu0 0.0
      %2003 = vmatprep.subr.mxu0 0.0
      %2004 = vmatpush1.msra.mxu0 0.0
      %2005 = vmatprep.subr.mxu0 0.0
      %2006 = vmatpush1.msra.mxu0 0.0
      %2007 = vmatprep.subr.mxu0 0.0
      %2008 = vmatpush1.msra.mxu0 0.0
      %2009 = vmatprep.subr.mxu0 0.0
      %2010 = vmatpush1.msra.mxu0 0.0
      %2011 = vmatprep.subr.mxu0 0.0
      %2012 = vmatpush1.msra.mxu0 0.0
      %2013 = vmatprep.subr.mxu0 0.0
      %2014 = vmatpush1.msra.mxu0 0.0
      %2015 = vmatprep.subr.mxu0 0.0
      %2016 = vmatpush1.msra.mxu0 0.0
      %2017 = vmatprep.subr.mxu0 0.0
      %2018 = vmatpush1.msra.mxu0 0.0
      %2019 = vmatprep.subr.mxu0 0.0
      %2020 = vmatpush1.msra.mxu0 0.0
      %2021 = vmatprep.subr.mxu0 0.0
      %2022 = vmatpush1.msra.mxu0 0.0
      %2023 = vmatprep.subr.mxu0 0.0
      %2024 = vmatpush1.msra.mxu0 0.0
      %2025 = vmatprep.subr.mxu0 0.0
      %2026 = vmatpush1.msra.mxu0 0.0
      %2027 = vmatprep.subr.mxu0 0.0
      %2028 = vmatpush1.msra.mxu0 0.0
      %2029 = vmatprep.subr.mxu0 0.0
      %2030 = vmatpush1.msra.mxu0 0.0
      %2031 = vmatprep.subr.mxu0 0.0
      %2032 = vmatpush1.msra.mxu0 0.0
      %2033 = vmatprep.subr.mxu0 0.0
      %2034 = vmatpush1.msra.mxu0 0.0
      %2035 = vmatprep.subr.mxu0 0.0
      %2036 = vmatpush1.msra.mxu0 0.0
      %2037 = vmatprep.subr.mxu0 0.0
      %2038 = vmatpush1.msra.mxu0 0.0
      %2039 = vmatprep.subr.mxu0 0.0
      %2040 = vmatpush1.msra.mxu0 0.0
      %2041 = vmatprep.subr.mxu0 0.0
      %2042 = vmatpush1.msra.mxu0 0.0
      %2043 = vmatprep.subr.mxu0 0.0
      %2044 = vmatpush1.msra.mxu0 0.0
      %2045 = vmatprep.subr.mxu0 0.0
      %2046 = vmatpush1.msra.mxu0 0.0
      %2047 = vmatprep.subr.mxu0 0.0
      %2048 = vmatpush1.msra.mxu0 0.0
      %2049 = vmatprep.subr.mxu0 0.0
      %2050 = vmatpush1.msra.mxu0 0.0
      %2051 = vmatprep.mubr.f32.mxu0 0.0
      %2052 = vmatmul.mubr.f32.gmra.mrb[0].mxu0 %v1985
      %v2053 = vpop.f32.mrb[0].mxu0
      %v2054 = vadd.f32 0.0, %v2053
      %v2055 = vpop.f32.mrb[0].mxu0
      %2056 = vdwg.mxu0
      %v2057 = vadd.f32 %v1981, %v2054
      %2059 = vrot.lane.b32.xlu0 %v1617, 32
      %v2060 = vpop.permute.xlu0 %2059
      %v2061 = vsel %vm584, %v2060, 0
      %2063 = vmatprep.subr.mxu0 0.0
      %2064 = vmatpush1.msra.mxu0 %v1462
      %2065 = vmatprep.subr.mxu0 0.0
      %2066 = vmatpush1.msra.mxu0 %v1463
      %2067 = vmatprep.subr.mxu0 0.0
      %2068 = vmatpush1.msra.mxu0 %v1464
      %2069 = vmatprep.subr.mxu0 0.0
      %2070 = vmatpush1.msra.mxu0 %v1465
      %2071 = vmatprep.subr.mxu0 0.0
      %2072 = vmatpush1.msra.mxu0 0.0
      %2073 = vmatprep.subr.mxu0 0.0
      %2074 = vmatpush1.msra.mxu0 0.0
      %2075 = vmatprep.subr.mxu0 0.0
      %2076 = vmatpush1.msra.mxu0 0.0
      %2077 = vmatprep.subr.mxu0 0.0
      %2078 = vmatpush1.msra.mxu0 0.0
      %2079 = vmatprep.subr.mxu0 0.0
      %2080 = vmatpush1.msra.mxu0 0.0
      %2081 = vmatprep.subr.mxu0 0.0
      %2082 = vmatpush1.msra.mxu0 0.0
      %2083 = vmatprep.subr.mxu0 0.0
      %2084 = vmatpush1.msra.mxu0 0.0
      %2085 = vmatprep.subr.mxu0 0.0
      %2086 = vmatpush1.msra.mxu0 0.0
      %2087 = vmatprep.subr.mxu0 0.0
      %2088 = vmatpush1.msra.mxu0 0.0
      %2089 = vmatprep.subr.mxu0 0.0
      %2090 = vmatpush1.msra.mxu0 0.0
      %2091 = vmatprep.subr.mxu0 0.0
      %2092 = vmatpush1.msra.mxu0 0.0
      %2093 = vmatprep.subr.mxu0 0.0
      %2094 = vmatpush1.msra.mxu0 0.0
      %2095 = vmatprep.subr.mxu0 0.0
      %2096 = vmatpush1.msra.mxu0 0.0
      %2097 = vmatprep.subr.mxu0 0.0
      %2098 = vmatpush1.msra.mxu0 0.0
      %2099 = vmatprep.subr.mxu0 0.0
      %2100 = vmatpush1.msra.mxu0 0.0
      %2101 = vmatprep.subr.mxu0 0.0
      %2102 = vmatpush1.msra.mxu0 0.0
      %2103 = vmatprep.subr.mxu0 0.0
      %2104 = vmatpush1.msra.mxu0 0.0
      %2105 = vmatprep.subr.mxu0 0.0
      %2106 = vmatpush1.msra.mxu0 0.0
      %2107 = vmatprep.subr.mxu0 0.0
      %2108 = vmatpush1.msra.mxu0 0.0
      %2109 = vmatprep.subr.mxu0 0.0
      %2110 = vmatpush1.msra.mxu0 0.0
      %2111 = vmatprep.subr.mxu0 0.0
      %2112 = vmatpush1.msra.mxu0 0.0
      %2113 = vmatprep.subr.mxu0 0.0
      %2114 = vmatpush1.msra.mxu0 0.0
      %2115 = vmatprep.subr.mxu0 0.0
      %2116 = vmatpush1.msra.mxu0 0.0
      %2117 = vmatprep.subr.mxu0 0.0
      %2118 = vmatpush1.msra.mxu0 0.0
      %2119 = vmatprep.subr.mxu0 0.0
      %2120 = vmatpush1.msra.mxu0 0.0
      %2121 = vmatprep.subr.mxu0 0.0
      %2122 = vmatpush1.msra.mxu0 0.0
      %2123 = vmatprep.subr.mxu0 0.0
      %2124 = vmatpush1.msra.mxu0 0.0
      %2125 = vmatprep.subr.mxu0 0.0
      %2126 = vmatpush1.msra.mxu0 0.0
      %2127 = vmatprep.mubr.f32.mxu0 0.0
      %2128 = vmatmul.mubr.f32.gmra.mrb[0].mxu0 %v2061
      %v2129 = vpop.f32.mrb[0].mxu0
      %v2130 = vadd.f32 0.0, %v2129
      %v2131 = vpop.f32.mrb[0].mxu0
      %2132 = vdwg.mxu0
      %v2133 = vadd.f32 %v2057, %v2130
      %v2134 = vadd.f32 %v2133, %v1471
      %v2135 = vxor.u32 %v2134, 2147483648
      %v2136 = vmul.f32 %v2135, 1.442695
      %v2137 = vpow.pop %v2136
      %v2138 = vadd.f32 %v2137, 1.0
      %v2139 = vrcp.pop %v2138
      %v2140 = vmul.f32 1.0, %v2139
      %v2141 = vtanh.pop %v2134
      %v2142 = vmul.f32 %v2140, %v1618
      %2144 = vrot.lane.b32.xlu0 %v2141, 64
      %v2145 = vpop.permute.xlu0 %2144
      %v2147 = vmul.f32 %v2140, %v2145
      %2149 = vrot.lane.b32.xlu0 %v2147, 32
      %v2150 = vpop.permute.xlu0 %2149
      %v2152 = vadd.f32 %v2142, %v2150
      %v2153 = vtanh.pop %v2152
      %2155 = vrot.lane.b32.xlu0 %v2153, 64
      %v2156 = vpop.permute.xlu0 %2155
      %v2158 = vmul.f32 %v2140, %v2156
      %2160 = vrot.lane.b32.xlu0 %v1619, 32
      %v2161 = vpop.permute.xlu0 %2160
      %v2162 = vsel %vm584, %v2161, 0
      %2164 = vmatprep.subr.mxu0 0.0
      %2165 = vmatpush1.msra.mxu0 %v1477
      %2166 = vmatprep.subr.mxu0 0.0
      %2167 = vmatpush1.msra.mxu0 %v1478
      %2168 = vmatprep.subr.mxu0 0.0
      %2169 = vmatpush1.msra.mxu0 %v1479
      %2170 = vmatprep.subr.mxu0 0.0
      %2171 = vmatpush1.msra.mxu0 %v1480
      %2172 = vmatprep.subr.mxu0 0.0
      %2173 = vmatpush1.msra.mxu0 0.0
      %2174 = vmatprep.subr.mxu0 0.0
      %2175 = vmatpush1.msra.mxu0 0.0
      %2176 = vmatprep.subr.mxu0 0.0
      %2177 = vmatpush1.msra.mxu0 0.0
      %2178 = vmatprep.subr.mxu0 0.0
      %2179 = vmatpush1.msra.mxu0 0.0
      %2180 = vmatprep.subr.mxu0 0.0
      %2181 = vmatpush1.msra.mxu0 0.0
      %2182 = vmatprep.subr.mxu0 0.0
      %2183 = vmatpush1.msra.mxu0 0.0
      %2184 = vmatprep.subr.mxu0 0.0
      %2185 = vmatpush1.msra.mxu0 0.0
      %2186 = vmatprep.subr.mxu0 0.0
      %2187 = vmatpush1.msra.mxu0 0.0
      %2188 = vmatprep.subr.mxu0 0.0
      %2189 = vmatpush1.msra.mxu0 0.0
      %2190 = vmatprep.subr.mxu0 0.0
      %2191 = vmatpush1.msra.mxu0 0.0
      %2192 = vmatprep.subr.mxu0 0.0
      %2193 = vmatpush1.msra.mxu0 0.0
      %2194 = vmatprep.subr.mxu0 0.0
      %2195 = vmatpush1.msra.mxu0 0.0
      %2196 = vmatprep.subr.mxu0 0.0
      %2197 = vmatpush1.msra.mxu0 0.0
      %2198 = vmatprep.subr.mxu0 0.0
      %2199 = vmatpush1.msra.mxu0 0.0
      %2200 = vmatprep.subr.mxu0 0.0
      %2201 = vmatpush1.msra.mxu0 0.0
      %2202 = vmatprep.subr.mxu0 0.0
      %2203 = vmatpush1.msra.mxu0 0.0
      %2204 = vmatprep.subr.mxu0 0.0
      %2205 = vmatpush1.msra.mxu0 0.0
      %2206 = vmatprep.subr.mxu0 0.0
      %2207 = vmatpush1.msra.mxu0 0.0
      %2208 = vmatprep.subr.mxu0 0.0
      %2209 = vmatpush1.msra.mxu0 0.0
      %2210 = vmatprep.subr.mxu0 0.0
      %2211 = vmatpush1.msra.mxu0 0.0
      %2212 = vmatprep.subr.mxu0 0.0
      %2213 = vmatpush1.msra.mxu0 0.0
      %2214 = vmatprep.subr.mxu0 0.0
      %2215 = vmatpush1.msra.mxu0 0.0
      %2216 = vmatprep.subr.mxu0 0.0
      %2217 = vmatpush1.msra.mxu0 0.0
      %2218 = vmatprep.subr.mxu0 0.0
      %2219 = vmatpush1.msra.mxu0 0.0
      %2220 = vmatprep.subr.mxu0 0.0
      %2221 = vmatpush1.msra.mxu0 0.0
      %2222 = vmatprep.subr.mxu0 0.0
      %2223 = vmatpush1.msra.mxu0 0.0
      %2224 = vmatprep.subr.mxu0 0.0
      %2225 = vmatpush1.msra.mxu0 0.0
      %2226 = vmatprep.subr.mxu0 0.0
      %2227 = vmatpush1.msra.mxu0 0.0
      %2228 = vmatprep.mubr.f32.mxu0 0.0
      %2229 = vmatmul.mubr.f32.gmra.mrb[0].mxu0 %v2162
      %v2230 = vpop.f32.mrb[0].mxu0
      %v2231 = vadd.f32 0.0, %v2230
      %v2232 = vpop.f32.mrb[0].mxu0
      %2233 = vdwg.mxu0
      %2235 = vrot.lane.b32.xlu0 %v2158, 32
      %v2236 = vpop.permute.xlu0 %2235
      %v2237 = vsel %vm584, %v2236, 0
      %2239 = vmatprep.subr.mxu0 0.0
      %2240 = vmatpush1.msra.mxu0 %v1473
      %2241 = vmatprep.subr.mxu0 0.0
      %2242 = vmatpush1.msra.mxu0 %v1474
      %2243 = vmatprep.subr.mxu0 0.0
      %2244 = vmatpush1.msra.mxu0 %v1475
      %2245 = vmatprep.subr.mxu0 0.0
      %2246 = vmatpush1.msra.mxu0 %v1476
      %2247 = vmatprep.subr.mxu0 0.0
      %2248 = vmatpush1.msra.mxu0 0.0
      %2249 = vmatprep.subr.mxu0 0.0
      %2250 = vmatpush1.msra.mxu0 0.0
      %2251 = vmatprep.subr.mxu0 0.0
      %2252 = vmatpush1.msra.mxu0 0.0
      %2253 = vmatprep.subr.mxu0 0.0
      %2254 = vmatpush1.msra.mxu0 0.0
      %2255 = vmatprep.subr.mxu0 0.0
      %2256 = vmatpush1.msra.mxu0 0.0
      %2257 = vmatprep.subr.mxu0 0.0
      %2258 = vmatpush1.msra.mxu0 0.0
      %2259 = vmatprep.subr.mxu0 0.0
      %2260 = vmatpush1.msra.mxu0 0.0
      %2261 = vmatprep.subr.mxu0 0.0
      %2262 = vmatpush1.msra.mxu0 0.0
      %2263 = vmatprep.subr.mxu0 0.0
      %2264 = vmatpush1.msra.mxu0 0.0
      %2265 = vmatprep.subr.mxu0 0.0
      %2266 = vmatpush1.msra.mxu0 0.0
      %2267 = vmatprep.subr.mxu0 0.0
      %2268 = vmatpush1.msra.mxu0 0.0
      %2269 = vmatprep.subr.mxu0 0.0
      %2270 = vmatpush1.msra.mxu0 0.0
      %2271 = vmatprep.subr.mxu0 0.0
      %2272 = vmatpush1.msra.mxu0 0.0
      %2273 = vmatprep.subr.mxu0 0.0
      %2274 = vmatpush1.msra.mxu0 0.0
      %2275 = vmatprep.subr.mxu0 0.0
      %2276 = vmatpush1.msra.mxu0 0.0
      %2277 = vmatprep.subr.mxu0 0.0
      %2278 = vmatpush1.msra.mxu0 0.0
      %2279 = vmatprep.subr.mxu0 0.0
      %2280 = vmatpush1.msra.mxu0 0.0
      %2281 = vmatprep.subr.mxu0 0.0
      %2282 = vmatpush1.msra.mxu0 0.0
      %2283 = vmatprep.subr.mxu0 0.0
      %2284 = vmatpush1.msra.mxu0 0.0
      %2285 = vmatprep.subr.mxu0 0.0
      %2286 = vmatpush1.msra.mxu0 0.0
      %2287 = vmatprep.subr.mxu0 0.0
      %2288 = vmatpush1.msra.mxu0 0.0
      %2289 = vmatprep.subr.mxu0 0.0
      %2290 = vmatpush1.msra.mxu0 0.0
      %2291 = vmatprep.subr.mxu0 0.0
      %2292 = vmatpush1.msra.mxu0 0.0
      %2293 = vmatprep.subr.mxu0 0.0
      %2294 = vmatpush1.msra.mxu0 0.0
      %2295 = vmatprep.subr.mxu0 0.0
      %2296 = vmatpush1.msra.mxu0 0.0
      %2297 = vmatprep.subr.mxu0 0.0
      %2298 = vmatpush1.msra.mxu0 0.0
      %2299 = vmatprep.subr.mxu0 0.0
      %2300 = vmatpush1.msra.mxu0 0.0
      %2301 = vmatprep.subr.mxu0 0.0
      %2302 = vmatpush1.msra.mxu0 0.0
      %2303 = vmatprep.mubr.f32.mxu0 0.0
      %2304 = vmatmul.mubr.f32.gmra.mrb[0].mxu0 %v2237
      %v2305 = vpop.f32.mrb[0].mxu0
      %v2306 = vadd.f32 %v2231, %v2305
      %v2307 = vpop.f32.mrb[0].mxu0
      %2308 = vdwg.mxu0
      %v2309 = vadd.f32 %v2306, %v1486
      %v2310 = vxor.u32 %v2309, 2147483648
      %v2311 = vmul.f32 %v2310, 1.442695
      %v2312 = vpow.pop %v2311
      %v2313 = vadd.f32 %v2312, 1.0
      %v2314 = vrcp.pop %v2313
      %v2315 = vmul.f32 1.0, %v2314
      %v2316 = vtanh.pop %v2309
      %v2317 = vmul.f32 %v2315, %v1620
      %2319 = vrot.lane.b32.xlu0 %v2316, 64
      %v2320 = vpop.permute.xlu0 %2319
      %v2322 = vmul.f32 %v2315, %v2320
      %2324 = vrot.lane.b32.xlu0 %v2322, 32
      %v2325 = vpop.permute.xlu0 %2324
      %v2327 = vadd.f32 %v2317, %v2325
      %v2328 = vtanh.pop %v2327
      %2330 = vrot.lane.b32.xlu0 %v2328, 64
      %v2331 = vpop.permute.xlu0 %2330
      %v2333 = vmul.f32 %v2315, %v2331
      %2335 = vrot.lane.b32.xlu0 %v2333, 32
      %v2336 = vpop.permute.xlu0 %2335
      %s2338 = smul.u32 %s1612, 8
      %s2339 = scalar_lea.vmem [#allocation7], %s2338
      %2340 = vst.msk [vmem:[%s2339] sm:$0xff] %vm584, %v2336
      %s2341 = scalar_lea.vmem %s1, %s2338
      %v2342 = vld [vmem:[%s2341] sm:$0xff]
    $region140: #{seq2seq_forward.1} parent=1 // loop_footer
      %s1616 = sadd.s32 1, %s1612
    $region141: #{seq2seq_forward.1} parent=1 // loop_footer_branch
      %1611 = sbr.rel target = $region137
    $region142: #{seq2seq_forward.1} parent=1 // loop_exit
      _
    %v2343 = vld [vmem:[#allocation7] sm:$0xff]
    %v2344 = vld [vmem:[#allocation7 + $0x8] sm:$0xff]
    %v2345 = vld [vmem:[#allocation7 + $0x10] sm:$0xff]
    %v2346 = vld [vmem:[#allocation7 + $0x18] sm:$0xff]
    %v2347 = vld [vmem:[#allocation7 + $0x20] sm:$0xff]
    %v2348 = vld [vmem:[%s24] sm:$0xff]
    %v2349 = vld [vmem:[%s24 + $0x8] sm:$0xff]
    %v2350 = vld [vmem:[%s24 + $0x10] sm:$0xff]
    %v2351 = vld [vmem:[%s24 + $0x18] sm:$0xff]
    %v2352 = vld [vmem:[%s25] sm:$0x1]
    %v2354 = vlaneseq
    %v2355 = vshrl.u32 %v2354, 7
    %v2356 = vsub.s32 0, %v2355
    %v2357 = vrot.slane %v2352, %v2356
    %v2360 = vsel %vm584, %v2343, 0
    %v2363 = vsel %vm584, %v2344, 0
    %v2366 = vsel %vm584, %v2345, 0
    %v2369 = vsel %vm584, %v2346, 0
    %v2372 = vsel %vm584, %v2347, 0
    %2374 = vmatprep.subr.mxu0 0.0
    %2375 = vmatpush1.msra.mxu0 %v2348
    %2376 = vmatprep.subr.mxu0 0.0
    %2377 = vmatpush1.msra.mxu0 %v2349
    %2378 = vmatprep.subr.mxu0 0.0
    %2379 = vmatpush1.msra.mxu0 %v2350
    %2380 = vmatprep.subr.mxu0 0.0
    %2381 = vmatpush1.msra.mxu0 %v2351
    %2382 = vmatprep.subr.mxu0 0.0
    %2383 = vmatpush1.msra.mxu0 0.0
    %2384 = vmatprep.subr.mxu0 0.0
    %2385 = vmatpush1.msra.mxu0 0.0
    %2386 = vmatprep.subr.mxu0 0.0
    %2387 = vmatpush1.msra.mxu0 0.0
    %2388 = vmatprep.subr.mxu0 0.0
    %2389 = vmatpush1.msra.mxu0 0.0
    %2390 = vmatprep.subr.mxu0 0.0
    %2391 = vmatpush1.msra.mxu0 0.0
    %2392 = vmatprep.subr.mxu0 0.0
    %2393 = vmatpush1.msra.mxu0 0.0
    %2394 = vmatprep.subr.mxu0 0.0
    %2395 = vmatpush1.msra.mxu0 0.0
    %2396 = vmatprep.subr.mxu0 0.0
    %2397 = vmatpush1.msra.mxu0 0.0
    %2398 = vmatprep.subr.mxu0 0.0
    %2399 = vmatpush1.msra.mxu0 0.0
    %2400 = vmatprep.subr.mxu0 0.0
    %2401 = vmatpush1.msra.mxu0 0.0
    %2402 = vmatprep.subr.mxu0 0.0
    %2403 = vmatpush1.msra.mxu0 0.0
    %2404 = vmatprep.subr.mxu0 0.0
    %2405 = vmatpush1.msra.mxu0 0.0
    %2406 = vmatprep.subr.mxu0 0.0
    %2407 = vmatpush1.msra.mxu0 0.0
    %2408 = vmatprep.subr.mxu0 0.0
    %2409 = vmatpush1.msra.mxu0 0.0
    %2410 = vmatprep.subr.mxu0 0.0
    %2411 = vmatpush1.msra.mxu0 0.0
    %2412 = vmatprep.subr.mxu0 0.0
    %2413 = vmatpush1.msra.mxu0 0.0
    %2414 = vmatprep.subr.mxu0 0.0
    %2415 = vmatpush1.msra.mxu0 0.0
    %2416 = vmatprep.subr.mxu0 0.0
    %2417 = vmatpush1.msra.mxu0 0.0
    %2418 = vmatprep.subr.mxu0 0.0
    %2419 = vmatpush1.msra.mxu0 0.0
    %2420 = vmatprep.subr.mxu0 0.0
    %2421 = vmatpush1.msra.mxu0 0.0
    %2422 = vmatprep.subr.mxu0 0.0
    %2423 = vmatpush1.msra.mxu0 0.0
    %2424 = vmatprep.subr.mxu0 0.0
    %2425 = vmatpush1.msra.mxu0 0.0
    %2426 = vmatprep.subr.mxu0 0.0
    %2427 = vmatpush1.msra.mxu0 0.0
    %2428 = vmatprep.subr.mxu0 0.0
    %2429 = vmatpush1.msra.mxu0 0.0
    %2430 = vmatprep.subr.mxu0 0.0
    %2431 = vmatpush1.msra.mxu0 0.0
    %2432 = vmatprep.subr.mxu0 0.0
    %2433 = vmatpush1.msra.mxu0 0.0
    %2434 = vmatprep.subr.mxu0 0.0
    %2435 = vmatpush1.msra.mxu0 0.0
    %2436 = vmatprep.subr.mxu0 0.0
    %2437 = vmatpush1.msra.mxu0 0.0
    %2438 = vmatprep.mubr.f32.mxu0 0.0
    %2439 = vmatmul.mubr.f32.gmra.mrb[0].mxu0 %v2360
    %v2440 = vpop.f32.mrb[0].mxu0
    %v2441 = vadd.f32 %v2357, %v2440
    %v2442 = vpop.f32.mrb[0].mxu0
    %2443 = vmatprep.mubr.f32.mxu0 0.0
    %2444 = vmatmul.mubr.f32.gmra.mrb[0].mxu0 %v2363
    %v2445 = vpop.f32.mrb[0].mxu0
    %v2446 = vadd.f32 %v2357, %v2445
    %v2447 = vpop.f32.mrb[0].mxu0
    %2448 = vmatprep.mubr.f32.mxu0 0.0
    %2449 = vmatmul.mubr.f32.gmra.mrb[0].mxu0 %v2366
    %v2450 = vpop.f32.mrb[0].mxu0
    %v2451 = vadd.f32 %v2357, %v2450
    %v2452 = vpop.f32.mrb[0].mxu0
    %2453 = vmatprep.mubr.f32.mxu0 0.0
    %2454 = vmatmul.mubr.f32.gmra.mrb[0].mxu0 %v2369
    %v2455 = vpop.f32.mrb[0].mxu0
    %v2456 = vadd.f32 %v2357, %v2455
    %v2457 = vpop.f32.mrb[0].mxu0
    %2458 = vmatprep.mubr.f32.mxu0 0.0
    %2459 = vmatmul.mubr.f32.gmra.mrb[0].mxu0 %v2372
    %v2460 = vpop.f32.mrb[0].mxu0
    %v2461 = vadd.f32 %v2357, %v2460
    %v2462 = vpop.f32.mrb[0].mxu0
    %2463 = vdwg.mxu0
    %2464 = vst [vmem:[%s26] sm:$0xff] %v2441
    %2465 = vst [vmem:[%s26 + $0x8] sm:$0xff] %v2446
    %2466 = vst [vmem:[%s26 + $0x10] sm:$0xff] %v2451
    %2467 = vst [vmem:[%s26 + $0x18] sm:$0xff] %v2456
    %2468 = vst [vmem:[%s26 + $0x20] sm:$0xff] %v2461
    // Predicated region
    $region143: #{seq2seq_forward.1} parent=1 // pred_check
      _
    $region144: #{seq2seq_forward.1} parent=1 // pred_check_branch
      %2470 = sbr.rel (0) target = $region146
    $region145: #{seq2seq_forward.1} parent=1 // pred_region
      _
    $region146: #{seq2seq_forward.1} parent=1 // pred_fallthru
      _
    // Predicated region
    $region147: #{seq2seq_forward.1} parent=1 // pred_check
      _
    $region148: #{seq2seq_forward.1} parent=1 // pred_check_branch
      %2472 = sbr.rel (0) target = $region150
    $region149: #{seq2seq_forward.1} parent=1 // pred_region
      _
    $region150: #{seq2seq_forward.1} parent=1 // pred_fallthru
      _
    %2473 = vsyncpa [#allocation9], 1
    %2474 = vsyncpa [#allocation11], 1
    %2475 = vsyncpa [#allocation14], 1

</llo_original>
